<compile_context>
chip_gen: v7x
topology: tpu7x:2x2x1
jax: 0.10.0
libtpu: 0.0.40
codegen_flags: <defaults>
</compile_context>

<pallas_src>
import functools

import jax
import jax.numpy as jnp
from jax.experimental import pallas as pl
from jax.experimental.pallas import tpu as pltpu


def _double_conv_kernel(
    x_ref, w1_ref, s1_ref, b1_ref, w2_ref, s2_ref, b2_ref,   # inputs
    o_ref,                                                    # output
    col1_ref, col2_ref, acc1_ref, acc2_ref,                   # VMEM scratch
    *, H, W, C_in, C_mid, TN,
):
    """Fused (conv3x3 pad=1 -> BN -> ReLU) x 2 for one (batch, C_out-tile).

    x_ref:    (1, H, W, C_in)        input tile (unpadded, f32)
    w1_ref:   (3, 3*C_in, C_mid)     conv1 weights, (dx, cin) folded (bf16)
    s1/b1:    (1, C_mid)             folded BN1 scale / bias (f32)
    w2_ref:   (3, 3*C_mid, TN)       conv2 weights for this C_out tile (bf16)
    s2/b2:    (1, TN)
    o_ref:    (1, H, W, TN)
    col1_ref: ((H+2)*W, 3*C_in)  bf16  dx-folded, height-padded conv1 input
    col2_ref: ((H+2)*W, 3*C_mid) bf16  dx-folded, height-padded conv1 output
    acc1_ref: (H*W, C_mid) f32  matmul accumulator (conv1)
    acc2_ref: (H*W, TN)    f32  matmul accumulator (conv2)
    """
    HW = H * W

    def fill_strips(col_ref, img2d, c):
        # col layout: row index = (padded image row) * W + (image column);
        # columns hold the three dx taps side by side: [dx=0 | dx=1 | dx=2].
        #
        # Only the halo row-bands (padded rows 0 and H+1) are explicitly
        # zeroed -- the interior stores below never touch them.  They are
        # re-zeroed every call because scratch persists across grid steps and
        # a "first step" gate is unsafe under megacore parallel sharding.
        zero_band = jnp.zeros((W, 3 * c), col_ref.dtype)
        col_ref[0:W, :] = zero_band
        col_ref[(H + 1) * W:(H + 2) * W, :] = zero_band

        # Column index within each image row, for the left/right padding zeros
        # of the shifted taps.
        w_idx = jax.lax.broadcasted_iota(jnp.int32, (HW, 1), 0) % W

        # dx = 1 (center tap): straight copy, cast to bf16 exactly once here.
        col_ref[W:W + HW, c:2 * c] = img2d.astype(col_ref.dtype)
        # dx = 0 (left tap): image shifted right by one column, zero at w == 0.
        left = jnp.where(w_idx == 0, 0.0, pltpu.roll(img2d, shift=1, axis=0))
        col_ref[W:W + HW, 0:c] = left.astype(col_ref.dtype)
        # dx = 2 (right tap): image shifted left by one column, zero at w == W-1.
        right = jnp.where(w_idx == W - 1, 0.0,
                          pltpu.roll(img2d, shift=HW - 1, axis=0))
        col_ref[W:W + HW, 2 * c:3 * c] = right.astype(col_ref.dtype)

    def conv_into(col_ref, w_ref, acc_ref):
        # 3 MXU matmuls (one per dy), K = 3*c, bf16 operands, f32 accumulation
        # kept in a VMEM scratch ref.  The LHS is a contiguous, 8-aligned
        # row-slice of the 2-D col scratch (no slice+reshape copies).
        for dy in range(3):
            part = jnp.dot(col_ref[dy * W:dy * W + HW, :], w_ref[dy],
                           preferred_element_type=jnp.float32)
            if dy == 0:
                acc_ref[...] = part
            else:
                acc_ref[...] += part

    j = pl.program_id(1)   # C_out-tile index (innermost, "arbitrary")

    # Stage 1: conv1 -> BN1 -> ReLU, computed once per batch element (tile 0);
    # the result only lives in VMEM (col2 scratch), already dx-folded for
    # conv2.  Dropout2d is identity in eval mode.
    @pl.when(j == 0)
    def _stage1():
        fill_strips(col1_ref, x_ref[0].reshape(HW, C_in), C_in)
        conv_into(col1_ref, w1_ref, acc1_ref)
        y1 = jnp.maximum(acc1_ref[...] * s1_ref[...] + b1_ref[...], 0.0)
        fill_strips(col2_ref, y1, C_mid)

    # Stage 2: conv2 -> BN2 -> ReLU for this C_out tile.
    conv_into(col2_ref, w2_ref, acc2_ref)
    y2 = jnp.maximum(acc2_ref[...] * s2_ref[...] + b2_ref[...], 0.0)
    o_ref[...] = y2.reshape(1, H, W, TN).astype(o_ref.dtype)


def _fold_bn(conv_bias, gamma, beta, mean, var, eps=1e-5):
    scale = gamma / jnp.sqrt(var + eps)                  # (C,)
    bias = (conv_bias - mean) * scale + beta             # (C,)
    return scale.astype(jnp.float32), bias.astype(jnp.float32)


def double_conv(x_nhwc, params, eps=1e-5, cout_tile=256):
    """(conv3x3 pad=1 -> BN(eval) -> ReLU) x 2, fused in one Pallas kernel."""
    N, H, W, C_in = x_nhwc.shape
    w1, w2 = params["w1"], params["w2"]
    C_mid, C_out = w1.shape[-1], w2.shape[-1]

    # C_out tiling (innermost grid axis) bounds peak VMEM independently of
    # C_out and keeps the MXU N-dimension 256-wide at production widths.
    TN = cout_tile if C_out % cout_tile == 0 else C_out
    num_cout_tiles = C_out // TN

    s1, b1 = _fold_bn(params["b1"], *params["bn1"], eps)
    s2, b2 = _fold_bn(params["b2"], *params["bn2"], eps)

    # Fold (dx, cin) into the contraction dim; pre-cast weights to bf16.
    w1f = w1.reshape(3, 3 * C_in, C_mid).astype(jnp.bfloat16)
    w2f = w2.reshape(3, 3 * C_mid, C_out).astype(jnp.bfloat16)

    kernel = functools.partial(
        _double_conv_kernel, H=H, W=W, C_in=C_in, C_mid=C_mid, TN=TN)

    # Explicit VMEM budget: scratch + blocks with their buffering factors.
    vmem_bytes = (
        (H + 2) * W * 3 * C_in * 2           # col1 (bf16)
        + (H + 2) * W * 3 * C_mid * 2        # col2 (bf16)
        + H * W * C_mid * 4                  # acc1 (f32)
        + H * W * TN * 4                     # acc2 (f32)
        + 3 * 3 * C_in * C_mid * 2           # w1 (bf16, single-buffered)
        + 2 * 3 * 3 * C_mid * TN * 2         # w2 (bf16, double-buffered)
        + 2 * H * W * C_in * 4               # x block (double-buffered)
        + 2 * H * W * TN * 4                 # output block (double-buffered)
        + 2 * 2 * (C_mid + TN) * 4           # scale / bias blocks
    )
    vmem_limit = min(max(int(vmem_bytes * 1.5) + (2 << 20), 8 << 20), 64 << 20)

    flops = 2 * N * H * W * 9 * (C_in * C_mid + C_mid * C_out)
    bytes_accessed = (x_nhwc.size * x_nhwc.dtype.itemsize
                      + w1f.size * 2 + w2f.size * 2
                      + N * H * W * C_out * 4)

    # TODO(synk): for v7x with N == 1, add a second "parallel" axis (e.g. two
    # H row-bands with a 1-row halo) so both TensorCores are used.
    return pl.pallas_call(
        kernel,
        out_shape=jax.ShapeDtypeStruct((N, H, W, C_out), jnp.float32),
        grid_spec=pltpu.PrefetchScalarGridSpec(
            num_scalar_prefetch=0,
            grid=(N, num_cout_tiles),
            in_specs=[
                pl.BlockSpec((1, H, W, C_in), lambda n, j: (n, 0, 0, 0)),
                # Grid-invariant conv1 weights: single-buffered (halves their
                # VMEM footprint; decisive on v7x at production widths).
                pl.BlockSpec((3, 3 * C_in, C_mid), lambda n, j: (0, 0, 0),
                             pipeline_mode=pl.Buffered(1)),
                pl.BlockSpec((1, C_mid), lambda n, j: (0, 0)),
                pl.BlockSpec((1, C_mid), lambda n, j: (0, 0)),
                pl.BlockSpec((3, 3 * C_mid, TN), lambda n, j: (0, 0, j)),
                pl.BlockSpec((1, TN), lambda n, j: (0, j)),
                pl.BlockSpec((1, TN), lambda n, j: (0, j)),
            ],
            out_specs=pl.BlockSpec((1, H, W, TN), lambda n, j: (n, 0, 0, j)),
            scratch_shapes=[
                pltpu.VMEM(((H + 2) * W, 3 * C_in), jnp.bfloat16),
                pltpu.VMEM(((H + 2) * W, 3 * C_mid), jnp.bfloat16),
                pltpu.VMEM((H * W, C_mid), jnp.float32),
                pltpu.VMEM((H * W, TN), jnp.float32),
            ],
        ),
        compiler_params=pltpu.CompilerParams(
            dimension_semantics=("parallel", "arbitrary"),
            vmem_limit_bytes=vmem_limit,
        ),
        cost_estimate=pl.CostEstimate(
            flops=flops, transcendentals=0, bytes_accessed=bytes_accessed),
    )(x_nhwc, w1f, s1.reshape(1, C_mid), b1.reshape(1, C_mid),
      w2f, s2.reshape(1, C_out), b2.reshape(1, C_out))


def bridge_forward(x_nchw, params):
    """Bridge.forward: DoubleConv = (conv3x3 -> BN -> ReLU -> Drop) x 2 (eval).

    Input/output in PyTorch NCHW; internally NHWC.
    """
    # TODO(synk): training-mode Dropout2d (channel dropout) not implemented; eval semantics used.
    x = jnp.transpose(x_nchw, (0, 2, 3, 1))        # NCHW -> NHWC
    y = double_conv(x, params)
    return jnp.transpose(y, (0, 3, 1, 2))          # NHWC -> NCHW


def init_bridge_params(key, in_channels, out_channels):
    """Deterministic synthetic parameters matching Bridge(in_channels, out_channels)."""
    keys = jax.random.split(key, 4)

    def conv_init(k, cin, cout):
        fan_in = cin * 3 * 3
        bound = 1.0 / jnp.sqrt(fan_in)
        kw, kb = jax.random.split(k)
        w = jax.random.uniform(kw, (3, 3, cin, cout), jnp.float32, -bound, bound)
        b = jax.random.uniform(kb, (cout,), jnp.float32, -bound, bound)
        return w, b

    def bn_init(k, c):
        k1, k2, k3, k4 = jax.random.split(k, 4)
        gamma = 1.0 + 0.1 * jax.random.normal(k1, (c,), jnp.float32)
        beta = 0.1 * jax.random.normal(k2, (c,), jnp.float32)
        mean = 0.05 * jax.random.normal(k3, (c,), jnp.float32)
        var = jnp.abs(0.5 + 0.1 * jax.random.normal(k4, (c,), jnp.float32))
        return gamma, beta, mean, var

    w1, b1 = conv_init(keys[0], in_channels, out_channels)
    w2, b2 = conv_init(keys[1], out_channels, out_channels)
    return {"w1": w1, "b1": b1, "bn1": bn_init(keys[2], out_channels),
            "w2": w2, "b2": b2, "bn2": bn_init(keys[3], out_channels)}


def _reference_forward(x_nchw, params, eps=1e-5):
    """Pure-JAX f32 reference (for correctness check only)."""
    x = jnp.transpose(x_nchw, (0, 2, 3, 1))

    def conv_bn_relu(x, w, b, bn):
        y = jax.lax.conv_general_dilated(
            x, w, window_strides=(1, 1), padding="SAME",
            dimension_numbers=("NHWC", "HWIO", "NHWC"),
            precision=jax.lax.Precision.HIGHEST) + b
        gamma, beta, mean, var = bn
        y = (y - mean) / jnp.sqrt(var + eps) * gamma + beta
        return jnp.maximum(y, 0.0)

    y = conv_bn_relu(x, params["w1"], params["b1"], params["bn1"])
    y = conv_bn_relu(y, params["w2"], params["b2"], params["bn2"])
    return jnp.transpose(y, (0, 3, 1, 2))


if __name__ == "__main__":
    key = jax.random.PRNGKey(0)
    k_x, k_p = jax.random.split(key)

    N, Cin, H, W = 2, 4, 16, 16
    Cout = 8

    x = jax.random.normal(k_x, (N, Cin, H, W), jnp.float32)
    params = init_bridge_params(k_p, Cin, Cout)

    out = jax.block_until_ready(bridge_forward(x, params))

    assert out.shape == (N, Cout, H, W), out.shape
    assert bool(jnp.all(jnp.isfinite(out)))

    ref = jax.block_until_ready(_reference_forward(x, params))
    max_err = float(jnp.max(jnp.abs(out - ref)))
    assert max_err < 5e-2, f"max abs error vs reference: {max_err}"

    print("KERNEL_OK")
</pallas_src>

<mosaic_0001>
module attributes {stable_mosaic.version = 11 : i64} {
  func.func @_double_conv_kernel(%arg0: i32, %arg1: i32, %arg2: memref<1x16x16x4xf32, #tpu.memory_space<vmem>>, %arg3: memref<3x12x8xbf16, #tpu.memory_space<vmem>>, %arg4: memref<1x8xf32, #tpu.memory_space<vmem>>, %arg5: memref<1x8xf32, #tpu.memory_space<vmem>>, %arg6: memref<3x24x8xbf16, #tpu.memory_space<vmem>>, %arg7: memref<1x8xf32, #tpu.memory_space<vmem>>, %arg8: memref<1x8xf32, #tpu.memory_space<vmem>>, %arg9: memref<1x16x16x8xf32, #tpu.memory_space<vmem>>, %arg10: memref<288x12xbf16, #tpu.memory_space<vmem>>, %arg11: memref<288x24xbf16, #tpu.memory_space<vmem>>, %arg12: memref<256x8xf32, #tpu.memory_space<vmem>>, %arg13: memref<256x8xf32, #tpu.memory_space<vmem>>) attributes {dimension_semantics = [#tpu.dimension_semantics<parallel>, #tpu.dimension_semantics<arbitrary>], iteration_bounds = array<i64: 2, 1>, scalar_prefetch = 0 : i64, scratch_operands = 4 : i64, tpu.core_type = #tpu.core_type<tc>, window_params = [{transform_indices = @transform_0, window_bounds = array<i64: 1, 16, 16, 4>}, {pipeline_mode = #tpu.pipeline_mode<synchronous>, transform_indices = @transform_1, window_bounds = array<i64: 3, 12, 8>}, {pipeline_mode = #tpu.pipeline_mode<synchronous>, transform_indices = @transform_2, window_bounds = array<i64: 1, 8>}, {pipeline_mode = #tpu.pipeline_mode<synchronous>, transform_indices = @transform_3, window_bounds = array<i64: 1, 8>}, {transform_indices = @transform_4, window_bounds = array<i64: 3, 24, 8>}, {transform_indices = @transform_5, window_bounds = array<i64: 1, 8>}, {transform_indices = @transform_6, window_bounds = array<i64: 1, 8>}, {transform_indices = @transform_7, window_bounds = array<i64: 1, 16, 16, 8>}]} {
    %c0_i32 = arith.constant 0 : i32
    %0 = arith.cmpi eq, %arg1, %c0_i32 : i32
    %1 = arith.extui %0 : i1 to i32
    %c0_i32_0 = arith.constant 0 : i32
    %2 = arith.cmpi ne, %1, %c0_i32_0 : i32
    scf.if %2 {
      %c0_34 = arith.constant 0 : index
      %c0_35 = arith.constant 0 : index
      %c0_36 = arith.constant 0 : index
      %c0_37 = arith.constant 0 : index
      %33 = vector.load %arg2[%c0_34, %c0_35, %c0_36, %c0_37] : memref<1x16x16x4xf32, #tpu.memory_space<vmem>>, vector<1x16x16x4xf32>
      %34 = vector.shape_cast %33 : vector<1x16x16x4xf32> to vector<16x16x4xf32>
      %35 = vector.shape_cast %34 : vector<16x16x4xf32> to vector<256x4xf32>
      %cst_38 = arith.constant 0.000000e+00 : bf16
      %36 = vector.broadcast %cst_38 : bf16 to vector<16x12xbf16>
      %c0_39 = arith.constant 0 : index
      %c0_40 = arith.constant 0 : index
      %37 = vector.load %arg10[%c0_39, %c0_40] : memref<288x12xbf16, #tpu.memory_space<vmem>>, vector<16x12xbf16>
      tpu.vector_store %arg10[%c0_39, %c0_40], %36 {strides = array<i32>} : memref<288x12xbf16, #tpu.memory_space<vmem>>, vector<16x12xbf16>,
      %c272 = arith.constant 272 : index
      %c0_41 = arith.constant 0 : index
      %38 = vector.load %arg10[%c272, %c0_41] : memref<288x12xbf16, #tpu.memory_space<vmem>>, vector<16x12xbf16>
      tpu.vector_store %arg10[%c272, %c0_41], %36 {strides = array<i32>} : memref<288x12xbf16, #tpu.memory_space<vmem>>, vector<16x12xbf16>,
      %39 = tpu.iota {dimensions = array<i32: 0>} : vector<256x1xi32>
      %c16_i32 = arith.constant 16 : i32
      %c0_i32_42 = arith.constant 0 : i32
      %40 = arith.cmpi eq, %c16_i32, %c0_i32_42 : i32
      %c1_i32 = arith.constant 1 : i32
      %41 = arith.select %40, %c1_i32, %c16_i32 : i32
      %42 = vector.broadcast %41 : i32 to vector<256x1xi32>
      %43 = arith.remsi %39, %42 : vector<256x1xi32>
      %c0_i32_43 = arith.constant 0 : i32
      %44 = vector.broadcast %c0_i32_43 : i32 to vector<256x1xi32>
      %45 = arith.cmpi ne, %43, %44 : vector<256x1xi32>
      %c0_i32_44 = arith.constant 0 : i32
      %46 = vector.broadcast %c0_i32_44 : i32 to vector<256x1xi32>
      %47 = arith.cmpi slt, %43, %46 : vector<256x1xi32>
      %c0_i32_45 = arith.constant 0 : i32
      %48 = arith.cmpi slt, %41, %c0_i32_45 : i32
      %49 = vector.broadcast %48 : i1 to vector<256x1xi1>
      %50 = vector.broadcast %49 : vector<256x1xi1> to vector<256x1xi1>
      %51 = arith.xori %47, %50 : vector<256x1xi1>
      %52 = arith.andi %51, %45 : vector<256x1xi1>
      %53 = vector.broadcast %41 : i32 to vector<256x1xi32>
      %54 = arith.addi %43, %53 : vector<256x1xi32>
      %55 = arith.select %52, %54, %43 : vector<256x1xi1>, vector<256x1xi32>
      %56 = arith.truncf %35 : vector<256x4xf32> to vector<256x4xbf16>
      %c16_46 = arith.constant 16 : index
      %c4 = arith.constant 4 : index
      %57 = vector.load %arg10[%c16_46, %c4] : memref<288x12xbf16, #tpu.memory_space<vmem>>, vector<256x4xbf16>
      tpu.vector_store %arg10[%c16_46, %c4], %56 {strides = array<i32>} : memref<288x12xbf16, #tpu.memory_space<vmem>>, vector<256x4xbf16>,
      %c0_i32_47 = arith.constant 0 : i32
      %58 = vector.broadcast %c0_i32_47 : i32 to vector<256x1xi32>
      %59 = arith.cmpi eq, %55, %58 : vector<256x1xi32>
      %c1_i32_48 = arith.constant 1 : i32
      %60 = tpu.dynamic_rotate %35 by %c1_i32_48 dim 0 : vector<256x4xf32>, i32 -> vector<256x4xf32>
      %cst_49 = arith.constant 0.000000e+00 : f32
      %61 = vector.shape_cast %59 : vector<256x1xi1> to vector<256x1xi1>
      %62 = vector.broadcast %61 : vector<256x1xi1> to vector<256x4xi1>
      %63 = vector.broadcast %cst_49 : f32 to vector<256x4xf32>
      %64 = arith.select %62, %63, %60 : vector<256x4xi1>, vector<256x4xf32>
      %65 = arith.truncf %64 : vector<256x4xf32> to vector<256x4xbf16>
      %c16_50 = arith.constant 16 : index
      %c0_51 = arith.constant 0 : index
      %66 = vector.load %arg10[%c16_50, %c0_51] : memref<288x12xbf16, #tpu.memory_space<vmem>>, vector<256x4xbf16>
      tpu.vector_store %arg10[%c16_50, %c0_51], %65 {strides = array<i32>} : memref<288x12xbf16, #tpu.memory_space<vmem>>, vector<256x4xbf16>,
      %c15_i32 = arith.constant 15 : i32
      %67 = vector.broadcast %c15_i32 : i32 to vector<256x1xi32>
      %68 = arith.cmpi eq, %55, %67 : vector<256x1xi32>
      %c255_i32 = arith.constant 255 : i32
      %69 = tpu.dynamic_rotate %35 by %c255_i32 dim 0 : vector<256x4xf32>, i32 -> vector<256x4xf32>
      %cst_52 = arith.constant 0.000000e+00 : f32
      %70 = vector.shape_cast %68 : vector<256x1xi1> to vector<256x1xi1>
      %71 = vector.broadcast %70 : vector<256x1xi1> to vector<256x4xi1>
      %72 = vector.broadcast %cst_52 : f32 to vector<256x4xf32>
      %73 = arith.select %71, %72, %69 : vector<256x4xi1>, vector<256x4xf32>
      %74 = arith.truncf %73 : vector<256x4xf32> to vector<256x4xbf16>
      %c16_53 = arith.constant 16 : index
      %c8 = arith.constant 8 : index
      %75 = vector.load %arg10[%c16_53, %c8] : memref<288x12xbf16, #tpu.memory_space<vmem>>, vector<256x4xbf16>
      tpu.vector_store %arg10[%c16_53, %c8], %74 {strides = array<i32>} : memref<288x12xbf16, #tpu.memory_space<vmem>>, vector<256x4xbf16>,
      %c0_54 = arith.constant 0 : index
      %c0_55 = arith.constant 0 : index
      %76 = vector.load %arg10[%c0_54, %c0_55] : memref<288x12xbf16, #tpu.memory_space<vmem>>, vector<256x12xbf16>
      %c0_56 = arith.constant 0 : index
      %c0_57 = arith.constant 0 : index
      %c0_58 = arith.constant 0 : index
      %77 = vector.load %arg3[%c0_56, %c0_57, %c0_58] : memref<3x12x8xbf16, #tpu.memory_space<vmem>>, vector<1x12x8xbf16>
      %78 = vector.shape_cast %77 : vector<1x12x8xbf16> to vector<12x8xbf16>
      %cst_59 = arith.constant dense<0.000000e+00> : vector<256x8xf32>
      %79 = tpu.matmul %76, %78, %cst_59 {dimension_numbers = #tpu.dot_dimension_numbers<[1], [0], [0], [1], [0, 0, 1, 1], [], []>} : vector<256x12xbf16>, vector<12x8xbf16>, vector<256x8xf32> -> vector<256x8xf32>
      %c0_60 = arith.constant 0 : index
      %c0_61 = arith.constant 0 : index
      %80 = vector.load %arg12[%c0_60, %c0_61] : memref<256x8xf32, #tpu.memory_space<vmem>>, vector<256x8xf32>
      tpu.vector_store %arg12[%c0_60, %c0_61], %79 {strides = array<i32>} : memref<256x8xf32, #tpu.memory_space<vmem>>, vector<256x8xf32>,
      %c16_62 = arith.constant 16 : index
      %c0_63 = arith.constant 0 : index
      %81 = vector.load %arg10[%c16_62, %c0_63] : memref<288x12xbf16, #tpu.memory_space<vmem>>, vector<256x12xbf16>
      %c1_64 = arith.constant 1 : index
      %c0_65 = arith.constant 0 : index
      %c0_66 = arith.constant 0 : index
      %82 = vector.load %arg3[%c1_64, %c0_65, %c0_66] : memref<3x12x8xbf16, #tpu.memory_space<vmem>>, vector<1x12x8xbf16>
      %83 = vector.shape_cast %82 : vector<1x12x8xbf16> to vector<12x8xbf16>
      %cst_67 = arith.constant dense<0.000000e+00> : vector<256x8xf32>
      %84 = tpu.matmul %81, %83, %cst_67 {dimension_numbers = #tpu.dot_dimension_numbers<[1], [0], [0], [1], [0, 0, 1, 1], [], []>} : vector<256x12xbf16>, vector<12x8xbf16>, vector<256x8xf32> -> vector<256x8xf32>
      %c0_68 = arith.constant 0 : index
      %c0_69 = arith.constant 0 : index
      %85 = vector.load %arg12[%c0_68, %c0_69] : memref<256x8xf32, #tpu.memory_space<vmem>>, vector<256x8xf32>
      %86 = arith.addf %85, %84 : vector<256x8xf32>
      %c0_70 = arith.constant 0 : index
      %c0_71 = arith.constant 0 : index
      %87 = vector.load %arg12[%c0_70, %c0_71] : memref<256x8xf32, #tpu.memory_space<vmem>>, vector<256x8xf32>
      tpu.vector_store %arg12[%c0_70, %c0_71], %86 {strides = array<i32>} : memref<256x8xf32, #tpu.memory_space<vmem>>, vector<256x8xf32>,
      %c32_72 = arith.constant 32 : index
      %c0_73 = arith.constant 0 : index
      %88 = vector.load %arg10[%c32_72, %c0_73] : memref<288x12xbf16, #tpu.memory_space<vmem>>, vector<256x12xbf16>
      %c2_74 = arith.constant 2 : index
      %c0_75 = arith.constant 0 : index
      %c0_76 = arith.constant 0 : index
      %89 = vector.load %arg3[%c2_74, %c0_75, %c0_76] : memref<3x12x8xbf16, #tpu.memory_space<vmem>>, vector<1x12x8xbf16>
      %90 = vector.shape_cast %89 : vector<1x12x8xbf16> to vector<12x8xbf16>
      %cst_77 = arith.constant dense<0.000000e+00> : vector<256x8xf32>
      %91 = tpu.matmul %88, %90, %cst_77 {dimension_numbers = #tpu.dot_dimension_numbers<[1], [0], [0], [1], [0, 0, 1, 1], [], []>} : vector<256x12xbf16>, vector<12x8xbf16>, vector<256x8xf32> -> vector<256x8xf32>
      %c0_78 = arith.constant 0 : index
      %c0_79 = arith.constant 0 : index
      %92 = vector.load %arg12[%c0_78, %c0_79] : memref<256x8xf32, #tpu.memory_space<vmem>>, vector<256x8xf32>
      %93 = arith.addf %92, %91 : vector<256x8xf32>
      %c0_80 = arith.constant 0 : index
      %c0_81 = arith.constant 0 : index
      %94 = vector.load %arg12[%c0_80, %c0_81] : memref<256x8xf32, #tpu.memory_space<vmem>>, vector<256x8xf32>
      tpu.vector_store %arg12[%c0_80, %c0_81], %93 {strides = array<i32>} : memref<256x8xf32, #tpu.memory_space<vmem>>, vector<256x8xf32>,
      %c0_82 = arith.constant 0 : index
      %c0_83 = arith.constant 0 : index
      %95 = vector.load %arg12[%c0_82, %c0_83] : memref<256x8xf32, #tpu.memory_space<vmem>>, vector<256x8xf32>
      %c0_84 = arith.constant 0 : index
      %c0_85 = arith.constant 0 : index
      %96 = vector.load %arg4[%c0_84, %c0_85] : memref<1x8xf32, #tpu.memory_space<vmem>>, vector<1x8xf32>
      %97 = vector.broadcast %96 : vector<1x8xf32> to vector<256x8xf32>
      %98 = arith.mulf %95, %97 : vector<256x8xf32>
      %c0_86 = arith.constant 0 : index
      %c0_87 = arith.constant 0 : index
      %99 = vector.load %arg5[%c0_86, %c0_87] : memref<1x8xf32, #tpu.memory_space<vmem>>, vector<1x8xf32>
      %100 = vector.broadcast %99 : vector<1x8xf32> to vector<256x8xf32>
      %101 = arith.addf %98, %100 : vector<256x8xf32>
      %cst_88 = arith.constant 0.000000e+00 : f32
      %102 = vector.broadcast %cst_88 : f32 to vector<256x8xf32>
      %103 = arith.maximumf %101, %102 : vector<256x8xf32>
      %cst_89 = arith.constant 0.000000e+00 : bf16
      %104 = vector.broadcast %cst_89 : bf16 to vector<16x24xbf16>
      %c0_90 = arith.constant 0 : index
      %c0_91 = arith.constant 0 : index
      %105 = vector.load %arg11[%c0_90, %c0_91] : memref<288x24xbf16, #tpu.memory_space<vmem>>, vector<16x24xbf16>
      tpu.vector_store %arg11[%c0_90, %c0_91], %104 {strides = array<i32>} : memref<288x24xbf16, #tpu.memory_space<vmem>>, vector<16x24xbf16>,
      %c272_92 = arith.constant 272 : index
      %c0_93 = arith.constant 0 : index
      %106 = vector.load %arg11[%c272_92, %c0_93] : memref<288x24xbf16, #tpu.memory_space<vmem>>, vector<16x24xbf16>
      tpu.vector_store %arg11[%c272_92, %c0_93], %104 {strides = array<i32>} : memref<288x24xbf16, #tpu.memory_space<vmem>>, vector<16x24xbf16>,
      %107 = tpu.iota {dimensions = array<i32: 0>} : vector<256x1xi32>
      %c16_i32_94 = arith.constant 16 : i32
      %c0_i32_95 = arith.constant 0 : i32
      %108 = arith.cmpi eq, %c16_i32_94, %c0_i32_95 : i32
      %c1_i32_96 = arith.constant 1 : i32
      %109 = arith.select %108, %c1_i32_96, %c16_i32_94 : i32
      %110 = vector.broadcast %109 : i32 to vector<256x1xi32>
      %111 = arith.remsi %107, %110 : vector<256x1xi32>
      %c0_i32_97 = arith.constant 0 : i32
      %112 = vector.broadcast %c0_i32_97 : i32 to vector<256x1xi32>
      %113 = arith.cmpi ne, %111, %112 : vector<256x1xi32>
      %c0_i32_98 = arith.constant 0 : i32
      %114 = vector.broadcast %c0_i32_98 : i32 to vector<256x1xi32>
      %115 = arith.cmpi slt, %111, %114 : vector<256x1xi32>
      %c0_i32_99 = arith.constant 0 : i32
      %116 = arith.cmpi slt, %109, %c0_i32_99 : i32
      %117 = vector.broadcast %116 : i1 to vector<256x1xi1>
      %118 = vector.broadcast %117 : vector<256x1xi1> to vector<256x1xi1>
      %119 = arith.xori %115, %118 : vector<256x1xi1>
      %120 = arith.andi %119, %113 : vector<256x1xi1>
      %121 = vector.broadcast %109 : i32 to vector<256x1xi32>
      %122 = arith.addi %111, %121 : vector<256x1xi32>
      %123 = arith.select %120, %122, %111 : vector<256x1xi1>, vector<256x1xi32>
      %124 = arith.truncf %103 : vector<256x8xf32> to vector<256x8xbf16>
      %c16_100 = arith.constant 16 : index
      %c8_101 = arith.constant 8 : index
      %125 = vector.load %arg11[%c16_100, %c8_101] : memref<288x24xbf16, #tpu.memory_space<vmem>>, vector<256x8xbf16>
      tpu.vector_store %arg11[%c16_100, %c8_101], %124 {strides = array<i32>} : memref<288x24xbf16, #tpu.memory_space<vmem>>, vector<256x8xbf16>,
      %c0_i32_102 = arith.constant 0 : i32
      %126 = vector.broadcast %c0_i32_102 : i32 to vector<256x1xi32>
      %127 = arith.cmpi eq, %123, %126 : vector<256x1xi32>
      %c1_i32_103 = arith.constant 1 : i32
      %128 = tpu.dynamic_rotate %103 by %c1_i32_103 dim 0 : vector<256x8xf32>, i32 -> vector<256x8xf32>
      %cst_104 = arith.constant 0.000000e+00 : f32
      %129 = vector.shape_cast %127 : vector<256x1xi1> to vector<256x1xi1>
      %130 = vector.broadcast %129 : vector<256x1xi1> to vector<256x8xi1>
      %131 = vector.broadcast %cst_104 : f32 to vector<256x8xf32>
      %132 = arith.select %130, %131, %128 : vector<256x8xi1>, vector<256x8xf32>
      %133 = arith.truncf %132 : vector<256x8xf32> to vector<256x8xbf16>
      %c16_105 = arith.constant 16 : index
      %c0_106 = arith.constant 0 : index
      %134 = vector.load %arg11[%c16_105, %c0_106] : memref<288x24xbf16, #tpu.memory_space<vmem>>, vector<256x8xbf16>
      tpu.vector_store %arg11[%c16_105, %c0_106], %133 {strides = array<i32>} : memref<288x24xbf16, #tpu.memory_space<vmem>>, vector<256x8xbf16>,
      %c15_i32_107 = arith.constant 15 : i32
      %135 = vector.broadcast %c15_i32_107 : i32 to vector<256x1xi32>
      %136 = arith.cmpi eq, %123, %135 : vector<256x1xi32>
      %c255_i32_108 = arith.constant 255 : i32
      %137 = tpu.dynamic_rotate %103 by %c255_i32_108 dim 0 : vector<256x8xf32>, i32 -> vector<256x8xf32>
      %cst_109 = arith.constant 0.000000e+00 : f32
      %138 = vector.shape_cast %136 : vector<256x1xi1> to vector<256x1xi1>
      %139 = vector.broadcast %138 : vector<256x1xi1> to vector<256x8xi1>
      %140 = vector.broadcast %cst_109 : f32 to vector<256x8xf32>
      %141 = arith.select %139, %140, %137 : vector<256x8xi1>, vector<256x8xf32>
      %142 = arith.truncf %141 : vector<256x8xf32> to vector<256x8xbf16>
      %c16_110 = arith.constant 16 : index
      %c16_111 = arith.constant 16 : index
      %143 = vector.load %arg11[%c16_110, %c16_111] : memref<288x24xbf16, #tpu.memory_space<vmem>>, vector<256x8xbf16>
      tpu.vector_store %arg11[%c16_110, %c16_111], %142 {strides = array<i32>} : memref<288x24xbf16, #tpu.memory_space<vmem>>, vector<256x8xbf16>,
    } else {
    }
    %c0 = arith.constant 0 : index
    %c0_1 = arith.constant 0 : index
    %3 = vector.load %arg11[%c0, %c0_1] : memref<288x24xbf16, #tpu.memory_space<vmem>>, vector<256x24xbf16>
    %c0_2 = arith.constant 0 : index
    %c0_3 = arith.constant 0 : index
    %c0_4 = arith.constant 0 : index
    %4 = vector.load %arg6[%c0_2, %c0_3, %c0_4] : memref<3x24x8xbf16, #tpu.memory_space<vmem>>, vector<1x24x8xbf16>
    %5 = vector.shape_cast %4 : vector<1x24x8xbf16> to vector<24x8xbf16>
    %cst = arith.constant dense<0.000000e+00> : vector<256x8xf32>
    %6 = tpu.matmul %3, %5, %cst {dimension_numbers = #tpu.dot_dimension_numbers<[1], [0], [0], [1], [0, 0, 1, 1], [], []>} : vector<256x24xbf16>, vector<24x8xbf16>, vector<256x8xf32> -> vector<256x8xf32>
    %c0_5 = arith.constant 0 : index
    %c0_6 = arith.constant 0 : index
    %7 = vector.load %arg13[%c0_5, %c0_6] : memref<256x8xf32, #tpu.memory_space<vmem>>, vector<256x8xf32>
    tpu.vector_store %arg13[%c0_5, %c0_6], %6 {strides = array<i32>} : memref<256x8xf32, #tpu.memory_space<vmem>>, vector<256x8xf32>,
    %c16 = arith.constant 16 : index
    %c0_7 = arith.constant 0 : index
    %8 = vector.load %arg11[%c16, %c0_7] : memref<288x24xbf16, #tpu.memory_space<vmem>>, vector<256x24xbf16>
    %c1 = arith.constant 1 : index
    %c0_8 = arith.constant 0 : index
    %c0_9 = arith.constant 0 : index
    %9 = vector.load %arg6[%c1, %c0_8, %c0_9] : memref<3x24x8xbf16, #tpu.memory_space<vmem>>, vector<1x24x8xbf16>
    %10 = vector.shape_cast %9 : vector<1x24x8xbf16> to vector<24x8xbf16>
    %cst_10 = arith.constant dense<0.000000e+00> : vector<256x8xf32>
    %11 = tpu.matmul %8, %10, %cst_10 {dimension_numbers = #tpu.dot_dimension_numbers<[1], [0], [0], [1], [0, 0, 1, 1], [], []>} : vector<256x24xbf16>, vector<24x8xbf16>, vector<256x8xf32> -> vector<256x8xf32>
    %c0_11 = arith.constant 0 : index
    %c0_12 = arith.constant 0 : index
    %12 = vector.load %arg13[%c0_11, %c0_12] : memref<256x8xf32, #tpu.memory_space<vmem>>, vector<256x8xf32>
    %13 = arith.addf %12, %11 : vector<256x8xf32>
    %c0_13 = arith.constant 0 : index
    %c0_14 = arith.constant 0 : index
    %14 = vector.load %arg13[%c0_13, %c0_14] : memref<256x8xf32, #tpu.memory_space<vmem>>, vector<256x8xf32>
    tpu.vector_store %arg13[%c0_13, %c0_14], %13 {strides = array<i32>} : memref<256x8xf32, #tpu.memory_space<vmem>>, vector<256x8xf32>,
    %c32 = arith.constant 32 : index
    %c0_15 = arith.constant 0 : index
    %15 = vector.load %arg11[%c32, %c0_15] : memref<288x24xbf16, #tpu.memory_space<vmem>>, vector<256x24xbf16>
    %c2 = arith.constant 2 : index
    %c0_16 = arith.constant 0 : index
    %c0_17 = arith.constant 0 : index
    %16 = vector.load %arg6[%c2, %c0_16, %c0_17] : memref<3x24x8xbf16, #tpu.memory_space<vmem>>, vector<1x24x8xbf16>
    %17 = vector.shape_cast %16 : vector<1x24x8xbf16> to vector<24x8xbf16>
    %cst_18 = arith.constant dense<0.000000e+00> : vector<256x8xf32>
    %18 = tpu.matmul %15, %17, %cst_18 {dimension_numbers = #tpu.dot_dimension_numbers<[1], [0], [0], [1], [0, 0, 1, 1], [], []>} : vector<256x24xbf16>, vector<24x8xbf16>, vector<256x8xf32> -> vector<256x8xf32>
    %c0_19 = arith.constant 0 : index
    %c0_20 = arith.constant 0 : index
    %19 = vector.load %arg13[%c0_19, %c0_20] : memref<256x8xf32, #tpu.memory_space<vmem>>, vector<256x8xf32>
    %20 = arith.addf %19, %18 : vector<256x8xf32>
    %c0_21 = arith.constant 0 : index
    %c0_22 = arith.constant 0 : index
    %21 = vector.load %arg13[%c0_21, %c0_22] : memref<256x8xf32, #tpu.memory_space<vmem>>, vector<256x8xf32>
    tpu.vector_store %arg13[%c0_21, %c0_22], %20 {strides = array<i32>} : memref<256x8xf32, #tpu.memory_space<vmem>>, vector<256x8xf32>,
    %c0_23 = arith.constant 0 : index
    %c0_24 = arith.constant 0 : index
    %22 = vector.load %arg13[%c0_23, %c0_24] : memref<256x8xf32, #tpu.memory_space<vmem>>, vector<256x8xf32>
    %c0_25 = arith.constant 0 : index
    %c0_26 = arith.constant 0 : index
    %23 = vector.load %arg7[%c0_25, %c0_26] : memref<1x8xf32, #tpu.memory_space<vmem>>, vector<1x8xf32>
    %24 = vector.broadcast %23 : vector<1x8xf32> to vector<256x8xf32>
    %25 = arith.mulf %22, %24 : vector<256x8xf32>
    %c0_27 = arith.constant 0 : index
    %c0_28 = arith.constant 0 : index
    %26 = vector.load %arg8[%c0_27, %c0_28] : memref<1x8xf32, #tpu.memory_space<vmem>>, vector<1x8xf32>
    %27 = vector.broadcast %26 : vector<1x8xf32> to vector<256x8xf32>
    %28 = arith.addf %25, %27 : vector<256x8xf32>
    %cst_29 = arith.constant 0.000000e+00 : f32
    %29 = vector.broadcast %cst_29 : f32 to vector<256x8xf32>
    %30 = arith.maximumf %28, %29 : vector<256x8xf32>
    %31 = vector.shape_cast %30 : vector<256x8xf32> to vector<1x16x16x8xf32>
    %c0_30 = arith.constant 0 : index
    %c0_31 = arith.constant 0 : index
    %c0_32 = arith.constant 0 : index
    %c0_33 = arith.constant 0 : index
    %32 = vector.load %arg9[%c0_30, %c0_31, %c0_32, %c0_33] : memref<1x16x16x8xf32, #tpu.memory_space<vmem>>, vector<1x16x16x8xf32>
    tpu.vector_store %arg9[%c0_30, %c0_31, %c0_32, %c0_33], %31 {strides = array<i32>} : memref<1x16x16x8xf32, #tpu.memory_space<vmem>>, vector<1x16x16x8xf32>,
    return
  }
  func.func @transform_0(%arg0: i32, %arg1: i32) -> (i32, i32, i32, i32) {
    %c0_i32 = arith.constant 0 : i32
    %c0_i32_0 = arith.constant 0 : i32
    %c0_i32_1 = arith.constant 0 : i32
    %c0_i32_2 = arith.constant 0 : i32
    return %arg0, %c0_i32, %c0_i32_0, %c0_i32_1 : i32, i32, i32, i32
  }
  func.func @transform_1(%arg0: i32, %arg1: i32) -> (i32, i32, i32) {
    %c0_i32 = arith.constant 0 : i32
    %c0_i32_0 = arith.constant 0 : i32
    %c0_i32_1 = arith.constant 0 : i32
    %c0_i32_2 = arith.constant 0 : i32
    return %c0_i32, %c0_i32_0, %c0_i32_1 : i32, i32, i32
  }
  func.func @transform_2(%arg0: i32, %arg1: i32) -> (i32, i32) {
    %c0_i32 = arith.constant 0 : i32
    %c0_i32_0 = arith.constant 0 : i32
    %c0_i32_1 = arith.constant 0 : i32
    return %c0_i32, %c0_i32_0 : i32, i32
  }
  func.func @transform_3(%arg0: i32, %arg1: i32) -> (i32, i32) {
    %c0_i32 = arith.constant 0 : i32
    %c0_i32_0 = arith.constant 0 : i32
    %c0_i32_1 = arith.constant 0 : i32
    return %c0_i32, %c0_i32_0 : i32, i32
  }
  func.func @transform_4(%arg0: i32, %arg1: i32) -> (i32, i32, i32) {
    %c0_i32 = arith.constant 0 : i32
    %c0_i32_0 = arith.constant 0 : i32
    %c0_i32_1 = arith.constant 0 : i32
    return %c0_i32, %c0_i32_0, %arg1 : i32, i32, i32
  }
  func.func @transform_5(%arg0: i32, %arg1: i32) -> (i32, i32) {
    %c0_i32 = arith.constant 0 : i32
    %c0_i32_0 = arith.constant 0 : i32
    return %c0_i32, %arg1 : i32, i32
  }
  func.func @transform_6(%arg0: i32, %arg1: i32) -> (i32, i32) {
    %c0_i32 = arith.constant 0 : i32
    %c0_i32_0 = arith.constant 0 : i32
    return %c0_i32, %arg1 : i32, i32
  }
  func.func @transform_7(%arg0: i32, %arg1: i32) -> (i32, i32, i32, i32) {
    %c0_i32 = arith.constant 0 : i32
    %c0_i32_0 = arith.constant 0 : i32
    %c0_i32_1 = arith.constant 0 : i32
    return %arg0, %c0_i32, %c0_i32_0, %arg1 : i32, i32, i32, i32
  }
}

</mosaic_0001>

<llo_original>
// kernel: tpu_custom_call.1
$region0: #{tpu_custom_call.1}
  #allocation0 [shape = 'u32[]', space=smem, size = 0x4, offset = 0x4, fixed_abs, tag = 'smem constant byte address 0x4 - core index']
  #allocation1 [shape = 'u32[144,128]{1,0:T(1,128)}', space=vmem, size = 0x12000, scoped, tag = 'internal scratch']
  #allocation2 [shape = 'bf16[288,12]{1,0:T(16,128)(2,1)}', space=vmem, size = 0x12000, scoped, tag = 'scratch operand']
  #allocation3 [shape = 'bf16[288,24]{1,0:T(16,128)(2,1)}', space=vmem, size = 0x12000, scoped, tag = 'scratch operand']
  #allocation4 [shape = 'f32[256,8]{1,0:T(8,128)}', space=vmem, size = 0x20000, scoped, tag = 'scratch operand']
  #allocation5 [shape = 'f32[256,8]{1,0:T(8,128)}', space=vmem, size = 0x20000, scoped, tag = 'scratch operand']
  %s0 = inlined_call_operand.vmem [shape: f32[2,16,16,4], index: 0, kind: input, shape index: {}]
  %s1 = inlined_call_operand.vmem [shape: bf16[3,12,8], index: 1, kind: input, shape index: {}]
  %s2 = inlined_call_operand.vmem [shape: f32[1,8], index: 2, kind: input, shape index: {}]
  %s3 = inlined_call_operand.vmem [shape: f32[1,8], index: 3, kind: input, shape index: {}]
  %s4 = inlined_call_operand.vmem [shape: bf16[3,24,8], index: 4, kind: input, shape index: {}]
  %s5 = inlined_call_operand.vmem [shape: f32[1,8], index: 5, kind: input, shape index: {}]
  %s6 = inlined_call_operand.vmem [shape: f32[1,8], index: 6, kind: input, shape index: {}]
  %s7 = inlined_call_operand.vmem [shape: f32[2,16,16,8], index: 7, kind: output, shape index: {}]
  %s8 = sld [smem:[#allocation0]]
  $region65: #{tpu_custom_call.1} parent=0
    _
  %s10 = ssub.s32 1, %s8
  %s11 = scalar_select 0, %s10, %s8
  loop: start=0, step=1, limit=4
  $region2: #{tpu_custom_call.1} parent=0 // loop_pre_header
    _
  $region3: #{tpu_custom_call.1} parent=0 // loop_header
    %s13 = sphi 0, %s17
    %p14 = scmp.ge.s32.totalorder %s13, 4
    %s20 = sphi 0, %s32
    %s21 = sphi 0, %s28
    %s22 = sphi 0, %s20
    %s23 = sphi 0, %s21
    %s24 = sphi 0, %s22
    %s25 = sphi 0, %s23
    %s35 = sphi 0, %s37
    %s38 = sphi 0, %s35
    %s39 = sphi 0, %s38
    %s55 = sphi 0, %s39
    %s59 = sphi 0, %s59
    %s61 = sphi 0, %s59
    %s62 = sphi 0, %s61
    %s76 = sphi 0, %s62
    %s80 = sphi 0, %s80
    %s82 = sphi 0, %s80
    %s83 = sphi 0, %s82
    %s97 = sphi 0, %s83
    %s101 = sphi 0, %s101
    %s103 = sphi 0, %s101
    %s104 = sphi 0, %s103
    %s118 = sphi 0, %s104
    %s124 = sphi 0, %s126
    %s127 = sphi 0, %s124
    %s128 = sphi 0, %s127
    %s144 = sphi 0, %s128
    %s150 = sphi 0, %s152
    %s153 = sphi 0, %s150
    %s154 = sphi 0, %s153
    %s170 = sphi 0, %s154
    %s176 = sphi 0, %s178
    %s179 = sphi 0, %s176
    %s180 = sphi 0, %s179
    %s196 = sphi 0, %s180
    %s204 = sphi 0, %s206
    %s207 = sphi 0, %s204
    %s208 = sphi 0, %s207
    %s224 = sphi 0, %s208
  $region4: #{tpu_custom_call.1} parent=0 // loop_header_branch
    %16 = sbr.rel (%p14) target = $region8
  $region5: #{tpu_custom_call.1} parent=0 // loop_body
    %s18 = ssub.s32 %s13, 1
    %s19 = ssub.s32 %s13, 2
    %s26 = sadd.s32 1, %s21
    %p27 = scmp.ge.s32.totalorder %s26, 1
    %s28 = scalar_select %p27, 0, %s26
    %s29 = sadd.s32 1, %s20
    %s30 = scalar_select %p27, %s29, %s20
    %p31 = scmp.ge.s32.totalorder %s30, 2
    %s32 = scalar_select %p31, 0, %s30
    %s33 = ssub.s32 %s20, %s32
    %p34 = scmp.eq.s32.totalorder %s33, 0
    %s36 = sadd.s32 %s35, 1
    %s37 = scalar_select %p34, %s35, %s36
    %p40 = pneg %p34
    %p41 = scmp.eq.s32.totalorder %s13, 1
    %p42 = por %p40, %p41
    %p43 = scmp.ne.s32.totalorder %s35, %s38
    %p44 = scmp.eq.s32.totalorder %s13, 0
    %p45 = por %p43, %p44
    %p46 = scmp.ne.s32.totalorder %s35, %s38
    %p47 = scmp.eq.s32.totalorder %s18, 1
    %p48 = por %p46, %p47
    %p49 = scmp.ne.s32.totalorder %s38, %s39
    %p50 = scmp.eq.s32.totalorder %s18, 0
    %p51 = por %p49, %p50
    %p52 = scmp.ne.s32.totalorder %s38, %s39
    %p53 = scmp.eq.s32.totalorder %s19, 1
    %p54 = por %p52, %p53
    %p56 = scmp.ne.s32.totalorder %s39, %s55
    %p57 = scmp.eq.s32.totalorder %s19, 0
    %p58 = por %p56, %p57
    %s60 = sadd.s32 %s59, 1
    %p63 = scmp.eq.s32.totalorder %s13, 1
    %p64 = scmp.ne.s32.totalorder %s59, %s61
    %p65 = scmp.eq.s32.totalorder %s13, 0
    %p66 = por %p64, %p65
    %p67 = scmp.ne.s32.totalorder %s59, %s61
    %p68 = scmp.eq.s32.totalorder %s18, 1
    %p69 = por %p67, %p68
    %p70 = scmp.ne.s32.totalorder %s61, %s62
    %p71 = scmp.eq.s32.totalorder %s18, 0
    %p72 = por %p70, %p71
    %p73 = scmp.ne.s32.totalorder %s61, %s62
    %p74 = scmp.eq.s32.totalorder %s19, 1
    %p75 = por %p73, %p74
    %p77 = scmp.ne.s32.totalorder %s62, %s76
    %p78 = scmp.eq.s32.totalorder %s19, 0
    %p79 = por %p77, %p78
    %s81 = sadd.s32 %s80, 1
    %p84 = scmp.eq.s32.totalorder %s13, 1
    %p85 = scmp.ne.s32.totalorder %s80, %s82
    %p86 = scmp.eq.s32.totalorder %s13, 0
    %p87 = por %p85, %p86
    %p88 = scmp.ne.s32.totalorder %s80, %s82
    %p89 = scmp.eq.s32.totalorder %s18, 1
    %p90 = por %p88, %p89
    %p91 = scmp.ne.s32.totalorder %s82, %s83
    %p92 = scmp.eq.s32.totalorder %s18, 0
    %p93 = por %p91, %p92
    %p94 = scmp.ne.s32.totalorder %s82, %s83
    %p95 = scmp.eq.s32.totalorder %s19, 1
    %p96 = por %p94, %p95
    %p98 = scmp.ne.s32.totalorder %s83, %s97
    %p99 = scmp.eq.s32.totalorder %s19, 0
    %p100 = por %p98, %p99
    %s102 = sadd.s32 %s101, 1
    %p105 = scmp.eq.s32.totalorder %s13, 1
    %p106 = scmp.ne.s32.totalorder %s101, %s103
    %p107 = scmp.eq.s32.totalorder %s13, 0
    %p108 = por %p106, %p107
    %p109 = scmp.ne.s32.totalorder %s101, %s103
    %p110 = scmp.eq.s32.totalorder %s18, 1
    %p111 = por %p109, %p110
    %p112 = scmp.ne.s32.totalorder %s103, %s104
    %p113 = scmp.eq.s32.totalorder %s18, 0
    %p114 = por %p112, %p113
    %p115 = scmp.ne.s32.totalorder %s103, %s104
    %p116 = scmp.eq.s32.totalorder %s19, 1
    %p117 = por %p115, %p116
    %p119 = scmp.ne.s32.totalorder %s104, %s118
    %p120 = scmp.eq.s32.totalorder %s19, 0
    %p121 = por %p119, %p120
    %s122 = ssub.s32 %s21, %s28
    %p123 = scmp.eq.s32.totalorder %s122, 0
    %s125 = sadd.s32 %s124, 1
    %s126 = scalar_select %p123, %s124, %s125
    %p129 = pneg %p123
    %p130 = scmp.eq.s32.totalorder %s13, 1
    %p131 = por %p129, %p130
    %p132 = scmp.ne.s32.totalorder %s124, %s127
    %p133 = scmp.eq.s32.totalorder %s13, 0
    %p134 = por %p132, %p133
    %p135 = scmp.ne.s32.totalorder %s124, %s127
    %p136 = scmp.eq.s32.totalorder %s18, 1
    %p137 = por %p135, %p136
    %p138 = scmp.ne.s32.totalorder %s127, %s128
    %p139 = scmp.eq.s32.totalorder %s18, 0
    %p140 = por %p138, %p139
    %p141 = scmp.ne.s32.totalorder %s127, %s128
    %p142 = scmp.eq.s32.totalorder %s19, 1
    %p143 = por %p141, %p142
    %p145 = scmp.ne.s32.totalorder %s128, %s144
    %p146 = scmp.eq.s32.totalorder %s19, 0
    %p147 = por %p145, %p146
    %s148 = ssub.s32 %s21, %s28
    %p149 = scmp.eq.s32.totalorder %s148, 0
    %s151 = sadd.s32 %s150, 1
    %s152 = scalar_select %p149, %s150, %s151
    %p155 = pneg %p149
    %p156 = scmp.eq.s32.totalorder %s13, 1
    %p157 = por %p155, %p156
    %p158 = scmp.ne.s32.totalorder %s150, %s153
    %p159 = scmp.eq.s32.totalorder %s13, 0
    %p160 = por %p158, %p159
    %p161 = scmp.ne.s32.totalorder %s150, %s153
    %p162 = scmp.eq.s32.totalorder %s18, 1
    %p163 = por %p161, %p162
    %p164 = scmp.ne.s32.totalorder %s153, %s154
    %p165 = scmp.eq.s32.totalorder %s18, 0
    %p166 = por %p164, %p165
    %p167 = scmp.ne.s32.totalorder %s153, %s154
    %p168 = scmp.eq.s32.totalorder %s19, 1
    %p169 = por %p167, %p168
    %p171 = scmp.ne.s32.totalorder %s154, %s170
    %p172 = scmp.eq.s32.totalorder %s19, 0
    %p173 = por %p171, %p172
    %s174 = ssub.s32 %s21, %s28
    %p175 = scmp.eq.s32.totalorder %s174, 0
    %s177 = sadd.s32 %s176, 1
    %s178 = scalar_select %p175, %s176, %s177
    %p181 = pneg %p175
    %p182 = scmp.eq.s32.totalorder %s13, 1
    %p183 = por %p181, %p182
    %p184 = scmp.ne.s32.totalorder %s176, %s179
    %p185 = scmp.eq.s32.totalorder %s13, 0
    %p186 = por %p184, %p185
    %p187 = scmp.ne.s32.totalorder %s176, %s179
    %p188 = scmp.eq.s32.totalorder %s18, 1
    %p189 = por %p187, %p188
    %p190 = scmp.ne.s32.totalorder %s179, %s180
    %p191 = scmp.eq.s32.totalorder %s18, 0
    %p192 = por %p190, %p191
    %p193 = scmp.ne.s32.totalorder %s179, %s180
    %p194 = scmp.eq.s32.totalorder %s19, 1
    %p195 = por %p193, %p194
    %p197 = scmp.ne.s32.totalorder %s180, %s196
    %p198 = scmp.eq.s32.totalorder %s19, 0
    %p199 = por %p197, %p198
    %s200 = ssub.s32 %s20, %s32
    %s201 = ssub.s32 %s21, %s28
    %s202 = sor.u32 %s200, %s201
    %p203 = scmp.eq.s32.totalorder %s202, 0
    %s205 = sadd.s32 %s204, 1
    %s206 = scalar_select %p203, %s204, %s205
    %p209 = pneg %p203
    %p210 = scmp.eq.s32.totalorder %s13, 1
    %p211 = por %p209, %p210
    %p212 = scmp.ne.s32.totalorder %s204, %s207
    %p213 = scmp.eq.s32.totalorder %s13, 0
    %p214 = por %p212, %p213
    %p215 = scmp.ne.s32.totalorder %s204, %s207
    %p216 = scmp.eq.s32.totalorder %s18, 1
    %p217 = por %p215, %p216
    %p218 = scmp.ne.s32.totalorder %s207, %s208
    %p219 = scmp.eq.s32.totalorder %s18, 0
    %p220 = por %p218, %p219
    %p221 = scmp.ne.s32.totalorder %s207, %s208
    %p222 = scmp.eq.s32.totalorder %s19, 1
    %p223 = por %p221, %p222
    %p225 = scmp.ne.s32.totalorder %s208, %s224
    %p226 = scmp.eq.s32.totalorder %s19, 0
    %p227 = por %p225, %p226
    %p228 = scmp.le.s32.totalorder 1, %s13
    %p229 = scmp.lt.s32.totalorder %s13, 3
    %p230 = pnand %p228, %p229
    %p231 = pneg %p230
    // Predicated region
    $region9: #{tpu_custom_call.1} parent=5 // pred_check
      _
    $region10: #{tpu_custom_call.1} parent=5 // pred_check_branch
      %233 = sbr.rel (%p230) target = $region12
    $region11: #{tpu_custom_call.1} parent=5 // pred_region
      %s234 = ssub.s32 %s13, 1
      // Predicated region
      $region13: #{tpu_custom_call.1} parent=11 // pred_check
        %p235 = pneg %p72
      $region14: #{tpu_custom_call.1} parent=11 // pred_check_branch
        %237 = sbr.rel (%p235) target = $region16
      $region15: #{tpu_custom_call.1} parent=11 // pred_region
        _
      $region16: #{tpu_custom_call.1} parent=11 // pred_fallthru
        _
      // Predicated region
      $region17: #{tpu_custom_call.1} parent=11 // pred_check
        %p238 = pneg %p93
      $region18: #{tpu_custom_call.1} parent=11 // pred_check_branch
        %240 = sbr.rel (%p238) target = $region20
      $region19: #{tpu_custom_call.1} parent=11 // pred_region
        _
      $region20: #{tpu_custom_call.1} parent=11 // pred_fallthru
        _
      // Predicated region
      $region21: #{tpu_custom_call.1} parent=11 // pred_check
        %p241 = pneg %p114
      $region22: #{tpu_custom_call.1} parent=11 // pred_check_branch
        %243 = sbr.rel (%p241) target = $region24
      $region23: #{tpu_custom_call.1} parent=11 // pred_region
        _
      $region24: #{tpu_custom_call.1} parent=11 // pred_fallthru
        _
      // Predicated region
      $region25: #{tpu_custom_call.1} parent=11 // pred_check
        %p244 = pneg %p140
      $region26: #{tpu_custom_call.1} parent=11 // pred_check_branch
        %246 = sbr.rel (%p244) target = $region28
      $region27: #{tpu_custom_call.1} parent=11 // pred_region
        %p247 = scmp.lt.s32.totalorder %s23, 0
        %s248 = scalar_select %p247, %s23, 0
        %s249 = smul.addr %s248, 4
        %s250 = scalar_lea.vmem %s4, %s249
      $region28: #{tpu_custom_call.1} parent=11 // pred_fallthru
        _
      // Predicated region
      $region29: #{tpu_custom_call.1} parent=11 // pred_check
        %p251 = pneg %p166
      $region30: #{tpu_custom_call.1} parent=11 // pred_check_branch
        %253 = sbr.rel (%p251) target = $region32
      $region31: #{tpu_custom_call.1} parent=11 // pred_region
        %p254 = scmp.lt.s32.totalorder %s23, 0
        %s255 = scalar_select %p254, %s23, 0
        %s256 = scalar_lea.vmem %s5, %s255
      $region32: #{tpu_custom_call.1} parent=11 // pred_fallthru
        _
      // Predicated region
      $region33: #{tpu_custom_call.1} parent=11 // pred_check
        %p257 = pneg %p192
      $region34: #{tpu_custom_call.1} parent=11 // pred_check_branch
        %259 = sbr.rel (%p257) target = $region36
      $region35: #{tpu_custom_call.1} parent=11 // pred_region
        %p260 = scmp.lt.s32.totalorder %s23, 0
        %s261 = scalar_select %p260, %s23, 0
        %s262 = scalar_lea.vmem %s6, %s261
      $region36: #{tpu_custom_call.1} parent=11 // pred_fallthru
        _
    $region12: #{tpu_custom_call.1} parent=5 // pred_fallthru
      _
    %p263 = scmp.lt.s32.totalorder %s13, 2
    // Predicated region
    $region37: #{tpu_custom_call.1} parent=5 // pred_check
      %p264 = pneg %p263
    $region38: #{tpu_custom_call.1} parent=5 // pred_check_branch
      %266 = sbr.rel (%p264) target = $region40
    $region39: #{tpu_custom_call.1} parent=5 // pred_region
      // Predicated region
      $region41: #{tpu_custom_call.1} parent=39 // pred_check
        %p267 = pneg %p45
      $region42: #{tpu_custom_call.1} parent=39 // pred_check_branch
        %269 = sbr.rel (%p267) target = $region44
      $region43: #{tpu_custom_call.1} parent=39 // pred_region
        %p270 = scmp.lt.s32.totalorder %s20, 1
        %s271 = scalar_select %p270, %s20, 1
        %s272 = smul.addr %s271, 32
        %s273 = smul.addr %s272, 8
        %s274 = scalar_lea.vmem %s0, %s273
      $region44: #{tpu_custom_call.1} parent=39 // pred_fallthru
        _
    $region40: #{tpu_custom_call.1} parent=5 // pred_fallthru
      _
    %p275 = scmp.le.s32.totalorder 1, %s13
    %p276 = scmp.lt.s32.totalorder %s13, 3
    %p277 = pnand %p275, %p276
    %p278 = pneg %p277
    // Predicated region
    $region45: #{tpu_custom_call.1} parent=5 // pred_check
      _
    $region46: #{tpu_custom_call.1} parent=5 // pred_check_branch
      %280 = sbr.rel (%p277) target = $region48
    $region47: #{tpu_custom_call.1} parent=5 // pred_region
      %s281 = ssub.s32 %s13, 1
      %p282 = scmp.lt.s32.totalorder %s22, 1
      %s283 = scalar_select %p282, %s22, 1
      %s284 = smul.addr %s283, 32
      %s285 = smul.addr %s284, 8
      %s286 = scalar_lea.vmem %s0, %s285
      %p287 = pneg %p51
      %p288 = pneg %p48
      %p289 = pneg %p72
      %p290 = pneg %p69
      %p291 = pneg %p93
      %p292 = pneg %p90
      %p293 = pneg %p114
      %p294 = pneg %p111
      %p295 = scmp.lt.s32.totalorder %s23, 0
      %s296 = scalar_select %p295, %s23, 0
      %s297 = smul.addr %s296, 4
      %s298 = scalar_lea.vmem %s4, %s297
      %p299 = pneg %p140
      %p300 = pneg %p137
      %p301 = scmp.lt.s32.totalorder %s23, 0
      %s302 = scalar_select %p301, %s23, 0
      %s303 = scalar_lea.vmem %s5, %s302
      %p304 = pneg %p166
      %p305 = pneg %p163
      %p306 = scmp.lt.s32.totalorder %s23, 0
      %s307 = scalar_select %p306, %s23, 0
      %s308 = scalar_lea.vmem %s6, %s307
      %p309 = pneg %p192
      %p310 = pneg %p189
      %p311 = pneg %p220
      %p312 = pneg %p217
      %p313 = scmp.lt.s32.totalorder %s22, 1
      %s314 = scalar_select %p313, %s22, 1
      %p315 = scmp.lt.s32.totalorder %s23, 0
      %s316 = scalar_select %p315, %s23, 0
      %s317 = smul.addr %s314, 32
      %s318 = sadd.s32 %s316, %s317
      %s319 = smul.addr %s318, 8
      %s320 = scalar_lea.vmem %s7, %s319
      %p321 = scmp.lt.s32.totalorder %s22, 1
      %s322 = scalar_select %p321, %s22, 1
      %s323 = smul.addr %s322, 32
      %s324 = smul.addr %s323, 8
      %s325 = scalar_lea.vmem %s0, %s324
      %p326 = scmp.lt.s32.totalorder %s23, 0
      %s327 = scalar_select %p326, %s23, 0
      %s328 = smul.addr %s327, 4
      %s329 = scalar_lea.vmem %s4, %s328
      %p330 = scmp.lt.s32.totalorder %s23, 0
      %s331 = scalar_select %p330, %s23, 0
      %s332 = scalar_lea.vmem %s5, %s331
      %p333 = scmp.lt.s32.totalorder %s23, 0
      %s334 = scalar_select %p333, %s23, 0
      %s335 = scalar_lea.vmem %s6, %s334
      %p336 = scmp.lt.s32.totalorder %s22, 1
      %s337 = scalar_select %p336, %s22, 1
      %p338 = scmp.lt.s32.totalorder %s23, 0
      %s339 = scalar_select %p338, %s23, 0
      %s340 = smul.addr %s337, 32
      %s341 = sadd.s32 %s339, %s340
      %s342 = smul.addr %s341, 8
      %s343 = scalar_lea.vmem %s7, %s342
      %p345 = scmp.eq.s32.totalorder %s23, 0
      // Predicated region
      $region49: #{tpu_custom_call.1} parent=47 // pred_check
        %p346 = pneg %p345
      $region50: #{tpu_custom_call.1} parent=47 // pred_check_branch
        %348 = sbr.rel (%p346) target = $region52
      $region51: #{tpu_custom_call.1} parent=47 // pred_region
        %v349 = vld [vmem:[%s325] sm:$0xff]
        %v350 = vld [vmem:[%s325 + $0x8] sm:$0xff]
        %v351 = vld [vmem:[%s325 + $0x10] sm:$0xff]
        %v352 = vld [vmem:[%s325 + $0x18] sm:$0xff]
        %v353 = vld [vmem:[%s325 + $0x20] sm:$0xff]
        %v354 = vld [vmem:[%s325 + $0x28] sm:$0xff]
        %v355 = vld [vmem:[%s325 + $0x30] sm:$0xff]
        %v356 = vld [vmem:[%s325 + $0x38] sm:$0xff]
        %v357 = vld [vmem:[%s325 + $0x40] sm:$0xff]
        %v358 = vld [vmem:[%s325 + $0x48] sm:$0xff]
        %v359 = vld [vmem:[%s325 + $0x50] sm:$0xff]
        %v360 = vld [vmem:[%s325 + $0x58] sm:$0xff]
        %v361 = vld [vmem:[%s325 + $0x60] sm:$0xff]
        %v362 = vld [vmem:[%s325 + $0x68] sm:$0xff]
        %v363 = vld [vmem:[%s325 + $0x70] sm:$0xff]
        %v364 = vld [vmem:[%s325 + $0x78] sm:$0xff]
        %v365 = vld [vmem:[%s325 + $0x80] sm:$0xff]
        %v366 = vld [vmem:[%s325 + $0x88] sm:$0xff]
        %v367 = vld [vmem:[%s325 + $0x90] sm:$0xff]
        %v368 = vld [vmem:[%s325 + $0x98] sm:$0xff]
        %v369 = vld [vmem:[%s325 + $0xa0] sm:$0xff]
        %v370 = vld [vmem:[%s325 + $0xa8] sm:$0xff]
        %v371 = vld [vmem:[%s325 + $0xb0] sm:$0xff]
        %v372 = vld [vmem:[%s325 + $0xb8] sm:$0xff]
        %v373 = vld [vmem:[%s325 + $0xc0] sm:$0xff]
        %v374 = vld [vmem:[%s325 + $0xc8] sm:$0xff]
        %v375 = vld [vmem:[%s325 + $0xd0] sm:$0xff]
        %v376 = vld [vmem:[%s325 + $0xd8] sm:$0xff]
        %v377 = vld [vmem:[%s325 + $0xe0] sm:$0xff]
        %v378 = vld [vmem:[%s325 + $0xe8] sm:$0xff]
        %v379 = vld [vmem:[%s325 + $0xf0] sm:$0xff]
        %v380 = vld [vmem:[%s325 + $0xf8] sm:$0xff]
        %vm381 = vcmask 97280
        %382 = vst.msk [vmem:[#allocation2] sm:$0xff] %vm381, 0
        %383 = vst.msk [vmem:[#allocation2 + $0x88] sm:$0xff] %vm381, 0
        %v384 = vlaneseq
        %v385 = vshrl.u32 %v384, 7
        %v386 = vadd.s32 %v385, 8
        %v387 = vadd.s32 %v385, 16
        %v388 = vadd.s32 %v385, 24
        %v389 = vadd.s32 %v385, 32
        %v390 = vadd.s32 %v385, 40
        %v391 = vadd.s32 %v385, 48
        %v392 = vadd.s32 %v385, 56
        %v393 = vadd.s32 %v385, 64
        %v394 = vadd.s32 %v385, 72
        %v395 = vadd.s32 %v385, 80
        %v396 = vadd.s32 %v385, 88
        %v397 = vadd.s32 %v385, 96
        %v398 = vadd.s32 %v385, 104
        %v399 = vadd.s32 %v385, 112
        %v400 = vadd.s32 %v385, 120
        %v401 = vadd.s32 %v385, 128
        %v402 = vadd.s32 %v385, 136
        %v403 = vadd.s32 %v385, 144
        %v404 = vadd.s32 %v385, 152
        %v405 = vadd.s32 %v385, 160
        %v406 = vadd.s32 %v385, 168
        %v407 = vadd.s32 %v385, 176
        %v408 = vadd.s32 %v385, 184
        %v409 = vadd.s32 %v385, 192
        %v410 = vadd.s32 %v385, 200
        %v411 = vadd.s32 %v385, 208
        %v412 = vadd.s32 %v385, 216
        %v413 = vadd.s32 %v385, 224
        %v414 = vadd.s32 %v385, 232
        %v415 = vadd.s32 %v385, 240
        %v416 = vadd.s32 %v385, 248
        %vm417 = vcmp.lt.s32.totalorder %v385, 0
        %v418 = vsub.s32 0, %v385
        %v419 = vsel %vm417, %v418, %v385
        %v420 = vshrl.u32 %v419, 4
        %v421 = vand.u32 %v419, 15
        %v422 = vsub.s32 0, %v421
        %v423 = vsel %vm417, %v422, %v421
        %vm424 = vcmp.lt.s32.totalorder %v386, 0
        %v425 = vsub.s32 0, %v386
        %v426 = vsel %vm424, %v425, %v386
        %v427 = vshrl.u32 %v426, 4
        %v428 = vand.u32 %v426, 15
        %v429 = vsub.s32 0, %v428
        %v430 = vsel %vm424, %v429, %v428
        %vm431 = vcmp.lt.s32.totalorder %v387, 0
        %v432 = vsub.s32 0, %v387
        %v433 = vsel %vm431, %v432, %v387
        %v434 = vshrl.u32 %v433, 4
        %v435 = vand.u32 %v433, 15
        %v436 = vsub.s32 0, %v435
        %v437 = vsel %vm431, %v436, %v435
        %vm438 = vcmp.lt.s32.totalorder %v388, 0
        %v439 = vsub.s32 0, %v388
        %v440 = vsel %vm438, %v439, %v388
        %v441 = vshrl.u32 %v440, 4
        %v442 = vand.u32 %v440, 15
        %v443 = vsub.s32 0, %v442
        %v444 = vsel %vm438, %v443, %v442
        %vm445 = vcmp.lt.s32.totalorder %v389, 0
        %v446 = vsub.s32 0, %v389
        %v447 = vsel %vm445, %v446, %v389
        %v448 = vshrl.u32 %v447, 4
        %v449 = vand.u32 %v447, 15
        %v450 = vsub.s32 0, %v449
        %v451 = vsel %vm445, %v450, %v449
        %vm452 = vcmp.lt.s32.totalorder %v390, 0
        %v453 = vsub.s32 0, %v390
        %v454 = vsel %vm452, %v453, %v390
        %v455 = vshrl.u32 %v454, 4
        %v456 = vand.u32 %v454, 15
        %v457 = vsub.s32 0, %v456
        %v458 = vsel %vm452, %v457, %v456
        %vm459 = vcmp.lt.s32.totalorder %v391, 0
        %v460 = vsub.s32 0, %v391
        %v461 = vsel %vm459, %v460, %v391
        %v462 = vshrl.u32 %v461, 4
        %v463 = vand.u32 %v461, 15
        %v464 = vsub.s32 0, %v463
        %v465 = vsel %vm459, %v464, %v463
        %vm466 = vcmp.lt.s32.totalorder %v392, 0
        %v467 = vsub.s32 0, %v392
        %v468 = vsel %vm466, %v467, %v392
        %v469 = vshrl.u32 %v468, 4
        %v470 = vand.u32 %v468, 15
        %v471 = vsub.s32 0, %v470
        %v472 = vsel %vm466, %v471, %v470
        %vm473 = vcmp.lt.s32.totalorder %v393, 0
        %v474 = vsub.s32 0, %v393
        %v475 = vsel %vm473, %v474, %v393
        %v476 = vshrl.u32 %v475, 4
        %v477 = vand.u32 %v475, 15
        %v478 = vsub.s32 0, %v477
        %v479 = vsel %vm473, %v478, %v477
        %vm480 = vcmp.lt.s32.totalorder %v394, 0
        %v481 = vsub.s32 0, %v394
        %v482 = vsel %vm480, %v481, %v394
        %v483 = vshrl.u32 %v482, 4
        %v484 = vand.u32 %v482, 15
        %v485 = vsub.s32 0, %v484
        %v486 = vsel %vm480, %v485, %v484
        %vm487 = vcmp.lt.s32.totalorder %v395, 0
        %v488 = vsub.s32 0, %v395
        %v489 = vsel %vm487, %v488, %v395
        %v490 = vshrl.u32 %v489, 4
        %v491 = vand.u32 %v489, 15
        %v492 = vsub.s32 0, %v491
        %v493 = vsel %vm487, %v492, %v491
        %vm494 = vcmp.lt.s32.totalorder %v396, 0
        %v495 = vsub.s32 0, %v396
        %v496 = vsel %vm494, %v495, %v396
        %v497 = vshrl.u32 %v496, 4
        %v498 = vand.u32 %v496, 15
        %v499 = vsub.s32 0, %v498
        %v500 = vsel %vm494, %v499, %v498
        %vm501 = vcmp.lt.s32.totalorder %v397, 0
        %v502 = vsub.s32 0, %v397
        %v503 = vsel %vm501, %v502, %v397
        %v504 = vshrl.u32 %v503, 4
        %v505 = vand.u32 %v503, 15
        %v506 = vsub.s32 0, %v505
        %v507 = vsel %vm501, %v506, %v505
        %vm508 = vcmp.lt.s32.totalorder %v398, 0
        %v509 = vsub.s32 0, %v398
        %v510 = vsel %vm508, %v509, %v398
        %v511 = vshrl.u32 %v510, 4
        %v512 = vand.u32 %v510, 15
        %v513 = vsub.s32 0, %v512
        %v514 = vsel %vm508, %v513, %v512
        %vm515 = vcmp.lt.s32.totalorder %v399, 0
        %v516 = vsub.s32 0, %v399
        %v517 = vsel %vm515, %v516, %v399
        %v518 = vshrl.u32 %v517, 4
        %v519 = vand.u32 %v517, 15
        %v520 = vsub.s32 0, %v519
        %v521 = vsel %vm515, %v520, %v519
        %vm522 = vcmp.lt.s32.totalorder %v400, 0
        %v523 = vsub.s32 0, %v400
        %v524 = vsel %vm522, %v523, %v400
        %v525 = vshrl.u32 %v524, 4
        %v526 = vand.u32 %v524, 15
        %v527 = vsub.s32 0, %v526
        %v528 = vsel %vm522, %v527, %v526
        %vm529 = vcmp.lt.s32.totalorder %v401, 0
        %v530 = vsub.s32 0, %v401
        %v531 = vsel %vm529, %v530, %v401
        %v532 = vshrl.u32 %v531, 4
        %v533 = vand.u32 %v531, 15
        %v534 = vsub.s32 0, %v533
        %v535 = vsel %vm529, %v534, %v533
        %vm536 = vcmp.lt.s32.totalorder %v402, 0
        %v537 = vsub.s32 0, %v402
        %v538 = vsel %vm536, %v537, %v402
        %v539 = vshrl.u32 %v538, 4
        %v540 = vand.u32 %v538, 15
        %v541 = vsub.s32 0, %v540
        %v542 = vsel %vm536, %v541, %v540
        %vm543 = vcmp.lt.s32.totalorder %v403, 0
        %v544 = vsub.s32 0, %v403
        %v545 = vsel %vm543, %v544, %v403
        %v546 = vshrl.u32 %v545, 4
        %v547 = vand.u32 %v545, 15
        %v548 = vsub.s32 0, %v547
        %v549 = vsel %vm543, %v548, %v547
        %vm550 = vcmp.lt.s32.totalorder %v404, 0
        %v551 = vsub.s32 0, %v404
        %v552 = vsel %vm550, %v551, %v404
        %v553 = vshrl.u32 %v552, 4
        %v554 = vand.u32 %v552, 15
        %v555 = vsub.s32 0, %v554
        %v556 = vsel %vm550, %v555, %v554
        %vm557 = vcmp.lt.s32.totalorder %v405, 0
        %v558 = vsub.s32 0, %v405
        %v559 = vsel %vm557, %v558, %v405
        %v560 = vshrl.u32 %v559, 4
        %v561 = vand.u32 %v559, 15
        %v562 = vsub.s32 0, %v561
        %v563 = vsel %vm557, %v562, %v561
        %vm564 = vcmp.lt.s32.totalorder %v406, 0
        %v565 = vsub.s32 0, %v406
        %v566 = vsel %vm564, %v565, %v406
        %v567 = vshrl.u32 %v566, 4
        %v568 = vand.u32 %v566, 15
        %v569 = vsub.s32 0, %v568
        %v570 = vsel %vm564, %v569, %v568
        %vm571 = vcmp.lt.s32.totalorder %v407, 0
        %v572 = vsub.s32 0, %v407
        %v573 = vsel %vm571, %v572, %v407
        %v574 = vshrl.u32 %v573, 4
        %v575 = vand.u32 %v573, 15
        %v576 = vsub.s32 0, %v575
        %v577 = vsel %vm571, %v576, %v575
        %vm578 = vcmp.lt.s32.totalorder %v408, 0
        %v579 = vsub.s32 0, %v408
        %v580 = vsel %vm578, %v579, %v408
        %v581 = vshrl.u32 %v580, 4
        %v582 = vand.u32 %v580, 15
        %v583 = vsub.s32 0, %v582
        %v584 = vsel %vm578, %v583, %v582
        %vm585 = vcmp.lt.s32.totalorder %v409, 0
        %v586 = vsub.s32 0, %v409
        %v587 = vsel %vm585, %v586, %v409
        %v588 = vshrl.u32 %v587, 4
        %v589 = vand.u32 %v587, 15
        %v590 = vsub.s32 0, %v589
        %v591 = vsel %vm585, %v590, %v589
        %vm592 = vcmp.lt.s32.totalorder %v410, 0
        %v593 = vsub.s32 0, %v410
        %v594 = vsel %vm592, %v593, %v410
        %v595 = vshrl.u32 %v594, 4
        %v596 = vand.u32 %v594, 15
        %v597 = vsub.s32 0, %v596
        %v598 = vsel %vm592, %v597, %v596
        %vm599 = vcmp.lt.s32.totalorder %v411, 0
        %v600 = vsub.s32 0, %v411
        %v601 = vsel %vm599, %v600, %v411
        %v602 = vshrl.u32 %v601, 4
        %v603 = vand.u32 %v601, 15
        %v604 = vsub.s32 0, %v603
        %v605 = vsel %vm599, %v604, %v603
        %vm606 = vcmp.lt.s32.totalorder %v412, 0
        %v607 = vsub.s32 0, %v412
        %v608 = vsel %vm606, %v607, %v412
        %v609 = vshrl.u32 %v608, 4
        %v610 = vand.u32 %v608, 15
        %v611 = vsub.s32 0, %v610
        %v612 = vsel %vm606, %v611, %v610
        %vm613 = vcmp.lt.s32.totalorder %v413, 0
        %v614 = vsub.s32 0, %v413
        %v615 = vsel %vm613, %v614, %v413
        %v616 = vshrl.u32 %v615, 4
        %v617 = vand.u32 %v615, 15
        %v618 = vsub.s32 0, %v617
        %v619 = vsel %vm613, %v618, %v617
        %vm620 = vcmp.lt.s32.totalorder %v414, 0
        %v621 = vsub.s32 0, %v414
        %v622 = vsel %vm620, %v621, %v414
        %v623 = vshrl.u32 %v622, 4
        %v624 = vand.u32 %v622, 15
        %v625 = vsub.s32 0, %v624
        %v626 = vsel %vm620, %v625, %v624
        %vm627 = vcmp.lt.s32.totalorder %v415, 0
        %v628 = vsub.s32 0, %v415
        %v629 = vsel %vm627, %v628, %v415
        %v630 = vshrl.u32 %v629, 4
        %v631 = vand.u32 %v629, 15
        %v632 = vsub.s32 0, %v631
        %v633 = vsel %vm627, %v632, %v631
        %vm634 = vcmp.lt.s32.totalorder %v416, 0
        %v635 = vsub.s32 0, %v416
        %v636 = vsel %vm634, %v635, %v416
        %v637 = vshrl.u32 %v636, 4
        %v638 = vand.u32 %v636, 15
        %v639 = vsub.s32 0, %v638
        %v640 = vsel %vm634, %v639, %v638
        %vm641 = vcmp.ne.s32.totalorder %v423, 0
        %vm642 = vcmp.ne.s32.totalorder %v430, 0
        %vm643 = vcmp.ne.s32.totalorder %v437, 0
        %vm644 = vcmp.ne.s32.totalorder %v444, 0
        %vm645 = vcmp.ne.s32.totalorder %v451, 0
        %vm646 = vcmp.ne.s32.totalorder %v458, 0
        %vm647 = vcmp.ne.s32.totalorder %v465, 0
        %vm648 = vcmp.ne.s32.totalorder %v472, 0
        %vm649 = vcmp.ne.s32.totalorder %v479, 0
        %vm650 = vcmp.ne.s32.totalorder %v486, 0
        %vm651 = vcmp.ne.s32.totalorder %v493, 0
        %vm652 = vcmp.ne.s32.totalorder %v500, 0
        %vm653 = vcmp.ne.s32.totalorder %v507, 0
        %vm654 = vcmp.ne.s32.totalorder %v514, 0
        %vm655 = vcmp.ne.s32.totalorder %v521, 0
        %vm656 = vcmp.ne.s32.totalorder %v528, 0
        %vm657 = vcmp.ne.s32.totalorder %v535, 0
        %vm658 = vcmp.ne.s32.totalorder %v542, 0
        %vm659 = vcmp.ne.s32.totalorder %v549, 0
        %vm660 = vcmp.ne.s32.totalorder %v556, 0
        %vm661 = vcmp.ne.s32.totalorder %v563, 0
        %vm662 = vcmp.ne.s32.totalorder %v570, 0
        %vm663 = vcmp.ne.s32.totalorder %v577, 0
        %vm664 = vcmp.ne.s32.totalorder %v584, 0
        %vm665 = vcmp.ne.s32.totalorder %v591, 0
        %vm666 = vcmp.ne.s32.totalorder %v598, 0
        %vm667 = vcmp.ne.s32.totalorder %v605, 0
        %vm668 = vcmp.ne.s32.totalorder %v612, 0
        %vm669 = vcmp.ne.s32.totalorder %v619, 0
        %vm670 = vcmp.ne.s32.totalorder %v626, 0
        %vm671 = vcmp.ne.s32.totalorder %v633, 0
        %vm672 = vcmp.ne.s32.totalorder %v640, 0
        %vm673 = vcmp.lt.s32.totalorder %v423, 0
        %vm674 = vcmp.lt.s32.totalorder %v430, 0
        %vm675 = vcmp.lt.s32.totalorder %v437, 0
        %vm676 = vcmp.lt.s32.totalorder %v444, 0
        %vm677 = vcmp.lt.s32.totalorder %v451, 0
        %vm678 = vcmp.lt.s32.totalorder %v458, 0
        %vm679 = vcmp.lt.s32.totalorder %v465, 0
        %vm680 = vcmp.lt.s32.totalorder %v472, 0
        %vm681 = vcmp.lt.s32.totalorder %v479, 0
        %vm682 = vcmp.lt.s32.totalorder %v486, 0
        %vm683 = vcmp.lt.s32.totalorder %v493, 0
        %vm684 = vcmp.lt.s32.totalorder %v500, 0
        %vm685 = vcmp.lt.s32.totalorder %v507, 0
        %vm686 = vcmp.lt.s32.totalorder %v514, 0
        %vm687 = vcmp.lt.s32.totalorder %v521, 0
        %vm688 = vcmp.lt.s32.totalorder %v528, 0
        %vm689 = vcmp.lt.s32.totalorder %v535, 0
        %vm690 = vcmp.lt.s32.totalorder %v542, 0
        %vm691 = vcmp.lt.s32.totalorder %v549, 0
        %vm692 = vcmp.lt.s32.totalorder %v556, 0
        %vm693 = vcmp.lt.s32.totalorder %v563, 0
        %vm694 = vcmp.lt.s32.totalorder %v570, 0
        %vm695 = vcmp.lt.s32.totalorder %v577, 0
        %vm696 = vcmp.lt.s32.totalorder %v584, 0
        %vm697 = vcmp.lt.s32.totalorder %v591, 0
        %vm698 = vcmp.lt.s32.totalorder %v598, 0
        %vm699 = vcmp.lt.s32.totalorder %v605, 0
        %vm700 = vcmp.lt.s32.totalorder %v612, 0
        %vm701 = vcmp.lt.s32.totalorder %v619, 0
        %vm702 = vcmp.lt.s32.totalorder %v626, 0
        %vm703 = vcmp.lt.s32.totalorder %v633, 0
        %vm704 = vcmp.lt.s32.totalorder %v640, 0
        %vm705 = vmand %vm673, %vm641
        %vm706 = vmand %vm674, %vm642
        %vm707 = vmand %vm675, %vm643
        %vm708 = vmand %vm676, %vm644
        %vm709 = vmand %vm677, %vm645
        %vm710 = vmand %vm678, %vm646
        %vm711 = vmand %vm679, %vm647
        %vm712 = vmand %vm680, %vm648
        %vm713 = vmand %vm681, %vm649
        %vm714 = vmand %vm682, %vm650
        %vm715 = vmand %vm683, %vm651
        %vm716 = vmand %vm684, %vm652
        %vm717 = vmand %vm685, %vm653
        %vm718 = vmand %vm686, %vm654
        %vm719 = vmand %vm687, %vm655
        %vm720 = vmand %vm688, %vm656
        %vm721 = vmand %vm689, %vm657
        %vm722 = vmand %vm690, %vm658
        %vm723 = vmand %vm691, %vm659
        %vm724 = vmand %vm692, %vm660
        %vm725 = vmand %vm693, %vm661
        %vm726 = vmand %vm694, %vm662
        %vm727 = vmand %vm695, %vm663
        %vm728 = vmand %vm696, %vm664
        %vm729 = vmand %vm697, %vm665
        %vm730 = vmand %vm698, %vm666
        %vm731 = vmand %vm699, %vm667
        %vm732 = vmand %vm700, %vm668
        %vm733 = vmand %vm701, %vm669
        %vm734 = vmand %vm702, %vm670
        %vm735 = vmand %vm703, %vm671
        %vm736 = vmand %vm704, %vm672
        %v737 = vadd.s32 %v423, 16
        %v738 = vadd.s32 %v430, 16
        %v739 = vadd.s32 %v437, 16
        %v740 = vadd.s32 %v444, 16
        %v741 = vadd.s32 %v451, 16
        %v742 = vadd.s32 %v458, 16
        %v743 = vadd.s32 %v465, 16
        %v744 = vadd.s32 %v472, 16
        %v745 = vadd.s32 %v479, 16
        %v746 = vadd.s32 %v486, 16
        %v747 = vadd.s32 %v493, 16
        %v748 = vadd.s32 %v500, 16
        %v749 = vadd.s32 %v507, 16
        %v750 = vadd.s32 %v514, 16
        %v751 = vadd.s32 %v521, 16
        %v752 = vadd.s32 %v528, 16
        %v753 = vadd.s32 %v535, 16
        %v754 = vadd.s32 %v542, 16
        %v755 = vadd.s32 %v549, 16
        %v756 = vadd.s32 %v556, 16
        %v757 = vadd.s32 %v563, 16
        %v758 = vadd.s32 %v570, 16
        %v759 = vadd.s32 %v577, 16
        %v760 = vadd.s32 %v584, 16
        %v761 = vadd.s32 %v591, 16
        %v762 = vadd.s32 %v598, 16
        %v763 = vadd.s32 %v605, 16
        %v764 = vadd.s32 %v612, 16
        %v765 = vadd.s32 %v619, 16
        %v766 = vadd.s32 %v626, 16
        %v767 = vadd.s32 %v633, 16
        %v768 = vadd.s32 %v640, 16
        %v769 = vsel %vm705, %v737, %v423
        %v770 = vsel %vm706, %v738, %v430
        %v771 = vsel %vm707, %v739, %v437
        %v772 = vsel %vm708, %v740, %v444
        %v773 = vsel %vm709, %v741, %v451
        %v774 = vsel %vm710, %v742, %v458
        %v775 = vsel %vm711, %v743, %v465
        %v776 = vsel %vm712, %v744, %v472
        %v777 = vsel %vm713, %v745, %v479
        %v778 = vsel %vm714, %v746, %v486
        %v779 = vsel %vm715, %v747, %v493
        %v780 = vsel %vm716, %v748, %v500
        %v781 = vsel %vm717, %v749, %v507
        %v782 = vsel %vm718, %v750, %v514
        %v783 = vsel %vm719, %v751, %v521
        %v784 = vsel %vm720, %v752, %v528
        %v785 = vsel %vm721, %v753, %v535
        %v786 = vsel %vm722, %v754, %v542
        %v787 = vsel %vm723, %v755, %v549
        %v788 = vsel %vm724, %v756, %v556
        %v789 = vsel %vm725, %v757, %v563
        %v790 = vsel %vm726, %v758, %v570
        %v791 = vsel %vm727, %v759, %v577
        %v792 = vsel %vm728, %v760, %v584
        %v793 = vsel %vm729, %v761, %v591
        %v794 = vsel %vm730, %v762, %v598
        %v795 = vsel %vm731, %v763, %v605
        %v796 = vsel %vm732, %v764, %v612
        %v797 = vsel %vm733, %v765, %v619
        %v798 = vsel %vm734, %v766, %v626
        %v799 = vsel %vm735, %v767, %v633
        %v800 = vsel %vm736, %v768, %v640
        %v801 = vpack.c.bf16 %v350, %v349
        %v802 = vpack.c.bf16 %v352, %v351
        %v803 = vpack.c.bf16 %v354, %v353
        %v804 = vpack.c.bf16 %v356, %v355
        %v805 = vpack.c.bf16 %v358, %v357
        %v806 = vpack.c.bf16 %v360, %v359
        %v807 = vpack.c.bf16 %v362, %v361
        %v808 = vpack.c.bf16 %v364, %v363
        %v809 = vpack.c.bf16 %v366, %v365
        %v810 = vpack.c.bf16 %v368, %v367
        %v811 = vpack.c.bf16 %v370, %v369
        %v812 = vpack.c.bf16 %v372, %v371
        %v813 = vpack.c.bf16 %v374, %v373
        %v814 = vpack.c.bf16 %v376, %v375
        %v815 = vpack.c.bf16 %v378, %v377
        %v816 = vpack.c.bf16 %v380, %v379
        %833 = vrot.lane.b32.xlu0 %v801, 4
        %v834 = vpop.permute.xlu0 %833
        %835 = vrot.lane.b32.xlu0 %v802, 4
        %v836 = vpop.permute.xlu0 %835
        %837 = vrot.lane.b32.xlu0 %v803, 4
        %v838 = vpop.permute.xlu0 %837
        %839 = vrot.lane.b32.xlu0 %v804, 4
        %v840 = vpop.permute.xlu0 %839
        %841 = vrot.lane.b32.xlu0 %v805, 4
        %v842 = vpop.permute.xlu0 %841
        %843 = vrot.lane.b32.xlu0 %v806, 4
        %v844 = vpop.permute.xlu0 %843
        %845 = vrot.lane.b32.xlu0 %v807, 4
        %v846 = vpop.permute.xlu0 %845
        %847 = vrot.lane.b32.xlu0 %v808, 4
        %v848 = vpop.permute.xlu0 %847
        %849 = vrot.lane.b32.xlu0 %v809, 4
        %v850 = vpop.permute.xlu0 %849
        %851 = vrot.lane.b32.xlu0 %v810, 4
        %v852 = vpop.permute.xlu0 %851
        %853 = vrot.lane.b32.xlu0 %v811, 4
        %v854 = vpop.permute.xlu0 %853
        %855 = vrot.lane.b32.xlu0 %v812, 4
        %v856 = vpop.permute.xlu0 %855
        %857 = vrot.lane.b32.xlu0 %v813, 4
        %v858 = vpop.permute.xlu0 %857
        %859 = vrot.lane.b32.xlu0 %v814, 4
        %v860 = vpop.permute.xlu0 %859
        %861 = vrot.lane.b32.xlu0 %v815, 4
        %v862 = vpop.permute.xlu0 %861
        %863 = vrot.lane.b32.xlu0 %v816, 4
        %v864 = vpop.permute.xlu0 %863
        %vm881 = vcmask 64544
        %882 = vst.msk [vmem:[#allocation2 + $0x8] sm:$0xff] %vm881, %v834
        %883 = vst.msk [vmem:[#allocation2 + $0x10] sm:$0xff] %vm881, %v836
        %884 = vst.msk [vmem:[#allocation2 + $0x18] sm:$0xff] %vm881, %v838
        %885 = vst.msk [vmem:[#allocation2 + $0x20] sm:$0xff] %vm881, %v840
        %886 = vst.msk [vmem:[#allocation2 + $0x28] sm:$0xff] %vm881, %v842
        %887 = vst.msk [vmem:[#allocation2 + $0x30] sm:$0xff] %vm881, %v844
        %888 = vst.msk [vmem:[#allocation2 + $0x38] sm:$0xff] %vm881, %v846
        %889 = vst.msk [vmem:[#allocation2 + $0x40] sm:$0xff] %vm881, %v848
        %890 = vst.msk [vmem:[#allocation2 + $0x48] sm:$0xff] %vm881, %v850
        %891 = vst.msk [vmem:[#allocation2 + $0x50] sm:$0xff] %vm881, %v852
        %892 = vst.msk [vmem:[#allocation2 + $0x58] sm:$0xff] %vm881, %v854
        %893 = vst.msk [vmem:[#allocation2 + $0x60] sm:$0xff] %vm881, %v856
        %894 = vst.msk [vmem:[#allocation2 + $0x68] sm:$0xff] %vm881, %v858
        %895 = vst.msk [vmem:[#allocation2 + $0x70] sm:$0xff] %vm881, %v860
        %896 = vst.msk [vmem:[#allocation2 + $0x78] sm:$0xff] %vm881, %v862
        %897 = vst.msk [vmem:[#allocation2 + $0x80] sm:$0xff] %vm881, %v864
        %vm898 = vcmp.eq.s32.totalorder %v769, 0
        %vm899 = vcmp.eq.s32.totalorder %v770, 0
        %vm900 = vcmp.eq.s32.totalorder %v771, 0
        %vm901 = vcmp.eq.s32.totalorder %v772, 0
        %vm902 = vcmp.eq.s32.totalorder %v773, 0
        %vm903 = vcmp.eq.s32.totalorder %v774, 0
        %vm904 = vcmp.eq.s32.totalorder %v775, 0
        %vm905 = vcmp.eq.s32.totalorder %v776, 0
        %vm906 = vcmp.eq.s32.totalorder %v777, 0
        %vm907 = vcmp.eq.s32.totalorder %v778, 0
        %vm908 = vcmp.eq.s32.totalorder %v779, 0
        %vm909 = vcmp.eq.s32.totalorder %v780, 0
        %vm910 = vcmp.eq.s32.totalorder %v781, 0
        %vm911 = vcmp.eq.s32.totalorder %v782, 0
        %vm912 = vcmp.eq.s32.totalorder %v783, 0
        %vm913 = vcmp.eq.s32.totalorder %v784, 0
        %vm914 = vcmp.eq.s32.totalorder %v785, 0
        %vm915 = vcmp.eq.s32.totalorder %v786, 0
        %vm916 = vcmp.eq.s32.totalorder %v787, 0
        %vm917 = vcmp.eq.s32.totalorder %v788, 0
        %vm918 = vcmp.eq.s32.totalorder %v789, 0
        %vm919 = vcmp.eq.s32.totalorder %v790, 0
        %vm920 = vcmp.eq.s32.totalorder %v791, 0
        %vm921 = vcmp.eq.s32.totalorder %v792, 0
        %vm922 = vcmp.eq.s32.totalorder %v793, 0
        %vm923 = vcmp.eq.s32.totalorder %v794, 0
        %vm924 = vcmp.eq.s32.totalorder %v795, 0
        %vm925 = vcmp.eq.s32.totalorder %v796, 0
        %vm926 = vcmp.eq.s32.totalorder %v797, 0
        %vm927 = vcmp.eq.s32.totalorder %v798, 0
        %vm928 = vcmp.eq.s32.totalorder %v799, 0
        %vm929 = vcmp.eq.s32.totalorder %v800, 0
        %v930 = vrot.slane %v349, 7
        %v931 = vrot.slane %v350, 7
        %v932 = vrot.slane %v351, 7
        %v933 = vrot.slane %v352, 7
        %v934 = vrot.slane %v353, 7
        %v935 = vrot.slane %v354, 7
        %v936 = vrot.slane %v355, 7
        %v937 = vrot.slane %v356, 7
        %v938 = vrot.slane %v357, 7
        %v939 = vrot.slane %v358, 7
        %v940 = vrot.slane %v359, 7
        %v941 = vrot.slane %v360, 7
        %v942 = vrot.slane %v361, 7
        %v943 = vrot.slane %v362, 7
        %v944 = vrot.slane %v363, 7
        %v945 = vrot.slane %v364, 7
        %v946 = vrot.slane %v365, 7
        %v947 = vrot.slane %v366, 7
        %v948 = vrot.slane %v367, 7
        %v949 = vrot.slane %v368, 7
        %v950 = vrot.slane %v369, 7
        %v951 = vrot.slane %v370, 7
        %v952 = vrot.slane %v371, 7
        %v953 = vrot.slane %v372, 7
        %v954 = vrot.slane %v373, 7
        %v955 = vrot.slane %v374, 7
        %v956 = vrot.slane %v375, 7
        %v957 = vrot.slane %v376, 7
        %v958 = vrot.slane %v377, 7
        %v959 = vrot.slane %v378, 7
        %v960 = vrot.slane %v379, 7
        %v961 = vrot.slane %v380, 7
        %vm962 = vcmp.lt.s32.totalorder %v385, 1
        %v963 = vsel %vm962, %v960, %v961
        %v964 = vsel %vm962, %v959, %v960
        %v965 = vsel %vm962, %v958, %v959
        %v966 = vsel %vm962, %v957, %v958
        %v967 = vsel %vm962, %v956, %v957
        %v968 = vsel %vm962, %v955, %v956
        %v969 = vsel %vm962, %v954, %v955
        %v970 = vsel %vm962, %v953, %v954
        %v971 = vsel %vm962, %v952, %v953
        %v972 = vsel %vm962, %v951, %v952
        %v973 = vsel %vm962, %v950, %v951
        %v974 = vsel %vm962, %v949, %v950
        %v975 = vsel %vm962, %v948, %v949
        %v976 = vsel %vm962, %v947, %v948
        %v977 = vsel %vm962, %v946, %v947
        %v978 = vsel %vm962, %v945, %v946
        %v979 = vsel %vm962, %v944, %v945
        %v980 = vsel %vm962, %v943, %v944
        %v981 = vsel %vm962, %v942, %v943
        %v982 = vsel %vm962, %v941, %v942
        %v983 = vsel %vm962, %v940, %v941
        %v984 = vsel %vm962, %v939, %v940
        %v985 = vsel %vm962, %v938, %v939
        %v986 = vsel %vm962, %v937, %v938
        %v987 = vsel %vm962, %v936, %v937
        %v988 = vsel %vm962, %v935, %v936
        %v989 = vsel %vm962, %v934, %v935
        %v990 = vsel %vm962, %v933, %v934
        %v991 = vsel %vm962, %v932, %v933
        %v992 = vsel %vm962, %v931, %v932
        %v993 = vsel %vm962, %v930, %v931
        %v994 = vsel %vm962, %v961, %v930
        %v995 = vsel %vm898, 1, 0
        %v996 = vsel %vm899, 1, 0
        %v997 = vsel %vm900, 1, 0
        %v998 = vsel %vm901, 1, 0
        %v999 = vsel %vm902, 1, 0
        %v1000 = vsel %vm903, 1, 0
        %v1001 = vsel %vm904, 1, 0
        %v1002 = vsel %vm905, 1, 0
        %v1003 = vsel %vm906, 1, 0
        %v1004 = vsel %vm907, 1, 0
        %v1005 = vsel %vm908, 1, 0
        %v1006 = vsel %vm909, 1, 0
        %v1007 = vsel %vm910, 1, 0
        %v1008 = vsel %vm911, 1, 0
        %v1009 = vsel %vm912, 1, 0
        %v1010 = vsel %vm913, 1, 0
        %v1011 = vsel %vm914, 1, 0
        %v1012 = vsel %vm915, 1, 0
        %v1013 = vsel %vm916, 1, 0
        %v1014 = vsel %vm917, 1, 0
        %v1015 = vsel %vm918, 1, 0
        %v1016 = vsel %vm919, 1, 0
        %v1017 = vsel %vm920, 1, 0
        %v1018 = vsel %vm921, 1, 0
        %v1019 = vsel %vm922, 1, 0
        %v1020 = vsel %vm923, 1, 0
        %v1021 = vsel %vm924, 1, 0
        %v1022 = vsel %vm925, 1, 0
        %v1023 = vsel %vm926, 1, 0
        %v1024 = vsel %vm927, 1, 0
        %v1025 = vsel %vm928, 1, 0
        %v1026 = vsel %vm929, 1, 0
        %vm1027 = vcmp.eq.s32.totalorder %v995, 1
        %vm1028 = vcmp.eq.s32.totalorder %v996, 1
        %vm1029 = vcmp.eq.s32.totalorder %v997, 1
        %vm1030 = vcmp.eq.s32.totalorder %v998, 1
        %vm1031 = vcmp.eq.s32.totalorder %v999, 1
        %vm1032 = vcmp.eq.s32.totalorder %v1000, 1
        %vm1033 = vcmp.eq.s32.totalorder %v1001, 1
        %vm1034 = vcmp.eq.s32.totalorder %v1002, 1
        %vm1035 = vcmp.eq.s32.totalorder %v1003, 1
        %vm1036 = vcmp.eq.s32.totalorder %v1004, 1
        %vm1037 = vcmp.eq.s32.totalorder %v1005, 1
        %vm1038 = vcmp.eq.s32.totalorder %v1006, 1
        %vm1039 = vcmp.eq.s32.totalorder %v1007, 1
        %vm1040 = vcmp.eq.s32.totalorder %v1008, 1
        %vm1041 = vcmp.eq.s32.totalorder %v1009, 1
        %vm1042 = vcmp.eq.s32.totalorder %v1010, 1
        %vm1043 = vcmp.eq.s32.totalorder %v1011, 1
        %vm1044 = vcmp.eq.s32.totalorder %v1012, 1
        %vm1045 = vcmp.eq.s32.totalorder %v1013, 1
        %vm1046 = vcmp.eq.s32.totalorder %v1014, 1
        %vm1047 = vcmp.eq.s32.totalorder %v1015, 1
        %vm1048 = vcmp.eq.s32.totalorder %v1016, 1
        %vm1049 = vcmp.eq.s32.totalorder %v1017, 1
        %vm1050 = vcmp.eq.s32.totalorder %v1018, 1
        %vm1051 = vcmp.eq.s32.totalorder %v1019, 1
        %vm1052 = vcmp.eq.s32.totalorder %v1020, 1
        %vm1053 = vcmp.eq.s32.totalorder %v1021, 1
        %vm1054 = vcmp.eq.s32.totalorder %v1022, 1
        %vm1055 = vcmp.eq.s32.totalorder %v1023, 1
        %vm1056 = vcmp.eq.s32.totalorder %v1024, 1
        %vm1057 = vcmp.eq.s32.totalorder %v1025, 1
        %vm1058 = vcmp.eq.s32.totalorder %v1026, 1
        %v1059 = vsel %vm1027, 0.0, %v994
        %v1060 = vsel %vm1028, 0.0, %v993
        %v1061 = vsel %vm1029, 0.0, %v992
        %v1062 = vsel %vm1030, 0.0, %v991
        %v1063 = vsel %vm1031, 0.0, %v990
        %v1064 = vsel %vm1032, 0.0, %v989
        %v1065 = vsel %vm1033, 0.0, %v988
        %v1066 = vsel %vm1034, 0.0, %v987
        %v1067 = vsel %vm1035, 0.0, %v986
        %v1068 = vsel %vm1036, 0.0, %v985
        %v1069 = vsel %vm1037, 0.0, %v984
        %v1070 = vsel %vm1038, 0.0, %v983
        %v1071 = vsel %vm1039, 0.0, %v982
        %v1072 = vsel %vm1040, 0.0, %v981
        %v1073 = vsel %vm1041, 0.0, %v980
        %v1074 = vsel %vm1042, 0.0, %v979
        %v1075 = vsel %vm1043, 0.0, %v978
        %v1076 = vsel %vm1044, 0.0, %v977
        %v1077 = vsel %vm1045, 0.0, %v976
        %v1078 = vsel %vm1046, 0.0, %v975
        %v1079 = vsel %vm1047, 0.0, %v974
        %v1080 = vsel %vm1048, 0.0, %v973
        %v1081 = vsel %vm1049, 0.0, %v972
        %v1082 = vsel %vm1050, 0.0, %v971
        %v1083 = vsel %vm1051, 0.0, %v970
        %v1084 = vsel %vm1052, 0.0, %v969
        %v1085 = vsel %vm1053, 0.0, %v968
        %v1086 = vsel %vm1054, 0.0, %v967
        %v1087 = vsel %vm1055, 0.0, %v966
        %v1088 = vsel %vm1056, 0.0, %v965
        %v1089 = vsel %vm1057, 0.0, %v964
        %v1090 = vsel %vm1058, 0.0, %v963
        %v1091 = vpack.c.bf16 %v1060, %v1059
        %v1092 = vpack.c.bf16 %v1062, %v1061
        %v1093 = vpack.c.bf16 %v1064, %v1063
        %v1094 = vpack.c.bf16 %v1066, %v1065
        %v1095 = vpack.c.bf16 %v1068, %v1067
        %v1096 = vpack.c.bf16 %v1070, %v1069
        %v1097 = vpack.c.bf16 %v1072, %v1071
        %v1098 = vpack.c.bf16 %v1074, %v1073
        %v1099 = vpack.c.bf16 %v1076, %v1075
        %v1100 = vpack.c.bf16 %v1078, %v1077
        %v1101 = vpack.c.bf16 %v1080, %v1079
        %v1102 = vpack.c.bf16 %v1082, %v1081
        %v1103 = vpack.c.bf16 %v1084, %v1083
        %v1104 = vpack.c.bf16 %v1086, %v1085
        %v1105 = vpack.c.bf16 %v1088, %v1087
        %v1106 = vpack.c.bf16 %v1090, %v1089
        %vm1107 = vcmask 31744
        %1108 = vst.msk [vmem:[#allocation2 + $0x8] sm:$0xff] %vm1107, %v1091
        %1109 = vst.msk [vmem:[#allocation2 + $0x10] sm:$0xff] %vm1107, %v1092
        %1110 = vst.msk [vmem:[#allocation2 + $0x18] sm:$0xff] %vm1107, %v1093
        %1111 = vst.msk [vmem:[#allocation2 + $0x20] sm:$0xff] %vm1107, %v1094
        %1112 = vst.msk [vmem:[#allocation2 + $0x28] sm:$0xff] %vm1107, %v1095
        %1113 = vst.msk [vmem:[#allocation2 + $0x30] sm:$0xff] %vm1107, %v1096
        %1114 = vst.msk [vmem:[#allocation2 + $0x38] sm:$0xff] %vm1107, %v1097
        %1115 = vst.msk [vmem:[#allocation2 + $0x40] sm:$0xff] %vm1107, %v1098
        %1116 = vst.msk [vmem:[#allocation2 + $0x48] sm:$0xff] %vm1107, %v1099
        %1117 = vst.msk [vmem:[#allocation2 + $0x50] sm:$0xff] %vm1107, %v1100
        %1118 = vst.msk [vmem:[#allocation2 + $0x58] sm:$0xff] %vm1107, %v1101
        %1119 = vst.msk [vmem:[#allocation2 + $0x60] sm:$0xff] %vm1107, %v1102
        %1120 = vst.msk [vmem:[#allocation2 + $0x68] sm:$0xff] %vm1107, %v1103
        %1121 = vst.msk [vmem:[#allocation2 + $0x70] sm:$0xff] %vm1107, %v1104
        %1122 = vst.msk [vmem:[#allocation2 + $0x78] sm:$0xff] %vm1107, %v1105
        %1123 = vst.msk [vmem:[#allocation2 + $0x80] sm:$0xff] %vm1107, %v1106
        %vm1124 = vcmp.eq.s32.totalorder %v769, 15
        %vm1125 = vcmp.eq.s32.totalorder %v770, 15
        %vm1126 = vcmp.eq.s32.totalorder %v771, 15
        %vm1127 = vcmp.eq.s32.totalorder %v772, 15
        %vm1128 = vcmp.eq.s32.totalorder %v773, 15
        %vm1129 = vcmp.eq.s32.totalorder %v774, 15
        %vm1130 = vcmp.eq.s32.totalorder %v775, 15
        %vm1131 = vcmp.eq.s32.totalorder %v776, 15
        %vm1132 = vcmp.eq.s32.totalorder %v777, 15
        %vm1133 = vcmp.eq.s32.totalorder %v778, 15
        %vm1134 = vcmp.eq.s32.totalorder %v779, 15
        %vm1135 = vcmp.eq.s32.totalorder %v780, 15
        %vm1136 = vcmp.eq.s32.totalorder %v781, 15
        %vm1137 = vcmp.eq.s32.totalorder %v782, 15
        %vm1138 = vcmp.eq.s32.totalorder %v783, 15
        %vm1139 = vcmp.eq.s32.totalorder %v784, 15
        %vm1140 = vcmp.eq.s32.totalorder %v785, 15
        %vm1141 = vcmp.eq.s32.totalorder %v786, 15
        %vm1142 = vcmp.eq.s32.totalorder %v787, 15
        %vm1143 = vcmp.eq.s32.totalorder %v788, 15
        %vm1144 = vcmp.eq.s32.totalorder %v789, 15
        %vm1145 = vcmp.eq.s32.totalorder %v790, 15
        %vm1146 = vcmp.eq.s32.totalorder %v791, 15
        %vm1147 = vcmp.eq.s32.totalorder %v792, 15
        %vm1148 = vcmp.eq.s32.totalorder %v793, 15
        %vm1149 = vcmp.eq.s32.totalorder %v794, 15
        %vm1150 = vcmp.eq.s32.totalorder %v795, 15
        %vm1151 = vcmp.eq.s32.totalorder %v796, 15
        %vm1152 = vcmp.eq.s32.totalorder %v797, 15
        %vm1153 = vcmp.eq.s32.totalorder %v798, 15
        %vm1154 = vcmp.eq.s32.totalorder %v799, 15
        %vm1155 = vcmp.eq.s32.totalorder %v800, 15
        %v1156 = vrot.slane %v349, 1
        %v1157 = vrot.slane %v350, 1
        %v1158 = vrot.slane %v351, 1
        %v1159 = vrot.slane %v352, 1
        %v1160 = vrot.slane %v353, 1
        %v1161 = vrot.slane %v354, 1
        %v1162 = vrot.slane %v355, 1
        %v1163 = vrot.slane %v356, 1
        %v1164 = vrot.slane %v357, 1
        %v1165 = vrot.slane %v358, 1
        %v1166 = vrot.slane %v359, 1
        %v1167 = vrot.slane %v360, 1
        %v1168 = vrot.slane %v361, 1
        %v1169 = vrot.slane %v362, 1
        %v1170 = vrot.slane %v363, 1
        %v1171 = vrot.slane %v364, 1
        %v1172 = vrot.slane %v365, 1
        %v1173 = vrot.slane %v366, 1
        %v1174 = vrot.slane %v367, 1
        %v1175 = vrot.slane %v368, 1
        %v1176 = vrot.slane %v369, 1
        %v1177 = vrot.slane %v370, 1
        %v1178 = vrot.slane %v371, 1
        %v1179 = vrot.slane %v372, 1
        %v1180 = vrot.slane %v373, 1
        %v1181 = vrot.slane %v374, 1
        %v1182 = vrot.slane %v375, 1
        %v1183 = vrot.slane %v376, 1
        %v1184 = vrot.slane %v377, 1
        %v1185 = vrot.slane %v378, 1
        %v1186 = vrot.slane %v379, 1
        %v1187 = vrot.slane %v380, 1
        %vm1188 = vcmp.lt.s32.totalorder %v385, 7
        %v1189 = vsel %vm1188, %v1186, %v1187
        %v1190 = vsel %vm1188, %v1185, %v1186
        %v1191 = vsel %vm1188, %v1184, %v1185
        %v1192 = vsel %vm1188, %v1183, %v1184
        %v1193 = vsel %vm1188, %v1182, %v1183
        %v1194 = vsel %vm1188, %v1181, %v1182
        %v1195 = vsel %vm1188, %v1180, %v1181
        %v1196 = vsel %vm1188, %v1179, %v1180
        %v1197 = vsel %vm1188, %v1178, %v1179
        %v1198 = vsel %vm1188, %v1177, %v1178
        %v1199 = vsel %vm1188, %v1176, %v1177
        %v1200 = vsel %vm1188, %v1175, %v1176
        %v1201 = vsel %vm1188, %v1174, %v1175
        %v1202 = vsel %vm1188, %v1173, %v1174
        %v1203 = vsel %vm1188, %v1172, %v1173
        %v1204 = vsel %vm1188, %v1171, %v1172
        %v1205 = vsel %vm1188, %v1170, %v1171
        %v1206 = vsel %vm1188, %v1169, %v1170
        %v1207 = vsel %vm1188, %v1168, %v1169
        %v1208 = vsel %vm1188, %v1167, %v1168
        %v1209 = vsel %vm1188, %v1166, %v1167
        %v1210 = vsel %vm1188, %v1165, %v1166
        %v1211 = vsel %vm1188, %v1164, %v1165
        %v1212 = vsel %vm1188, %v1163, %v1164
        %v1213 = vsel %vm1188, %v1162, %v1163
        %v1214 = vsel %vm1188, %v1161, %v1162
        %v1215 = vsel %vm1188, %v1160, %v1161
        %v1216 = vsel %vm1188, %v1159, %v1160
        %v1217 = vsel %vm1188, %v1158, %v1159
        %v1218 = vsel %vm1188, %v1157, %v1158
        %v1219 = vsel %vm1188, %v1156, %v1157
        %v1220 = vsel %vm1188, %v1187, %v1156
        %v1221 = vsel %vm1124, 1, 0
        %v1222 = vsel %vm1125, 1, 0
        %v1223 = vsel %vm1126, 1, 0
        %v1224 = vsel %vm1127, 1, 0
        %v1225 = vsel %vm1128, 1, 0
        %v1226 = vsel %vm1129, 1, 0
        %v1227 = vsel %vm1130, 1, 0
        %v1228 = vsel %vm1131, 1, 0
        %v1229 = vsel %vm1132, 1, 0
        %v1230 = vsel %vm1133, 1, 0
        %v1231 = vsel %vm1134, 1, 0
        %v1232 = vsel %vm1135, 1, 0
        %v1233 = vsel %vm1136, 1, 0
        %v1234 = vsel %vm1137, 1, 0
        %v1235 = vsel %vm1138, 1, 0
        %v1236 = vsel %vm1139, 1, 0
        %v1237 = vsel %vm1140, 1, 0
        %v1238 = vsel %vm1141, 1, 0
        %v1239 = vsel %vm1142, 1, 0
        %v1240 = vsel %vm1143, 1, 0
        %v1241 = vsel %vm1144, 1, 0
        %v1242 = vsel %vm1145, 1, 0
        %v1243 = vsel %vm1146, 1, 0
        %v1244 = vsel %vm1147, 1, 0
        %v1245 = vsel %vm1148, 1, 0
        %v1246 = vsel %vm1149, 1, 0
        %v1247 = vsel %vm1150, 1, 0
        %v1248 = vsel %vm1151, 1, 0
        %v1249 = vsel %vm1152, 1, 0
        %v1250 = vsel %vm1153, 1, 0
        %v1251 = vsel %vm1154, 1, 0
        %v1252 = vsel %vm1155, 1, 0
        %vm1253 = vcmp.eq.s32.totalorder %v1221, 1
        %vm1254 = vcmp.eq.s32.totalorder %v1222, 1
        %vm1255 = vcmp.eq.s32.totalorder %v1223, 1
        %vm1256 = vcmp.eq.s32.totalorder %v1224, 1
        %vm1257 = vcmp.eq.s32.totalorder %v1225, 1
        %vm1258 = vcmp.eq.s32.totalorder %v1226, 1
        %vm1259 = vcmp.eq.s32.totalorder %v1227, 1
        %vm1260 = vcmp.eq.s32.totalorder %v1228, 1
        %vm1261 = vcmp.eq.s32.totalorder %v1229, 1
        %vm1262 = vcmp.eq.s32.totalorder %v1230, 1
        %vm1263 = vcmp.eq.s32.totalorder %v1231, 1
        %vm1264 = vcmp.eq.s32.totalorder %v1232, 1
        %vm1265 = vcmp.eq.s32.totalorder %v1233, 1
        %vm1266 = vcmp.eq.s32.totalorder %v1234, 1
        %vm1267 = vcmp.eq.s32.totalorder %v1235, 1
        %vm1268 = vcmp.eq.s32.totalorder %v1236, 1
        %vm1269 = vcmp.eq.s32.totalorder %v1237, 1
        %vm1270 = vcmp.eq.s32.totalorder %v1238, 1
        %vm1271 = vcmp.eq.s32.totalorder %v1239, 1
        %vm1272 = vcmp.eq.s32.totalorder %v1240, 1
        %vm1273 = vcmp.eq.s32.totalorder %v1241, 1
        %vm1274 = vcmp.eq.s32.totalorder %v1242, 1
        %vm1275 = vcmp.eq.s32.totalorder %v1243, 1
        %vm1276 = vcmp.eq.s32.totalorder %v1244, 1
        %vm1277 = vcmp.eq.s32.totalorder %v1245, 1
        %vm1278 = vcmp.eq.s32.totalorder %v1246, 1
        %vm1279 = vcmp.eq.s32.totalorder %v1247, 1
        %vm1280 = vcmp.eq.s32.totalorder %v1248, 1
        %vm1281 = vcmp.eq.s32.totalorder %v1249, 1
        %vm1282 = vcmp.eq.s32.totalorder %v1250, 1
        %vm1283 = vcmp.eq.s32.totalorder %v1251, 1
        %vm1284 = vcmp.eq.s32.totalorder %v1252, 1
        %v1285 = vsel %vm1253, 0.0, %v1219
        %v1286 = vsel %vm1254, 0.0, %v1218
        %v1287 = vsel %vm1255, 0.0, %v1217
        %v1288 = vsel %vm1256, 0.0, %v1216
        %v1289 = vsel %vm1257, 0.0, %v1215
        %v1290 = vsel %vm1258, 0.0, %v1214
        %v1291 = vsel %vm1259, 0.0, %v1213
        %v1292 = vsel %vm1260, 0.0, %v1212
        %v1293 = vsel %vm1261, 0.0, %v1211
        %v1294 = vsel %vm1262, 0.0, %v1210
        %v1295 = vsel %vm1263, 0.0, %v1209
        %v1296 = vsel %vm1264, 0.0, %v1208
        %v1297 = vsel %vm1265, 0.0, %v1207
        %v1298 = vsel %vm1266, 0.0, %v1206
        %v1299 = vsel %vm1267, 0.0, %v1205
        %v1300 = vsel %vm1268, 0.0, %v1204
        %v1301 = vsel %vm1269, 0.0, %v1203
        %v1302 = vsel %vm1270, 0.0, %v1202
        %v1303 = vsel %vm1271, 0.0, %v1201
        %v1304 = vsel %vm1272, 0.0, %v1200
        %v1305 = vsel %vm1273, 0.0, %v1199
        %v1306 = vsel %vm1274, 0.0, %v1198
        %v1307 = vsel %vm1275, 0.0, %v1197
        %v1308 = vsel %vm1276, 0.0, %v1196
        %v1309 = vsel %vm1277, 0.0, %v1195
        %v1310 = vsel %vm1278, 0.0, %v1194
        %v1311 = vsel %vm1279, 0.0, %v1193
        %v1312 = vsel %vm1280, 0.0, %v1192
        %v1313 = vsel %vm1281, 0.0, %v1191
        %v1314 = vsel %vm1282, 0.0, %v1190
        %v1315 = vsel %vm1283, 0.0, %v1189
        %v1316 = vsel %vm1284, 0.0, %v1220
        %v1317 = vpack.c.bf16 %v1286, %v1285
        %v1318 = vpack.c.bf16 %v1288, %v1287
        %v1319 = vpack.c.bf16 %v1290, %v1289
        %v1320 = vpack.c.bf16 %v1292, %v1291
        %v1321 = vpack.c.bf16 %v1294, %v1293
        %v1322 = vpack.c.bf16 %v1296, %v1295
        %v1323 = vpack.c.bf16 %v1298, %v1297
        %v1324 = vpack.c.bf16 %v1300, %v1299
        %v1325 = vpack.c.bf16 %v1302, %v1301
        %v1326 = vpack.c.bf16 %v1304, %v1303
        %v1327 = vpack.c.bf16 %v1306, %v1305
        %v1328 = vpack.c.bf16 %v1308, %v1307
        %v1329 = vpack.c.bf16 %v1310, %v1309
        %v1330 = vpack.c.bf16 %v1312, %v1311
        %v1331 = vpack.c.bf16 %v1314, %v1313
        %v1332 = vpack.c.bf16 %v1316, %v1315
        %1349 = vrot.lane.b32.xlu0 %v1317, 8
        %v1350 = vpop.permute.xlu0 %1349
        %1351 = vrot.lane.b32.xlu0 %v1318, 8
        %v1352 = vpop.permute.xlu0 %1351
        %1353 = vrot.lane.b32.xlu0 %v1319, 8
        %v1354 = vpop.permute.xlu0 %1353
        %1355 = vrot.lane.b32.xlu0 %v1320, 8
        %v1356 = vpop.permute.xlu0 %1355
        %1357 = vrot.lane.b32.xlu0 %v1321, 8
        %v1358 = vpop.permute.xlu0 %1357
        %1359 = vrot.lane.b32.xlu0 %v1322, 8
        %v1360 = vpop.permute.xlu0 %1359
        %1361 = vrot.lane.b32.xlu0 %v1323, 8
        %v1362 = vpop.permute.xlu0 %1361
        %1363 = vrot.lane.b32.xlu0 %v1324, 8
        %v1364 = vpop.permute.xlu0 %1363
        %1365 = vrot.lane.b32.xlu0 %v1325, 8
        %v1366 = vpop.permute.xlu0 %1365
        %1367 = vrot.lane.b32.xlu0 %v1326, 8
        %v1368 = vpop.permute.xlu0 %1367
        %1369 = vrot.lane.b32.xlu0 %v1327, 8
        %v1370 = vpop.permute.xlu0 %1369
        %1371 = vrot.lane.b32.xlu0 %v1328, 8
        %v1372 = vpop.permute.xlu0 %1371
        %1373 = vrot.lane.b32.xlu0 %v1329, 8
        %v1374 = vpop.permute.xlu0 %1373
        %1375 = vrot.lane.b32.xlu0 %v1330, 8
        %v1376 = vpop.permute.xlu0 %1375
        %1377 = vrot.lane.b32.xlu0 %v1331, 8
        %v1378 = vpop.permute.xlu0 %1377
        %1379 = vrot.lane.b32.xlu0 %v1332, 8
        %v1380 = vpop.permute.xlu0 %1379
        %vm1397 = vcmask 97344
        %1398 = vst.msk [vmem:[#allocation2 + $0x8] sm:$0xff] %vm1397, %v1350
        %1399 = vst.msk [vmem:[#allocation2 + $0x10] sm:$0xff] %vm1397, %v1352
        %1400 = vst.msk [vmem:[#allocation2 + $0x18] sm:$0xff] %vm1397, %v1354
        %1401 = vst.msk [vmem:[#allocation2 + $0x20] sm:$0xff] %vm1397, %v1356
        %1402 = vst.msk [vmem:[#allocation2 + $0x28] sm:$0xff] %vm1397, %v1358
        %1403 = vst.msk [vmem:[#allocation2 + $0x30] sm:$0xff] %vm1397, %v1360
        %1404 = vst.msk [vmem:[#allocation2 + $0x38] sm:$0xff] %vm1397, %v1362
        %1405 = vst.msk [vmem:[#allocation2 + $0x40] sm:$0xff] %vm1397, %v1364
        %1406 = vst.msk [vmem:[#allocation2 + $0x48] sm:$0xff] %vm1397, %v1366
        %1407 = vst.msk [vmem:[#allocation2 + $0x50] sm:$0xff] %vm1397, %v1368
        %1408 = vst.msk [vmem:[#allocation2 + $0x58] sm:$0xff] %vm1397, %v1370
        %1409 = vst.msk [vmem:[#allocation2 + $0x60] sm:$0xff] %vm1397, %v1372
        %1410 = vst.msk [vmem:[#allocation2 + $0x68] sm:$0xff] %vm1397, %v1374
        %1411 = vst.msk [vmem:[#allocation2 + $0x70] sm:$0xff] %vm1397, %v1376
        %1412 = vst.msk [vmem:[#allocation2 + $0x78] sm:$0xff] %vm1397, %v1378
        %1413 = vst.msk [vmem:[#allocation2 + $0x80] sm:$0xff] %vm1397, %v1380
        %v1414 = vld [vmem:[#allocation2] sm:$0xff]
        %v1415 = vld [vmem:[#allocation2 + $0x8] sm:$0xff]
        %v1416 = vld [vmem:[#allocation2 + $0x10] sm:$0xff]
        %v1417 = vld [vmem:[#allocation2 + $0x18] sm:$0xff]
        %v1418 = vld [vmem:[#allocation2 + $0x20] sm:$0xff]
        %v1419 = vld [vmem:[#allocation2 + $0x28] sm:$0xff]
        %v1420 = vld [vmem:[#allocation2 + $0x30] sm:$0xff]
        %v1421 = vld [vmem:[#allocation2 + $0x38] sm:$0xff]
        %v1422 = vld [vmem:[#allocation2 + $0x40] sm:$0xff]
        %v1423 = vld [vmem:[#allocation2 + $0x48] sm:$0xff]
        %v1424 = vld [vmem:[#allocation2 + $0x50] sm:$0xff]
        %v1425 = vld [vmem:[#allocation2 + $0x58] sm:$0xff]
        %v1426 = vld [vmem:[#allocation2 + $0x60] sm:$0xff]
        %v1427 = vld [vmem:[#allocation2 + $0x68] sm:$0xff]
        %v1428 = vld [vmem:[#allocation2 + $0x70] sm:$0xff]
        %v1429 = vld [vmem:[#allocation2 + $0x78] sm:$0xff]
        %v1430 = vld [vmem:[%s1] sm:$0xf]
        %v1431 = vld [vmem:[%s1 + $0x4] sm:$0x3]
        %v1434 = vunpack.c.l.b16 %v1430
        %v1435 = vunpack.c.l.b16 %v1431
        %v1436 = vpack.c.b16 %v1435, %v1434
        %v1438 = vsel %vm381, %v1414, 0
        %v1441 = vsel %vm381, %v1415, 0
        %v1444 = vsel %vm381, %v1416, 0
        %v1447 = vsel %vm381, %v1417, 0
        %v1450 = vsel %vm381, %v1418, 0
        %v1453 = vsel %vm381, %v1419, 0
        %v1456 = vsel %vm381, %v1420, 0
        %v1459 = vsel %vm381, %v1421, 0
        %v1462 = vsel %vm381, %v1422, 0
        %v1465 = vsel %vm381, %v1423, 0
        %v1468 = vsel %vm381, %v1424, 0
        %v1471 = vsel %vm381, %v1425, 0
        %v1474 = vsel %vm381, %v1426, 0
        %v1477 = vsel %vm381, %v1427, 0
        %v1480 = vsel %vm381, %v1428, 0
        %v1483 = vsel %vm381, %v1429, 0
        %vm1485 = vcmask 1045504
        %v1487 = vsel %vm1485, %v1436, 0
        %1489 = vmatprep.subr.bf16.mxu0 0
        %1490 = vmatpush1.bf16.msra.mxu0 %v1487
        %1491 = vmatprep.subr.bf16.mxu0 0
        %1492 = vmatpush1.bf16.msra.mxu0 0
        %1493 = vmatprep.subr.bf16.mxu0 0
        %1494 = vmatpush1.bf16.msra.mxu0 0
        %1495 = vmatprep.subr.bf16.mxu0 0
        %1496 = vmatpush1.bf16.msra.mxu0 0
        %1497 = vmatprep.subr.bf16.mxu0 0
        %1498 = vmatpush1.bf16.msra.mxu0 0
        %1499 = vmatprep.subr.bf16.mxu0 0
        %1500 = vmatpush1.bf16.msra.mxu0 0
        %1501 = vmatprep.subr.bf16.mxu0 0
        %1502 = vmatpush1.bf16.msra.mxu0 0
        %1503 = vmatprep.subr.bf16.mxu0 0
        %1504 = vmatpush1.bf16.msra.mxu0 0
        %1505 = vmatprep.subr.bf16.mxu0 0
        %1506 = vmatpush1.bf16.msra.mxu0 0
        %1507 = vmatprep.subr.bf16.mxu0 0
        %1508 = vmatpush1.bf16.msra.mxu0 0
        %1509 = vmatprep.subr.bf16.mxu0 0
        %1510 = vmatpush1.bf16.msra.mxu0 0
        %1511 = vmatprep.subr.bf16.mxu0 0
        %1512 = vmatpush1.bf16.msra.mxu0 0
        %1513 = vmatprep.subr.bf16.mxu0 0
        %1514 = vmatpush1.bf16.msra.mxu0 0
        %1515 = vmatprep.subr.bf16.mxu0 0
        %1516 = vmatpush1.bf16.msra.mxu0 0
        %1517 = vmatprep.subr.bf16.mxu0 0
        %1518 = vmatpush1.bf16.msra.mxu0 0
        %1519 = vmatprep.subr.bf16.mxu0 0
        %1520 = vmatpush1.bf16.msra.mxu0 0
        %1521 = vmatprep.mubr.bf16.mxu0 0
        %1522 = vmatmul.mubr.bf16.gmra.mrb[0].mxu0 %v1438
        %v1523 = vpop.f32.mrb[0].mxu0
        %v1524 = vadd.f32 0.0, %v1523
        %v1525 = vpop.f32.mrb[0].mxu0
        %v1526 = vpop.f32.mrb[0].mxu0
        %v1527 = vadd.f32 0.0, %v1526
        %v1528 = vpop.f32.mrb[0].mxu0
        %1529 = vmatprep.mubr.bf16.mxu0 0
        %1530 = vmatmul.mubr.bf16.gmra.mrb[0].mxu0 %v1441
        %v1531 = vpop.f32.mrb[0].mxu0
        %v1532 = vadd.f32 0.0, %v1531
        %v1533 = vpop.f32.mrb[0].mxu0
        %v1534 = vpop.f32.mrb[0].mxu0
        %v1535 = vadd.f32 0.0, %v1534
        %v1536 = vpop.f32.mrb[0].mxu0
        %1537 = vmatprep.mubr.bf16.mxu0 0
        %1538 = vmatmul.mubr.bf16.gmra.mrb[0].mxu0 %v1444
        %v1539 = vpop.f32.mrb[0].mxu0
        %v1540 = vadd.f32 0.0, %v1539
        %v1541 = vpop.f32.mrb[0].mxu0
        %v1542 = vpop.f32.mrb[0].mxu0
        %v1543 = vadd.f32 0.0, %v1542
        %v1544 = vpop.f32.mrb[0].mxu0
        %1545 = vmatprep.mubr.bf16.mxu0 0
        %1546 = vmatmul.mubr.bf16.gmra.mrb[0].mxu0 %v1447
        %v1547 = vpop.f32.mrb[0].mxu0
        %v1548 = vadd.f32 0.0, %v1547
        %v1549 = vpop.f32.mrb[0].mxu0
        %v1550 = vpop.f32.mrb[0].mxu0
        %v1551 = vadd.f32 0.0, %v1550
        %v1552 = vpop.f32.mrb[0].mxu0
        %1553 = vmatprep.mubr.bf16.mxu0 0
        %1554 = vmatmul.mubr.bf16.gmra.mrb[0].mxu0 %v1450
        %v1555 = vpop.f32.mrb[0].mxu0
        %v1556 = vadd.f32 0.0, %v1555
        %v1557 = vpop.f32.mrb[0].mxu0
        %v1558 = vpop.f32.mrb[0].mxu0
        %v1559 = vadd.f32 0.0, %v1558
        %v1560 = vpop.f32.mrb[0].mxu0
        %1561 = vmatprep.mubr.bf16.mxu0 0
        %1562 = vmatmul.mubr.bf16.gmra.mrb[0].mxu0 %v1453
        %v1563 = vpop.f32.mrb[0].mxu0
        %v1564 = vadd.f32 0.0, %v1563
        %v1565 = vpop.f32.mrb[0].mxu0
        %v1566 = vpop.f32.mrb[0].mxu0
        %v1567 = vadd.f32 0.0, %v1566
        %v1568 = vpop.f32.mrb[0].mxu0
        %1569 = vmatprep.mubr.bf16.mxu0 0
        %1570 = vmatmul.mubr.bf16.gmra.mrb[0].mxu0 %v1456
        %v1571 = vpop.f32.mrb[0].mxu0
        %v1572 = vadd.f32 0.0, %v1571
        %v1573 = vpop.f32.mrb[0].mxu0
        %v1574 = vpop.f32.mrb[0].mxu0
        %v1575 = vadd.f32 0.0, %v1574
        %v1576 = vpop.f32.mrb[0].mxu0
        %1577 = vmatprep.mubr.bf16.mxu0 0
        %1578 = vmatmul.mubr.bf16.gmra.mrb[0].mxu0 %v1459
        %v1579 = vpop.f32.mrb[0].mxu0
        %v1580 = vadd.f32 0.0, %v1579
        %v1581 = vpop.f32.mrb[0].mxu0
        %v1582 = vpop.f32.mrb[0].mxu0
        %v1583 = vadd.f32 0.0, %v1582
        %v1584 = vpop.f32.mrb[0].mxu0
        %1585 = vmatprep.mubr.bf16.mxu0 0
        %1586 = vmatmul.mubr.bf16.gmra.mrb[0].mxu0 %v1462
        %v1587 = vpop.f32.mrb[0].mxu0
        %v1588 = vadd.f32 0.0, %v1587
        %v1589 = vpop.f32.mrb[0].mxu0
        %v1590 = vpop.f32.mrb[0].mxu0
        %v1591 = vadd.f32 0.0, %v1590
        %v1592 = vpop.f32.mrb[0].mxu0
        %1593 = vmatprep.mubr.bf16.mxu0 0
        %1594 = vmatmul.mubr.bf16.gmra.mrb[0].mxu0 %v1465
        %v1595 = vpop.f32.mrb[0].mxu0
        %v1596 = vadd.f32 0.0, %v1595
        %v1597 = vpop.f32.mrb[0].mxu0
        %v1598 = vpop.f32.mrb[0].mxu0
        %v1599 = vadd.f32 0.0, %v1598
        %v1600 = vpop.f32.mrb[0].mxu0
        %1601 = vmatprep.mubr.bf16.mxu0 0
        %1602 = vmatmul.mubr.bf16.gmra.mrb[0].mxu0 %v1468
        %v1603 = vpop.f32.mrb[0].mxu0
        %v1604 = vadd.f32 0.0, %v1603
        %v1605 = vpop.f32.mrb[0].mxu0
        %v1606 = vpop.f32.mrb[0].mxu0
        %v1607 = vadd.f32 0.0, %v1606
        %v1608 = vpop.f32.mrb[0].mxu0
        %1609 = vmatprep.mubr.bf16.mxu0 0
        %1610 = vmatmul.mubr.bf16.gmra.mrb[0].mxu0 %v1471
        %v1611 = vpop.f32.mrb[0].mxu0
        %v1612 = vadd.f32 0.0, %v1611
        %v1613 = vpop.f32.mrb[0].mxu0
        %v1614 = vpop.f32.mrb[0].mxu0
        %v1615 = vadd.f32 0.0, %v1614
        %v1616 = vpop.f32.mrb[0].mxu0
        %1617 = vmatprep.mubr.bf16.mxu0 0
        %1618 = vmatmul.mubr.bf16.gmra.mrb[0].mxu0 %v1474
        %v1619 = vpop.f32.mrb[0].mxu0
        %v1620 = vadd.f32 0.0, %v1619
        %v1621 = vpop.f32.mrb[0].mxu0
        %v1622 = vpop.f32.mrb[0].mxu0
        %v1623 = vadd.f32 0.0, %v1622
        %v1624 = vpop.f32.mrb[0].mxu0
        %1625 = vmatprep.mubr.bf16.mxu0 0
        %1626 = vmatmul.mubr.bf16.gmra.mrb[0].mxu0 %v1477
        %v1627 = vpop.f32.mrb[0].mxu0
        %v1628 = vadd.f32 0.0, %v1627
        %v1629 = vpop.f32.mrb[0].mxu0
        %v1630 = vpop.f32.mrb[0].mxu0
        %v1631 = vadd.f32 0.0, %v1630
        %v1632 = vpop.f32.mrb[0].mxu0
        %1633 = vmatprep.mubr.bf16.mxu0 0
        %1634 = vmatmul.mubr.bf16.gmra.mrb[0].mxu0 %v1480
        %v1635 = vpop.f32.mrb[0].mxu0
        %v1636 = vadd.f32 0.0, %v1635
        %v1637 = vpop.f32.mrb[0].mxu0
        %v1638 = vpop.f32.mrb[0].mxu0
        %v1639 = vadd.f32 0.0, %v1638
        %v1640 = vpop.f32.mrb[0].mxu0
        %1641 = vmatprep.mubr.bf16.mxu0 0
        %1642 = vmatmul.mubr.bf16.gmra.mrb[0].mxu0 %v1483
        %v1643 = vpop.f32.mrb[0].mxu0
        %v1644 = vadd.f32 0.0, %v1643
        %v1645 = vpop.f32.mrb[0].mxu0
        %v1646 = vpop.f32.mrb[0].mxu0
        %v1647 = vadd.f32 0.0, %v1646
        %v1648 = vpop.f32.mrb[0].mxu0
        %1649 = vdwg.mxu0
        %vm1650 = vcmask 64512
        %1651 = vst.msk [vmem:[#allocation4] sm:$0xff] %vm1650, %v1524
        %1652 = vst.msk [vmem:[#allocation4 + $0x8] sm:$0xff] %vm1650, %v1527
        %1653 = vst.msk [vmem:[#allocation4 + $0x10] sm:$0xff] %vm1650, %v1532
        %1654 = vst.msk [vmem:[#allocation4 + $0x18] sm:$0xff] %vm1650, %v1535
        %1655 = vst.msk [vmem:[#allocation4 + $0x20] sm:$0xff] %vm1650, %v1540
        %1656 = vst.msk [vmem:[#allocation4 + $0x28] sm:$0xff] %vm1650, %v1543
        %1657 = vst.msk [vmem:[#allocation4 + $0x30] sm:$0xff] %vm1650, %v1548
        %1658 = vst.msk [vmem:[#allocation4 + $0x38] sm:$0xff] %vm1650, %v1551
        %1659 = vst.msk [vmem:[#allocation4 + $0x40] sm:$0xff] %vm1650, %v1556
        %1660 = vst.msk [vmem:[#allocation4 + $0x48] sm:$0xff] %vm1650, %v1559
        %1661 = vst.msk [vmem:[#allocation4 + $0x50] sm:$0xff] %vm1650, %v1564
        %1662 = vst.msk [vmem:[#allocation4 + $0x58] sm:$0xff] %vm1650, %v1567
        %1663 = vst.msk [vmem:[#allocation4 + $0x60] sm:$0xff] %vm1650, %v1572
        %1664 = vst.msk [vmem:[#allocation4 + $0x68] sm:$0xff] %vm1650, %v1575
        %1665 = vst.msk [vmem:[#allocation4 + $0x70] sm:$0xff] %vm1650, %v1580
        %1666 = vst.msk [vmem:[#allocation4 + $0x78] sm:$0xff] %vm1650, %v1583
        %1667 = vst.msk [vmem:[#allocation4 + $0x80] sm:$0xff] %vm1650, %v1588
        %1668 = vst.msk [vmem:[#allocation4 + $0x88] sm:$0xff] %vm1650, %v1591
        %1669 = vst.msk [vmem:[#allocation4 + $0x90] sm:$0xff] %vm1650, %v1596
        %1670 = vst.msk [vmem:[#allocation4 + $0x98] sm:$0xff] %vm1650, %v1599
        %1671 = vst.msk [vmem:[#allocation4 + $0xa0] sm:$0xff] %vm1650, %v1604
        %1672 = vst.msk [vmem:[#allocation4 + $0xa8] sm:$0xff] %vm1650, %v1607
        %1673 = vst.msk [vmem:[#allocation4 + $0xb0] sm:$0xff] %vm1650, %v1612
        %1674 = vst.msk [vmem:[#allocation4 + $0xb8] sm:$0xff] %vm1650, %v1615
        %1675 = vst.msk [vmem:[#allocation4 + $0xc0] sm:$0xff] %vm1650, %v1620
        %1676 = vst.msk [vmem:[#allocation4 + $0xc8] sm:$0xff] %vm1650, %v1623
        %1677 = vst.msk [vmem:[#allocation4 + $0xd0] sm:$0xff] %vm1650, %v1628
        %1678 = vst.msk [vmem:[#allocation4 + $0xd8] sm:$0xff] %vm1650, %v1631
        %1679 = vst.msk [vmem:[#allocation4 + $0xe0] sm:$0xff] %vm1650, %v1636
        %1680 = vst.msk [vmem:[#allocation4 + $0xe8] sm:$0xff] %vm1650, %v1639
        %1681 = vst.msk [vmem:[#allocation4 + $0xf0] sm:$0xff] %vm1650, %v1644
        %1682 = vst.msk [vmem:[#allocation4 + $0xf8] sm:$0xff] %vm1650, %v1647
        %v1683 = vld [vmem:[#allocation2 + $0x8] sm:$0xff]
        %v1684 = vld [vmem:[#allocation2 + $0x10] sm:$0xff]
        %v1685 = vld [vmem:[#allocation2 + $0x18] sm:$0xff]
        %v1686 = vld [vmem:[#allocation2 + $0x20] sm:$0xff]
        %v1687 = vld [vmem:[#allocation2 + $0x28] sm:$0xff]
        %v1688 = vld [vmem:[#allocation2 + $0x30] sm:$0xff]
        %v1689 = vld [vmem:[#allocation2 + $0x38] sm:$0xff]
        %v1690 = vld [vmem:[#allocation2 + $0x40] sm:$0xff]
        %v1691 = vld [vmem:[#allocation2 + $0x48] sm:$0xff]
        %v1692 = vld [vmem:[#allocation2 + $0x50] sm:$0xff]
        %v1693 = vld [vmem:[#allocation2 + $0x58] sm:$0xff]
        %v1694 = vld [vmem:[#allocation2 + $0x60] sm:$0xff]
        %v1695 = vld [vmem:[#allocation2 + $0x68] sm:$0xff]
        %v1696 = vld [vmem:[#allocation2 + $0x70] sm:$0xff]
        %v1697 = vld [vmem:[#allocation2 + $0x78] sm:$0xff]
        %v1698 = vld [vmem:[#allocation2 + $0x80] sm:$0xff]
        %s1699 = scalar_lea.vmem %s1, 8
        %v1700 = vld [vmem:[%s1699] sm:$0xf]
        %v1701 = vld [vmem:[%s1699 + $0x4] sm:$0x3]
        %v1704 = vunpack.c.l.b16 %v1700
        %v1705 = vunpack.c.l.b16 %v1701
        %v1706 = vpack.c.b16 %v1705, %v1704
        %v1708 = vsel %vm381, %v1683, 0
        %v1711 = vsel %vm381, %v1684, 0
        %v1714 = vsel %vm381, %v1685, 0
        %v1717 = vsel %vm381, %v1686, 0
        %v1720 = vsel %vm381, %v1687, 0
        %v1723 = vsel %vm381, %v1688, 0
        %v1726 = vsel %vm381, %v1689, 0
        %v1729 = vsel %vm381, %v1690, 0
        %v1732 = vsel %vm381, %v1691, 0
        %v1735 = vsel %vm381, %v1692, 0
        %v1738 = vsel %vm381, %v1693, 0
        %v1741 = vsel %vm381, %v1694, 0
        %v1744 = vsel %vm381, %v1695, 0
        %v1747 = vsel %vm381, %v1696, 0
        %v1750 = vsel %vm381, %v1697, 0
        %v1753 = vsel %vm381, %v1698, 0
        %v1756 = vsel %vm1485, %v1706, 0
        %1758 = vmatprep.subr.bf16.mxu0 0
        %1759 = vmatpush1.bf16.msra.mxu0 %v1756
        %1760 = vmatprep.subr.bf16.mxu0 0
        %1761 = vmatpush1.bf16.msra.mxu0 0
        %1762 = vmatprep.subr.bf16.mxu0 0
        %1763 = vmatpush1.bf16.msra.mxu0 0
        %1764 = vmatprep.subr.bf16.mxu0 0
        %1765 = vmatpush1.bf16.msra.mxu0 0
        %1766 = vmatprep.subr.bf16.mxu0 0
        %1767 = vmatpush1.bf16.msra.mxu0 0
        %1768 = vmatprep.subr.bf16.mxu0 0
        %1769 = vmatpush1.bf16.msra.mxu0 0
        %1770 = vmatprep.subr.bf16.mxu0 0
        %1771 = vmatpush1.bf16.msra.mxu0 0
        %1772 = vmatprep.subr.bf16.mxu0 0
        %1773 = vmatpush1.bf16.msra.mxu0 0
        %1774 = vmatprep.subr.bf16.mxu0 0
        %1775 = vmatpush1.bf16.msra.mxu0 0
        %1776 = vmatprep.subr.bf16.mxu0 0
        %1777 = vmatpush1.bf16.msra.mxu0 0
        %1778 = vmatprep.subr.bf16.mxu0 0
        %1779 = vmatpush1.bf16.msra.mxu0 0
        %1780 = vmatprep.subr.bf16.mxu0 0
        %1781 = vmatpush1.bf16.msra.mxu0 0
        %1782 = vmatprep.subr.bf16.mxu0 0
        %1783 = vmatpush1.bf16.msra.mxu0 0
        %1784 = vmatprep.subr.bf16.mxu0 0
        %1785 = vmatpush1.bf16.msra.mxu0 0
        %1786 = vmatprep.subr.bf16.mxu0 0
        %1787 = vmatpush1.bf16.msra.mxu0 0
        %1788 = vmatprep.subr.bf16.mxu0 0
        %1789 = vmatpush1.bf16.msra.mxu0 0
        %1790 = vmatprep.mubr.bf16.mxu0 0
        %1791 = vmatmul.mubr.bf16.gmra.mrb[0].mxu0 %v1708
        %v1792 = vpop.f32.mrb[0].mxu0
        %v1793 = vadd.f32 0.0, %v1792
        %v1794 = vpop.f32.mrb[0].mxu0
        %v1795 = vpop.f32.mrb[0].mxu0
        %v1796 = vadd.f32 0.0, %v1795
        %v1797 = vpop.f32.mrb[0].mxu0
        %1798 = vmatprep.mubr.bf16.mxu0 0
        %1799 = vmatmul.mubr.bf16.gmra.mrb[0].mxu0 %v1711
        %v1800 = vpop.f32.mrb[0].mxu0
        %v1801 = vadd.f32 0.0, %v1800
        %v1802 = vpop.f32.mrb[0].mxu0
        %v1803 = vpop.f32.mrb[0].mxu0
        %v1804 = vadd.f32 0.0, %v1803
        %v1805 = vpop.f32.mrb[0].mxu0
        %1806 = vmatprep.mubr.bf16.mxu0 0
        %1807 = vmatmul.mubr.bf16.gmra.mrb[0].mxu0 %v1714
        %v1808 = vpop.f32.mrb[0].mxu0
        %v1809 = vadd.f32 0.0, %v1808
        %v1810 = vpop.f32.mrb[0].mxu0
        %v1811 = vpop.f32.mrb[0].mxu0
        %v1812 = vadd.f32 0.0, %v1811
        %v1813 = vpop.f32.mrb[0].mxu0
        %1814 = vmatprep.mubr.bf16.mxu0 0
        %1815 = vmatmul.mubr.bf16.gmra.mrb[0].mxu0 %v1717
        %v1816 = vpop.f32.mrb[0].mxu0
        %v1817 = vadd.f32 0.0, %v1816
        %v1818 = vpop.f32.mrb[0].mxu0
        %v1819 = vpop.f32.mrb[0].mxu0
        %v1820 = vadd.f32 0.0, %v1819
        %v1821 = vpop.f32.mrb[0].mxu0
        %1822 = vmatprep.mubr.bf16.mxu0 0
        %1823 = vmatmul.mubr.bf16.gmra.mrb[0].mxu0 %v1720
        %v1824 = vpop.f32.mrb[0].mxu0
        %v1825 = vadd.f32 0.0, %v1824
        %v1826 = vpop.f32.mrb[0].mxu0
        %v1827 = vpop.f32.mrb[0].mxu0
        %v1828 = vadd.f32 0.0, %v1827
        %v1829 = vpop.f32.mrb[0].mxu0
        %1830 = vmatprep.mubr.bf16.mxu0 0
        %1831 = vmatmul.mubr.bf16.gmra.mrb[0].mxu0 %v1723
        %v1832 = vpop.f32.mrb[0].mxu0
        %v1833 = vadd.f32 0.0, %v1832
        %v1834 = vpop.f32.mrb[0].mxu0
        %v1835 = vpop.f32.mrb[0].mxu0
        %v1836 = vadd.f32 0.0, %v1835
        %v1837 = vpop.f32.mrb[0].mxu0
        %1838 = vmatprep.mubr.bf16.mxu0 0
        %1839 = vmatmul.mubr.bf16.gmra.mrb[0].mxu0 %v1726
        %v1840 = vpop.f32.mrb[0].mxu0
        %v1841 = vadd.f32 0.0, %v1840
        %v1842 = vpop.f32.mrb[0].mxu0
        %v1843 = vpop.f32.mrb[0].mxu0
        %v1844 = vadd.f32 0.0, %v1843
        %v1845 = vpop.f32.mrb[0].mxu0
        %1846 = vmatprep.mubr.bf16.mxu0 0
        %1847 = vmatmul.mubr.bf16.gmra.mrb[0].mxu0 %v1729
        %v1848 = vpop.f32.mrb[0].mxu0
        %v1849 = vadd.f32 0.0, %v1848
        %v1850 = vpop.f32.mrb[0].mxu0
        %v1851 = vpop.f32.mrb[0].mxu0
        %v1852 = vadd.f32 0.0, %v1851
        %v1853 = vpop.f32.mrb[0].mxu0
        %1854 = vmatprep.mubr.bf16.mxu0 0
        %1855 = vmatmul.mubr.bf16.gmra.mrb[0].mxu0 %v1732
        %v1856 = vpop.f32.mrb[0].mxu0
        %v1857 = vadd.f32 0.0, %v1856
        %v1858 = vpop.f32.mrb[0].mxu0
        %v1859 = vpop.f32.mrb[0].mxu0
        %v1860 = vadd.f32 0.0, %v1859
        %v1861 = vpop.f32.mrb[0].mxu0
        %1862 = vmatprep.mubr.bf16.mxu0 0
        %1863 = vmatmul.mubr.bf16.gmra.mrb[0].mxu0 %v1735
        %v1864 = vpop.f32.mrb[0].mxu0
        %v1865 = vadd.f32 0.0, %v1864
        %v1866 = vpop.f32.mrb[0].mxu0
        %v1867 = vpop.f32.mrb[0].mxu0
        %v1868 = vadd.f32 0.0, %v1867
        %v1869 = vpop.f32.mrb[0].mxu0
        %1870 = vmatprep.mubr.bf16.mxu0 0
        %1871 = vmatmul.mubr.bf16.gmra.mrb[0].mxu0 %v1738
        %v1872 = vpop.f32.mrb[0].mxu0
        %v1873 = vadd.f32 0.0, %v1872
        %v1874 = vpop.f32.mrb[0].mxu0
        %v1875 = vpop.f32.mrb[0].mxu0
        %v1876 = vadd.f32 0.0, %v1875
        %v1877 = vpop.f32.mrb[0].mxu0
        %1878 = vmatprep.mubr.bf16.mxu0 0
        %1879 = vmatmul.mubr.bf16.gmra.mrb[0].mxu0 %v1741
        %v1880 = vpop.f32.mrb[0].mxu0
        %v1881 = vadd.f32 0.0, %v1880
        %v1882 = vpop.f32.mrb[0].mxu0
        %v1883 = vpop.f32.mrb[0].mxu0
        %v1884 = vadd.f32 0.0, %v1883
        %v1885 = vpop.f32.mrb[0].mxu0
        %1886 = vmatprep.mubr.bf16.mxu0 0
        %1887 = vmatmul.mubr.bf16.gmra.mrb[0].mxu0 %v1744
        %v1888 = vpop.f32.mrb[0].mxu0
        %v1889 = vadd.f32 0.0, %v1888
        %v1890 = vpop.f32.mrb[0].mxu0
        %v1891 = vpop.f32.mrb[0].mxu0
        %v1892 = vadd.f32 0.0, %v1891
        %v1893 = vpop.f32.mrb[0].mxu0
        %1894 = vmatprep.mubr.bf16.mxu0 0
        %1895 = vmatmul.mubr.bf16.gmra.mrb[0].mxu0 %v1747
        %v1896 = vpop.f32.mrb[0].mxu0
        %v1897 = vadd.f32 0.0, %v1896
        %v1898 = vpop.f32.mrb[0].mxu0
        %v1899 = vpop.f32.mrb[0].mxu0
        %v1900 = vadd.f32 0.0, %v1899
        %v1901 = vpop.f32.mrb[0].mxu0
        %1902 = vmatprep.mubr.bf16.mxu0 0
        %1903 = vmatmul.mubr.bf16.gmra.mrb[0].mxu0 %v1750
        %v1904 = vpop.f32.mrb[0].mxu0
        %v1905 = vadd.f32 0.0, %v1904
        %v1906 = vpop.f32.mrb[0].mxu0
        %v1907 = vpop.f32.mrb[0].mxu0
        %v1908 = vadd.f32 0.0, %v1907
        %v1909 = vpop.f32.mrb[0].mxu0
        %1910 = vmatprep.mubr.bf16.mxu0 0
        %1911 = vmatmul.mubr.bf16.gmra.mrb[0].mxu0 %v1753
        %v1912 = vpop.f32.mrb[0].mxu0
        %v1913 = vadd.f32 0.0, %v1912
        %v1914 = vpop.f32.mrb[0].mxu0
        %v1915 = vpop.f32.mrb[0].mxu0
        %v1916 = vadd.f32 0.0, %v1915
        %v1917 = vpop.f32.mrb[0].mxu0
        %1918 = vdwg.mxu0
        %v1919 = vld [vmem:[#allocation4] sm:$0xff]
        %v1920 = vld [vmem:[#allocation4 + $0x8] sm:$0xff]
        %v1921 = vld [vmem:[#allocation4 + $0x10] sm:$0xff]
        %v1922 = vld [vmem:[#allocation4 + $0x18] sm:$0xff]
        %v1923 = vld [vmem:[#allocation4 + $0x20] sm:$0xff]
        %v1924 = vld [vmem:[#allocation4 + $0x28] sm:$0xff]
        %v1925 = vld [vmem:[#allocation4 + $0x30] sm:$0xff]
        %v1926 = vld [vmem:[#allocation4 + $0x38] sm:$0xff]
        %v1927 = vld [vmem:[#allocation4 + $0x40] sm:$0xff]
        %v1928 = vld [vmem:[#allocation4 + $0x48] sm:$0xff]
        %v1929 = vld [vmem:[#allocation4 + $0x50] sm:$0xff]
        %v1930 = vld [vmem:[#allocation4 + $0x58] sm:$0xff]
        %v1931 = vld [vmem:[#allocation4 + $0x60] sm:$0xff]
        %v1932 = vld [vmem:[#allocation4 + $0x68] sm:$0xff]
        %v1933 = vld [vmem:[#allocation4 + $0x70] sm:$0xff]
        %v1934 = vld [vmem:[#allocation4 + $0x78] sm:$0xff]
        %v1935 = vld [vmem:[#allocation4 + $0x80] sm:$0xff]
        %v1936 = vld [vmem:[#allocation4 + $0x88] sm:$0xff]
        %v1937 = vld [vmem:[#allocation4 + $0x90] sm:$0xff]
        %v1938 = vld [vmem:[#allocation4 + $0x98] sm:$0xff]
        %v1939 = vld [vmem:[#allocation4 + $0xa0] sm:$0xff]
        %v1940 = vld [vmem:[#allocation4 + $0xa8] sm:$0xff]
        %v1941 = vld [vmem:[#allocation4 + $0xb0] sm:$0xff]
        %v1942 = vld [vmem:[#allocation4 + $0xb8] sm:$0xff]
        %v1943 = vld [vmem:[#allocation4 + $0xc0] sm:$0xff]
        %v1944 = vld [vmem:[#allocation4 + $0xc8] sm:$0xff]
        %v1945 = vld [vmem:[#allocation4 + $0xd0] sm:$0xff]
        %v1946 = vld [vmem:[#allocation4 + $0xd8] sm:$0xff]
        %v1947 = vld [vmem:[#allocation4 + $0xe0] sm:$0xff]
        %v1948 = vld [vmem:[#allocation4 + $0xe8] sm:$0xff]
        %v1949 = vld [vmem:[#allocation4 + $0xf0] sm:$0xff]
        %v1950 = vld [vmem:[#allocation4 + $0xf8] sm:$0xff]
        %v1951 = vadd.f32 %v1919, %v1793
        %v1952 = vadd.f32 %v1920, %v1796
        %v1953 = vadd.f32 %v1921, %v1801
        %v1954 = vadd.f32 %v1922, %v1804
        %v1955 = vadd.f32 %v1923, %v1809
        %v1956 = vadd.f32 %v1924, %v1812
        %v1957 = vadd.f32 %v1925, %v1817
        %v1958 = vadd.f32 %v1926, %v1820
        %v1959 = vadd.f32 %v1927, %v1825
        %v1960 = vadd.f32 %v1928, %v1828
        %v1961 = vadd.f32 %v1929, %v1833
        %v1962 = vadd.f32 %v1930, %v1836
        %v1963 = vadd.f32 %v1931, %v1841
        %v1964 = vadd.f32 %v1932, %v1844
        %v1965 = vadd.f32 %v1933, %v1849
        %v1966 = vadd.f32 %v1934, %v1852
        %v1967 = vadd.f32 %v1935, %v1857
        %v1968 = vadd.f32 %v1936, %v1860
        %v1969 = vadd.f32 %v1937, %v1865
        %v1970 = vadd.f32 %v1938, %v1868
        %v1971 = vadd.f32 %v1939, %v1873
        %v1972 = vadd.f32 %v1940, %v1876
        %v1973 = vadd.f32 %v1941, %v1881
        %v1974 = vadd.f32 %v1942, %v1884
        %v1975 = vadd.f32 %v1943, %v1889
        %v1976 = vadd.f32 %v1944, %v1892
        %v1977 = vadd.f32 %v1945, %v1897
        %v1978 = vadd.f32 %v1946, %v1900
        %v1979 = vadd.f32 %v1947, %v1905
        %v1980 = vadd.f32 %v1948, %v1908
        %v1981 = vadd.f32 %v1949, %v1913
        %v1982 = vadd.f32 %v1950, %v1916
        %1983 = vst.msk [vmem:[#allocation4] sm:$0xff] %vm1650, %v1951
        %1984 = vst.msk [vmem:[#allocation4 + $0x8] sm:$0xff] %vm1650, %v1952
        %1985 = vst.msk [vmem:[#allocation4 + $0x10] sm:$0xff] %vm1650, %v1953
        %1986 = vst.msk [vmem:[#allocation4 + $0x18] sm:$0xff] %vm1650, %v1954
        %1987 = vst.msk [vmem:[#allocation4 + $0x20] sm:$0xff] %vm1650, %v1955
        %1988 = vst.msk [vmem:[#allocation4 + $0x28] sm:$0xff] %vm1650, %v1956
        %1989 = vst.msk [vmem:[#allocation4 + $0x30] sm:$0xff] %vm1650, %v1957
        %1990 = vst.msk [vmem:[#allocation4 + $0x38] sm:$0xff] %vm1650, %v1958
        %1991 = vst.msk [vmem:[#allocation4 + $0x40] sm:$0xff] %vm1650, %v1959
        %1992 = vst.msk [vmem:[#allocation4 + $0x48] sm:$0xff] %vm1650, %v1960
        %1993 = vst.msk [vmem:[#allocation4 + $0x50] sm:$0xff] %vm1650, %v1961
        %1994 = vst.msk [vmem:[#allocation4 + $0x58] sm:$0xff] %vm1650, %v1962
        %1995 = vst.msk [vmem:[#allocation4 + $0x60] sm:$0xff] %vm1650, %v1963
        %1996 = vst.msk [vmem:[#allocation4 + $0x68] sm:$0xff] %vm1650, %v1964
        %1997 = vst.msk [vmem:[#allocation4 + $0x70] sm:$0xff] %vm1650, %v1965
        %1998 = vst.msk [vmem:[#allocation4 + $0x78] sm:$0xff] %vm1650, %v1966
        %1999 = vst.msk [vmem:[#allocation4 + $0x80] sm:$0xff] %vm1650, %v1967
        %2000 = vst.msk [vmem:[#allocation4 + $0x88] sm:$0xff] %vm1650, %v1968
        %2001 = vst.msk [vmem:[#allocation4 + $0x90] sm:$0xff] %vm1650, %v1969
        %2002 = vst.msk [vmem:[#allocation4 + $0x98] sm:$0xff] %vm1650, %v1970
        %2003 = vst.msk [vmem:[#allocation4 + $0xa0] sm:$0xff] %vm1650, %v1971
        %2004 = vst.msk [vmem:[#allocation4 + $0xa8] sm:$0xff] %vm1650, %v1972
        %2005 = vst.msk [vmem:[#allocation4 + $0xb0] sm:$0xff] %vm1650, %v1973
        %2006 = vst.msk [vmem:[#allocation4 + $0xb8] sm:$0xff] %vm1650, %v1974
        %2007 = vst.msk [vmem:[#allocation4 + $0xc0] sm:$0xff] %vm1650, %v1975
        %2008 = vst.msk [vmem:[#allocation4 + $0xc8] sm:$0xff] %vm1650, %v1976
        %2009 = vst.msk [vmem:[#allocation4 + $0xd0] sm:$0xff] %vm1650, %v1977
        %2010 = vst.msk [vmem:[#allocation4 + $0xd8] sm:$0xff] %vm1650, %v1978
        %2011 = vst.msk [vmem:[#allocation4 + $0xe0] sm:$0xff] %vm1650, %v1979
        %2012 = vst.msk [vmem:[#allocation4 + $0xe8] sm:$0xff] %vm1650, %v1980
        %2013 = vst.msk [vmem:[#allocation4 + $0xf0] sm:$0xff] %vm1650, %v1981
        %2014 = vst.msk [vmem:[#allocation4 + $0xf8] sm:$0xff] %vm1650, %v1982
        %v2015 = vld [vmem:[#allocation2 + $0x10] sm:$0xff]
        %v2016 = vld [vmem:[#allocation2 + $0x18] sm:$0xff]
        %v2017 = vld [vmem:[#allocation2 + $0x20] sm:$0xff]
        %v2018 = vld [vmem:[#allocation2 + $0x28] sm:$0xff]
        %v2019 = vld [vmem:[#allocation2 + $0x30] sm:$0xff]
        %v2020 = vld [vmem:[#allocation2 + $0x38] sm:$0xff]
        %v2021 = vld [vmem:[#allocation2 + $0x40] sm:$0xff]
        %v2022 = vld [vmem:[#allocation2 + $0x48] sm:$0xff]
        %v2023 = vld [vmem:[#allocation2 + $0x50] sm:$0xff]
        %v2024 = vld [vmem:[#allocation2 + $0x58] sm:$0xff]
        %v2025 = vld [vmem:[#allocation2 + $0x60] sm:$0xff]
        %v2026 = vld [vmem:[#allocation2 + $0x68] sm:$0xff]
        %v2027 = vld [vmem:[#allocation2 + $0x70] sm:$0xff]
        %v2028 = vld [vmem:[#allocation2 + $0x78] sm:$0xff]
        %v2029 = vld [vmem:[#allocation2 + $0x80] sm:$0xff]
        %v2030 = vld [vmem:[#allocation2 + $0x88] sm:$0xff]
        %s2031 = scalar_lea.vmem %s1, 16
        %v2032 = vld [vmem:[%s2031] sm:$0xf]
        %v2033 = vld [vmem:[%s2031 + $0x4] sm:$0x3]
        %v2036 = vunpack.c.l.b16 %v2032
        %v2037 = vunpack.c.l.b16 %v2033
        %v2038 = vpack.c.b16 %v2037, %v2036
        %v2040 = vsel %vm381, %v2015, 0
        %v2043 = vsel %vm381, %v2016, 0
        %v2046 = vsel %vm381, %v2017, 0
        %v2049 = vsel %vm381, %v2018, 0
        %v2052 = vsel %vm381, %v2019, 0
        %v2055 = vsel %vm381, %v2020, 0
        %v2058 = vsel %vm381, %v2021, 0
        %v2061 = vsel %vm381, %v2022, 0
        %v2064 = vsel %vm381, %v2023, 0
        %v2067 = vsel %vm381, %v2024, 0
        %v2070 = vsel %vm381, %v2025, 0
        %v2073 = vsel %vm381, %v2026, 0
        %v2076 = vsel %vm381, %v2027, 0
        %v2079 = vsel %vm381, %v2028, 0
        %v2082 = vsel %vm381, %v2029, 0
        %v2085 = vsel %vm381, %v2030, 0
        %v2088 = vsel %vm1485, %v2038, 0
        %2090 = vmatprep.subr.bf16.mxu0 0
        %2091 = vmatpush1.bf16.msra.mxu0 %v2088
        %2092 = vmatprep.subr.bf16.mxu0 0
        %2093 = vmatpush1.bf16.msra.mxu0 0
        %2094 = vmatprep.subr.bf16.mxu0 0
        %2095 = vmatpush1.bf16.msra.mxu0 0
        %2096 = vmatprep.subr.bf16.mxu0 0
        %2097 = vmatpush1.bf16.msra.mxu0 0
        %2098 = vmatprep.subr.bf16.mxu0 0
        %2099 = vmatpush1.bf16.msra.mxu0 0
        %2100 = vmatprep.subr.bf16.mxu0 0
        %2101 = vmatpush1.bf16.msra.mxu0 0
        %2102 = vmatprep.subr.bf16.mxu0 0
        %2103 = vmatpush1.bf16.msra.mxu0 0
        %2104 = vmatprep.subr.bf16.mxu0 0
        %2105 = vmatpush1.bf16.msra.mxu0 0
        %2106 = vmatprep.subr.bf16.mxu0 0
        %2107 = vmatpush1.bf16.msra.mxu0 0
        %2108 = vmatprep.subr.bf16.mxu0 0
        %2109 = vmatpush1.bf16.msra.mxu0 0
        %2110 = vmatprep.subr.bf16.mxu0 0
        %2111 = vmatpush1.bf16.msra.mxu0 0
        %2112 = vmatprep.subr.bf16.mxu0 0
        %2113 = vmatpush1.bf16.msra.mxu0 0
        %2114 = vmatprep.subr.bf16.mxu0 0
        %2115 = vmatpush1.bf16.msra.mxu0 0
        %2116 = vmatprep.subr.bf16.mxu0 0
        %2117 = vmatpush1.bf16.msra.mxu0 0
        %2118 = vmatprep.subr.bf16.mxu0 0
        %2119 = vmatpush1.bf16.msra.mxu0 0
        %2120 = vmatprep.subr.bf16.mxu0 0
        %2121 = vmatpush1.bf16.msra.mxu0 0
        %2122 = vmatprep.mubr.bf16.mxu0 0
        %2123 = vmatmul.mubr.bf16.gmra.mrb[0].mxu0 %v2040
        %v2124 = vpop.f32.mrb[0].mxu0
        %v2125 = vadd.f32 0.0, %v2124
        %v2126 = vpop.f32.mrb[0].mxu0
        %v2127 = vpop.f32.mrb[0].mxu0
        %v2128 = vadd.f32 0.0, %v2127
        %v2129 = vpop.f32.mrb[0].mxu0
        %2130 = vmatprep.mubr.bf16.mxu0 0
        %2131 = vmatmul.mubr.bf16.gmra.mrb[0].mxu0 %v2043
        %v2132 = vpop.f32.mrb[0].mxu0
        %v2133 = vadd.f32 0.0, %v2132
        %v2134 = vpop.f32.mrb[0].mxu0
        %v2135 = vpop.f32.mrb[0].mxu0
        %v2136 = vadd.f32 0.0, %v2135
        %v2137 = vpop.f32.mrb[0].mxu0
        %2138 = vmatprep.mubr.bf16.mxu0 0
        %2139 = vmatmul.mubr.bf16.gmra.mrb[0].mxu0 %v2046
        %v2140 = vpop.f32.mrb[0].mxu0
        %v2141 = vadd.f32 0.0, %v2140
        %v2142 = vpop.f32.mrb[0].mxu0
        %v2143 = vpop.f32.mrb[0].mxu0
        %v2144 = vadd.f32 0.0, %v2143
        %v2145 = vpop.f32.mrb[0].mxu0
        %2146 = vmatprep.mubr.bf16.mxu0 0
        %2147 = vmatmul.mubr.bf16.gmra.mrb[0].mxu0 %v2049
        %v2148 = vpop.f32.mrb[0].mxu0
        %v2149 = vadd.f32 0.0, %v2148
        %v2150 = vpop.f32.mrb[0].mxu0
        %v2151 = vpop.f32.mrb[0].mxu0
        %v2152 = vadd.f32 0.0, %v2151
        %v2153 = vpop.f32.mrb[0].mxu0
        %2154 = vmatprep.mubr.bf16.mxu0 0
        %2155 = vmatmul.mubr.bf16.gmra.mrb[0].mxu0 %v2052
        %v2156 = vpop.f32.mrb[0].mxu0
        %v2157 = vadd.f32 0.0, %v2156
        %v2158 = vpop.f32.mrb[0].mxu0
        %v2159 = vpop.f32.mrb[0].mxu0
        %v2160 = vadd.f32 0.0, %v2159
        %v2161 = vpop.f32.mrb[0].mxu0
        %2162 = vmatprep.mubr.bf16.mxu0 0
        %2163 = vmatmul.mubr.bf16.gmra.mrb[0].mxu0 %v2055
        %v2164 = vpop.f32.mrb[0].mxu0
        %v2165 = vadd.f32 0.0, %v2164
        %v2166 = vpop.f32.mrb[0].mxu0
        %v2167 = vpop.f32.mrb[0].mxu0
        %v2168 = vadd.f32 0.0, %v2167
        %v2169 = vpop.f32.mrb[0].mxu0
        %2170 = vmatprep.mubr.bf16.mxu0 0
        %2171 = vmatmul.mubr.bf16.gmra.mrb[0].mxu0 %v2058
        %v2172 = vpop.f32.mrb[0].mxu0
        %v2173 = vadd.f32 0.0, %v2172
        %v2174 = vpop.f32.mrb[0].mxu0
        %v2175 = vpop.f32.mrb[0].mxu0
        %v2176 = vadd.f32 0.0, %v2175
        %v2177 = vpop.f32.mrb[0].mxu0
        %2178 = vmatprep.mubr.bf16.mxu0 0
        %2179 = vmatmul.mubr.bf16.gmra.mrb[0].mxu0 %v2061
        %v2180 = vpop.f32.mrb[0].mxu0
        %v2181 = vadd.f32 0.0, %v2180
        %v2182 = vpop.f32.mrb[0].mxu0
        %v2183 = vpop.f32.mrb[0].mxu0
        %v2184 = vadd.f32 0.0, %v2183
        %v2185 = vpop.f32.mrb[0].mxu0
        %2186 = vmatprep.mubr.bf16.mxu0 0
        %2187 = vmatmul.mubr.bf16.gmra.mrb[0].mxu0 %v2064
        %v2188 = vpop.f32.mrb[0].mxu0
        %v2189 = vadd.f32 0.0, %v2188
        %v2190 = vpop.f32.mrb[0].mxu0
        %v2191 = vpop.f32.mrb[0].mxu0
        %v2192 = vadd.f32 0.0, %v2191
        %v2193 = vpop.f32.mrb[0].mxu0
        %2194 = vmatprep.mubr.bf16.mxu0 0
        %2195 = vmatmul.mubr.bf16.gmra.mrb[0].mxu0 %v2067
        %v2196 = vpop.f32.mrb[0].mxu0
        %v2197 = vadd.f32 0.0, %v2196
        %v2198 = vpop.f32.mrb[0].mxu0
        %v2199 = vpop.f32.mrb[0].mxu0
        %v2200 = vadd.f32 0.0, %v2199
        %v2201 = vpop.f32.mrb[0].mxu0
        %2202 = vmatprep.mubr.bf16.mxu0 0
        %2203 = vmatmul.mubr.bf16.gmra.mrb[0].mxu0 %v2070
        %v2204 = vpop.f32.mrb[0].mxu0
        %v2205 = vadd.f32 0.0, %v2204
        %v2206 = vpop.f32.mrb[0].mxu0
        %v2207 = vpop.f32.mrb[0].mxu0
        %v2208 = vadd.f32 0.0, %v2207
        %v2209 = vpop.f32.mrb[0].mxu0
        %2210 = vmatprep.mubr.bf16.mxu0 0
        %2211 = vmatmul.mubr.bf16.gmra.mrb[0].mxu0 %v2073
        %v2212 = vpop.f32.mrb[0].mxu0
        %v2213 = vadd.f32 0.0, %v2212
        %v2214 = vpop.f32.mrb[0].mxu0
        %v2215 = vpop.f32.mrb[0].mxu0
        %v2216 = vadd.f32 0.0, %v2215
        %v2217 = vpop.f32.mrb[0].mxu0
        %2218 = vmatprep.mubr.bf16.mxu0 0
        %2219 = vmatmul.mubr.bf16.gmra.mrb[0].mxu0 %v2076
        %v2220 = vpop.f32.mrb[0].mxu0
        %v2221 = vadd.f32 0.0, %v2220
        %v2222 = vpop.f32.mrb[0].mxu0
        %v2223 = vpop.f32.mrb[0].mxu0
        %v2224 = vadd.f32 0.0, %v2223
        %v2225 = vpop.f32.mrb[0].mxu0
        %2226 = vmatprep.mubr.bf16.mxu0 0
        %2227 = vmatmul.mubr.bf16.gmra.mrb[0].mxu0 %v2079
        %v2228 = vpop.f32.mrb[0].mxu0
        %v2229 = vadd.f32 0.0, %v2228
        %v2230 = vpop.f32.mrb[0].mxu0
        %v2231 = vpop.f32.mrb[0].mxu0
        %v2232 = vadd.f32 0.0, %v2231
        %v2233 = vpop.f32.mrb[0].mxu0
        %2234 = vmatprep.mubr.bf16.mxu0 0
        %2235 = vmatmul.mubr.bf16.gmra.mrb[0].mxu0 %v2082
        %v2236 = vpop.f32.mrb[0].mxu0
        %v2237 = vadd.f32 0.0, %v2236
        %v2238 = vpop.f32.mrb[0].mxu0
        %v2239 = vpop.f32.mrb[0].mxu0
        %v2240 = vadd.f32 0.0, %v2239
        %v2241 = vpop.f32.mrb[0].mxu0
        %2242 = vmatprep.mubr.bf16.mxu0 0
        %2243 = vmatmul.mubr.bf16.gmra.mrb[0].mxu0 %v2085
        %v2244 = vpop.f32.mrb[0].mxu0
        %v2245 = vadd.f32 0.0, %v2244
        %v2246 = vpop.f32.mrb[0].mxu0
        %v2247 = vpop.f32.mrb[0].mxu0
        %v2248 = vadd.f32 0.0, %v2247
        %v2249 = vpop.f32.mrb[0].mxu0
        %2250 = vdwg.mxu0
        %v2251 = vld [vmem:[#allocation4] sm:$0xff]
        %v2252 = vld [vmem:[#allocation4 + $0x8] sm:$0xff]
        %v2253 = vld [vmem:[#allocation4 + $0x10] sm:$0xff]
        %v2254 = vld [vmem:[#allocation4 + $0x18] sm:$0xff]
        %v2255 = vld [vmem:[#allocation4 + $0x20] sm:$0xff]
        %v2256 = vld [vmem:[#allocation4 + $0x28] sm:$0xff]
        %v2257 = vld [vmem:[#allocation4 + $0x30] sm:$0xff]
        %v2258 = vld [vmem:[#allocation4 + $0x38] sm:$0xff]
        %v2259 = vld [vmem:[#allocation4 + $0x40] sm:$0xff]
        %v2260 = vld [vmem:[#allocation4 + $0x48] sm:$0xff]
        %v2261 = vld [vmem:[#allocation4 + $0x50] sm:$0xff]
        %v2262 = vld [vmem:[#allocation4 + $0x58] sm:$0xff]
        %v2263 = vld [vmem:[#allocation4 + $0x60] sm:$0xff]
        %v2264 = vld [vmem:[#allocation4 + $0x68] sm:$0xff]
        %v2265 = vld [vmem:[#allocation4 + $0x70] sm:$0xff]
        %v2266 = vld [vmem:[#allocation4 + $0x78] sm:$0xff]
        %v2267 = vld [vmem:[#allocation4 + $0x80] sm:$0xff]
        %v2268 = vld [vmem:[#allocation4 + $0x88] sm:$0xff]
        %v2269 = vld [vmem:[#allocation4 + $0x90] sm:$0xff]
        %v2270 = vld [vmem:[#allocation4 + $0x98] sm:$0xff]
        %v2271 = vld [vmem:[#allocation4 + $0xa0] sm:$0xff]
        %v2272 = vld [vmem:[#allocation4 + $0xa8] sm:$0xff]
        %v2273 = vld [vmem:[#allocation4 + $0xb0] sm:$0xff]
        %v2274 = vld [vmem:[#allocation4 + $0xb8] sm:$0xff]
        %v2275 = vld [vmem:[#allocation4 + $0xc0] sm:$0xff]
        %v2276 = vld [vmem:[#allocation4 + $0xc8] sm:$0xff]
        %v2277 = vld [vmem:[#allocation4 + $0xd0] sm:$0xff]
        %v2278 = vld [vmem:[#allocation4 + $0xd8] sm:$0xff]
        %v2279 = vld [vmem:[#allocation4 + $0xe0] sm:$0xff]
        %v2280 = vld [vmem:[#allocation4 + $0xe8] sm:$0xff]
        %v2281 = vld [vmem:[#allocation4 + $0xf0] sm:$0xff]
        %v2282 = vld [vmem:[#allocation4 + $0xf8] sm:$0xff]
        %v2283 = vadd.f32 %v2251, %v2125
        %v2284 = vadd.f32 %v2252, %v2128
        %v2285 = vadd.f32 %v2253, %v2133
        %v2286 = vadd.f32 %v2254, %v2136
        %v2287 = vadd.f32 %v2255, %v2141
        %v2288 = vadd.f32 %v2256, %v2144
        %v2289 = vadd.f32 %v2257, %v2149
        %v2290 = vadd.f32 %v2258, %v2152
        %v2291 = vadd.f32 %v2259, %v2157
        %v2292 = vadd.f32 %v2260, %v2160
        %v2293 = vadd.f32 %v2261, %v2165
        %v2294 = vadd.f32 %v2262, %v2168
        %v2295 = vadd.f32 %v2263, %v2173
        %v2296 = vadd.f32 %v2264, %v2176
        %v2297 = vadd.f32 %v2265, %v2181
        %v2298 = vadd.f32 %v2266, %v2184
        %v2299 = vadd.f32 %v2267, %v2189
        %v2300 = vadd.f32 %v2268, %v2192
        %v2301 = vadd.f32 %v2269, %v2197
        %v2302 = vadd.f32 %v2270, %v2200
        %v2303 = vadd.f32 %v2271, %v2205
        %v2304 = vadd.f32 %v2272, %v2208
        %v2305 = vadd.f32 %v2273, %v2213
        %v2306 = vadd.f32 %v2274, %v2216
        %v2307 = vadd.f32 %v2275, %v2221
        %v2308 = vadd.f32 %v2276, %v2224
        %v2309 = vadd.f32 %v2277, %v2229
        %v2310 = vadd.f32 %v2278, %v2232
        %v2311 = vadd.f32 %v2279, %v2237
        %v2312 = vadd.f32 %v2280, %v2240
        %v2313 = vadd.f32 %v2281, %v2245
        %v2314 = vadd.f32 %v2282, %v2248
        %2315 = vst.msk [vmem:[#allocation4] sm:$0xff] %vm1650, %v2283
        %2316 = vst.msk [vmem:[#allocation4 + $0x8] sm:$0xff] %vm1650, %v2284
        %2317 = vst.msk [vmem:[#allocation4 + $0x10] sm:$0xff] %vm1650, %v2285
        %2318 = vst.msk [vmem:[#allocation4 + $0x18] sm:$0xff] %vm1650, %v2286
        %2319 = vst.msk [vmem:[#allocation4 + $0x20] sm:$0xff] %vm1650, %v2287
        %2320 = vst.msk [vmem:[#allocation4 + $0x28] sm:$0xff] %vm1650, %v2288
        %2321 = vst.msk [vmem:[#allocation4 + $0x30] sm:$0xff] %vm1650, %v2289
        %2322 = vst.msk [vmem:[#allocation4 + $0x38] sm:$0xff] %vm1650, %v2290
        %2323 = vst.msk [vmem:[#allocation4 + $0x40] sm:$0xff] %vm1650, %v2291
        %2324 = vst.msk [vmem:[#allocation4 + $0x48] sm:$0xff] %vm1650, %v2292
        %2325 = vst.msk [vmem:[#allocation4 + $0x50] sm:$0xff] %vm1650, %v2293
        %2326 = vst.msk [vmem:[#allocation4 + $0x58] sm:$0xff] %vm1650, %v2294
        %2327 = vst.msk [vmem:[#allocation4 + $0x60] sm:$0xff] %vm1650, %v2295
        %2328 = vst.msk [vmem:[#allocation4 + $0x68] sm:$0xff] %vm1650, %v2296
        %2329 = vst.msk [vmem:[#allocation4 + $0x70] sm:$0xff] %vm1650, %v2297
        %2330 = vst.msk [vmem:[#allocation4 + $0x78] sm:$0xff] %vm1650, %v2298
        %2331 = vst.msk [vmem:[#allocation4 + $0x80] sm:$0xff] %vm1650, %v2299
        %2332 = vst.msk [vmem:[#allocation4 + $0x88] sm:$0xff] %vm1650, %v2300
        %2333 = vst.msk [vmem:[#allocation4 + $0x90] sm:$0xff] %vm1650, %v2301
        %2334 = vst.msk [vmem:[#allocation4 + $0x98] sm:$0xff] %vm1650, %v2302
        %2335 = vst.msk [vmem:[#allocation4 + $0xa0] sm:$0xff] %vm1650, %v2303
        %2336 = vst.msk [vmem:[#allocation4 + $0xa8] sm:$0xff] %vm1650, %v2304
        %2337 = vst.msk [vmem:[#allocation4 + $0xb0] sm:$0xff] %vm1650, %v2305
        %2338 = vst.msk [vmem:[#allocation4 + $0xb8] sm:$0xff] %vm1650, %v2306
        %2339 = vst.msk [vmem:[#allocation4 + $0xc0] sm:$0xff] %vm1650, %v2307
        %2340 = vst.msk [vmem:[#allocation4 + $0xc8] sm:$0xff] %vm1650, %v2308
        %2341 = vst.msk [vmem:[#allocation4 + $0xd0] sm:$0xff] %vm1650, %v2309
        %2342 = vst.msk [vmem:[#allocation4 + $0xd8] sm:$0xff] %vm1650, %v2310
        %2343 = vst.msk [vmem:[#allocation4 + $0xe0] sm:$0xff] %vm1650, %v2311
        %2344 = vst.msk [vmem:[#allocation4 + $0xe8] sm:$0xff] %vm1650, %v2312
        %2345 = vst.msk [vmem:[#allocation4 + $0xf0] sm:$0xff] %vm1650, %v2313
        %2346 = vst.msk [vmem:[#allocation4 + $0xf8] sm:$0xff] %vm1650, %v2314
        %v2347 = vld [vmem:[#allocation4] sm:$0xff]
        %v2348 = vld [vmem:[#allocation4 + $0x8] sm:$0xff]
        %v2349 = vld [vmem:[#allocation4 + $0x10] sm:$0xff]
        %v2350 = vld [vmem:[#allocation4 + $0x18] sm:$0xff]
        %v2351 = vld [vmem:[#allocation4 + $0x20] sm:$0xff]
        %v2352 = vld [vmem:[#allocation4 + $0x28] sm:$0xff]
        %v2353 = vld [vmem:[#allocation4 + $0x30] sm:$0xff]
        %v2354 = vld [vmem:[#allocation4 + $0x38] sm:$0xff]
        %v2355 = vld [vmem:[#allocation4 + $0x40] sm:$0xff]
        %v2356 = vld [vmem:[#allocation4 + $0x48] sm:$0xff]
        %v2357 = vld [vmem:[#allocation4 + $0x50] sm:$0xff]
        %v2358 = vld [vmem:[#allocation4 + $0x58] sm:$0xff]
        %v2359 = vld [vmem:[#allocation4 + $0x60] sm:$0xff]
        %v2360 = vld [vmem:[#allocation4 + $0x68] sm:$0xff]
        %v2361 = vld [vmem:[#allocation4 + $0x70] sm:$0xff]
        %v2362 = vld [vmem:[#allocation4 + $0x78] sm:$0xff]
        %v2363 = vld [vmem:[#allocation4 + $0x80] sm:$0xff]
        %v2364 = vld [vmem:[#allocation4 + $0x88] sm:$0xff]
        %v2365 = vld [vmem:[#allocation4 + $0x90] sm:$0xff]
        %v2366 = vld [vmem:[#allocation4 + $0x98] sm:$0xff]
        %v2367 = vld [vmem:[#allocation4 + $0xa0] sm:$0xff]
        %v2368 = vld [vmem:[#allocation4 + $0xa8] sm:$0xff]
        %v2369 = vld [vmem:[#allocation4 + $0xb0] sm:$0xff]
        %v2370 = vld [vmem:[#allocation4 + $0xb8] sm:$0xff]
        %v2371 = vld [vmem:[#allocation4 + $0xc0] sm:$0xff]
        %v2372 = vld [vmem:[#allocation4 + $0xc8] sm:$0xff]
        %v2373 = vld [vmem:[#allocation4 + $0xd0] sm:$0xff]
        %v2374 = vld [vmem:[#allocation4 + $0xd8] sm:$0xff]
        %v2375 = vld [vmem:[#allocation4 + $0xe0] sm:$0xff]
        %v2376 = vld [vmem:[#allocation4 + $0xe8] sm:$0xff]
        %v2377 = vld [vmem:[#allocation4 + $0xf0] sm:$0xff]
        %v2378 = vld [vmem:[#allocation4 + $0xf8] sm:$0xff]
        %v2379 = vld [vmem:[%s2] sm:$0x1]
        %v2381 = vlaneseq
        %v2382 = vshrl.u32 %v2381, 7
        %v2383 = vsub.s32 0, %v2382
        %v2384 = vrot.slane %v2379, %v2383
        %v2386 = vmul.f32 %v2347, %v2384
        %v2387 = vmul.f32 %v2348, %v2384
        %v2388 = vmul.f32 %v2349, %v2384
        %v2389 = vmul.f32 %v2350, %v2384
        %v2390 = vmul.f32 %v2351, %v2384
        %v2391 = vmul.f32 %v2352, %v2384
        %v2392 = vmul.f32 %v2353, %v2384
        %v2393 = vmul.f32 %v2354, %v2384
        %v2394 = vmul.f32 %v2355, %v2384
        %v2395 = vmul.f32 %v2356, %v2384
        %v2396 = vmul.f32 %v2357, %v2384
        %v2397 = vmul.f32 %v2358, %v2384
        %v2398 = vmul.f32 %v2359, %v2384
        %v2399 = vmul.f32 %v2360, %v2384
        %v2400 = vmul.f32 %v2361, %v2384
        %v2401 = vmul.f32 %v2362, %v2384
        %v2402 = vmul.f32 %v2363, %v2384
        %v2403 = vmul.f32 %v2364, %v2384
        %v2404 = vmul.f32 %v2365, %v2384
        %v2405 = vmul.f32 %v2366, %v2384
        %v2406 = vmul.f32 %v2367, %v2384
        %v2407 = vmul.f32 %v2368, %v2384
        %v2408 = vmul.f32 %v2369, %v2384
        %v2409 = vmul.f32 %v2370, %v2384
        %v2410 = vmul.f32 %v2371, %v2384
        %v2411 = vmul.f32 %v2372, %v2384
        %v2412 = vmul.f32 %v2373, %v2384
        %v2413 = vmul.f32 %v2374, %v2384
        %v2414 = vmul.f32 %v2375, %v2384
        %v2415 = vmul.f32 %v2376, %v2384
        %v2416 = vmul.f32 %v2377, %v2384
        %v2417 = vmul.f32 %v2378, %v2384
        %v2418 = vld [vmem:[%s3] sm:$0x1]
        %v2420 = vlaneseq
        %v2421 = vshrl.u32 %v2420, 7
        %v2422 = vsub.s32 0, %v2421
        %v2423 = vrot.slane %v2418, %v2422
        %v2425 = vadd.f32 %v2386, %v2423
        %v2426 = vadd.f32 %v2387, %v2423
        %v2427 = vadd.f32 %v2388, %v2423
        %v2428 = vadd.f32 %v2389, %v2423
        %v2429 = vadd.f32 %v2390, %v2423
        %v2430 = vadd.f32 %v2391, %v2423
        %v2431 = vadd.f32 %v2392, %v2423
        %v2432 = vadd.f32 %v2393, %v2423
        %v2433 = vadd.f32 %v2394, %v2423
        %v2434 = vadd.f32 %v2395, %v2423
        %v2435 = vadd.f32 %v2396, %v2423
        %v2436 = vadd.f32 %v2397, %v2423
        %v2437 = vadd.f32 %v2398, %v2423
        %v2438 = vadd.f32 %v2399, %v2423
        %v2439 = vadd.f32 %v2400, %v2423
        %v2440 = vadd.f32 %v2401, %v2423
        %v2441 = vadd.f32 %v2402, %v2423
        %v2442 = vadd.f32 %v2403, %v2423
        %v2443 = vadd.f32 %v2404, %v2423
        %v2444 = vadd.f32 %v2405, %v2423
        %v2445 = vadd.f32 %v2406, %v2423
        %v2446 = vadd.f32 %v2407, %v2423
        %v2447 = vadd.f32 %v2408, %v2423
        %v2448 = vadd.f32 %v2409, %v2423
        %v2449 = vadd.f32 %v2410, %v2423
        %v2450 = vadd.f32 %v2411, %v2423
        %v2451 = vadd.f32 %v2412, %v2423
        %v2452 = vadd.f32 %v2413, %v2423
        %v2453 = vadd.f32 %v2414, %v2423
        %v2454 = vadd.f32 %v2415, %v2423
        %v2455 = vadd.f32 %v2416, %v2423
        %v2456 = vadd.f32 %v2417, %v2423
        %v2457 = vmax.f32 %v2425, 0.0
        %v2458 = vmax.f32 %v2426, 0.0
        %v2459 = vmax.f32 %v2427, 0.0
        %v2460 = vmax.f32 %v2428, 0.0
        %v2461 = vmax.f32 %v2429, 0.0
        %v2462 = vmax.f32 %v2430, 0.0
        %v2463 = vmax.f32 %v2431, 0.0
        %v2464 = vmax.f32 %v2432, 0.0
        %v2465 = vmax.f32 %v2433, 0.0
        %v2466 = vmax.f32 %v2434, 0.0
        %v2467 = vmax.f32 %v2435, 0.0
        %v2468 = vmax.f32 %v2436, 0.0
        %v2469 = vmax.f32 %v2437, 0.0
        %v2470 = vmax.f32 %v2438, 0.0
        %v2471 = vmax.f32 %v2439, 0.0
        %v2472 = vmax.f32 %v2440, 0.0
        %v2473 = vmax.f32 %v2441, 0.0
        %v2474 = vmax.f32 %v2442, 0.0
        %v2475 = vmax.f32 %v2443, 0.0
        %v2476 = vmax.f32 %v2444, 0.0
        %v2477 = vmax.f32 %v2445, 0.0
        %v2478 = vmax.f32 %v2446, 0.0
        %v2479 = vmax.f32 %v2447, 0.0
        %v2480 = vmax.f32 %v2448, 0.0
        %v2481 = vmax.f32 %v2449, 0.0
        %v2482 = vmax.f32 %v2450, 0.0
        %v2483 = vmax.f32 %v2451, 0.0
        %v2484 = vmax.f32 %v2452, 0.0
        %v2485 = vmax.f32 %v2453, 0.0
        %v2486 = vmax.f32 %v2454, 0.0
        %v2487 = vmax.f32 %v2455, 0.0
        %v2488 = vmax.f32 %v2456, 0.0
        %vm2489 = vcmask 195584
        %2490 = vst.msk [vmem:[#allocation3] sm:$0xff] %vm2489, 0
        %2491 = vst.msk [vmem:[#allocation3 + $0x88] sm:$0xff] %vm2489, 0
        %v2492 = vpack.c.bf16 %v2458, %v2457
        %v2493 = vpack.c.bf16 %v2460, %v2459
        %v2494 = vpack.c.bf16 %v2462, %v2461
        %v2495 = vpack.c.bf16 %v2464, %v2463
        %v2496 = vpack.c.bf16 %v2466, %v2465
        %v2497 = vpack.c.bf16 %v2468, %v2467
        %v2498 = vpack.c.bf16 %v2470, %v2469
        %v2499 = vpack.c.bf16 %v2472, %v2471
        %v2500 = vpack.c.bf16 %v2474, %v2473
        %v2501 = vpack.c.bf16 %v2476, %v2475
        %v2502 = vpack.c.bf16 %v2478, %v2477
        %v2503 = vpack.c.bf16 %v2480, %v2479
        %v2504 = vpack.c.bf16 %v2482, %v2481
        %v2505 = vpack.c.bf16 %v2484, %v2483
        %v2506 = vpack.c.bf16 %v2486, %v2485
        %v2507 = vpack.c.bf16 %v2488, %v2487
        %2524 = vrot.lane.b32.xlu0 %v2492, 8
        %v2525 = vpop.permute.xlu0 %2524
        %2526 = vrot.lane.b32.xlu0 %v2493, 8
        %v2527 = vpop.permute.xlu0 %2526
        %2528 = vrot.lane.b32.xlu0 %v2494, 8
        %v2529 = vpop.permute.xlu0 %2528
        %2530 = vrot.lane.b32.xlu0 %v2495, 8
        %v2531 = vpop.permute.xlu0 %2530
        %2532 = vrot.lane.b32.xlu0 %v2496, 8
        %v2533 = vpop.permute.xlu0 %2532
        %2534 = vrot.lane.b32.xlu0 %v2497, 8
        %v2535 = vpop.permute.xlu0 %2534
        %2536 = vrot.lane.b32.xlu0 %v2498, 8
        %v2537 = vpop.permute.xlu0 %2536
        %2538 = vrot.lane.b32.xlu0 %v2499, 8
        %v2539 = vpop.permute.xlu0 %2538
        %2540 = vrot.lane.b32.xlu0 %v2500, 8
        %v2541 = vpop.permute.xlu0 %2540
        %2542 = vrot.lane.b32.xlu0 %v2501, 8
        %v2543 = vpop.permute.xlu0 %2542
        %2544 = vrot.lane.b32.xlu0 %v2502, 8
        %v2545 = vpop.permute.xlu0 %2544
        %2546 = vrot.lane.b32.xlu0 %v2503, 8
        %v2547 = vpop.permute.xlu0 %2546
        %2548 = vrot.lane.b32.xlu0 %v2504, 8
        %v2549 = vpop.permute.xlu0 %2548
        %2550 = vrot.lane.b32.xlu0 %v2505, 8
        %v2551 = vpop.permute.xlu0 %2550
        %2552 = vrot.lane.b32.xlu0 %v2506, 8
        %v2553 = vpop.permute.xlu0 %2552
        %2554 = vrot.lane.b32.xlu0 %v2507, 8
        %v2555 = vpop.permute.xlu0 %2554
        %vm2572 = vcmask 130112
        %2573 = vst.msk [vmem:[#allocation3 + $0x8] sm:$0xff] %vm2572, %v2525
        %2574 = vst.msk [vmem:[#allocation3 + $0x10] sm:$0xff] %vm2572, %v2527
        %2575 = vst.msk [vmem:[#allocation3 + $0x18] sm:$0xff] %vm2572, %v2529
        %2576 = vst.msk [vmem:[#allocation3 + $0x20] sm:$0xff] %vm2572, %v2531
        %2577 = vst.msk [vmem:[#allocation3 + $0x28] sm:$0xff] %vm2572, %v2533
        %2578 = vst.msk [vmem:[#allocation3 + $0x30] sm:$0xff] %vm2572, %v2535
        %2579 = vst.msk [vmem:[#allocation3 + $0x38] sm:$0xff] %vm2572, %v2537
        %2580 = vst.msk [vmem:[#allocation3 + $0x40] sm:$0xff] %vm2572, %v2539
        %2581 = vst.msk [vmem:[#allocation3 + $0x48] sm:$0xff] %vm2572, %v2541
        %2582 = vst.msk [vmem:[#allocation3 + $0x50] sm:$0xff] %vm2572, %v2543
        %2583 = vst.msk [vmem:[#allocation3 + $0x58] sm:$0xff] %vm2572, %v2545
        %2584 = vst.msk [vmem:[#allocation3 + $0x60] sm:$0xff] %vm2572, %v2547
        %2585 = vst.msk [vmem:[#allocation3 + $0x68] sm:$0xff] %vm2572, %v2549
        %2586 = vst.msk [vmem:[#allocation3 + $0x70] sm:$0xff] %vm2572, %v2551
        %2587 = vst.msk [vmem:[#allocation3 + $0x78] sm:$0xff] %vm2572, %v2553
        %2588 = vst.msk [vmem:[#allocation3 + $0x80] sm:$0xff] %vm2572, %v2555
        %v2589 = vrot.slane %v2457, 7
        %v2590 = vrot.slane %v2458, 7
        %v2591 = vrot.slane %v2459, 7
        %v2592 = vrot.slane %v2460, 7
        %v2593 = vrot.slane %v2461, 7
        %v2594 = vrot.slane %v2462, 7
        %v2595 = vrot.slane %v2463, 7
        %v2596 = vrot.slane %v2464, 7
        %v2597 = vrot.slane %v2465, 7
        %v2598 = vrot.slane %v2466, 7
        %v2599 = vrot.slane %v2467, 7
        %v2600 = vrot.slane %v2468, 7
        %v2601 = vrot.slane %v2469, 7
        %v2602 = vrot.slane %v2470, 7
        %v2603 = vrot.slane %v2471, 7
        %v2604 = vrot.slane %v2472, 7
        %v2605 = vrot.slane %v2473, 7
        %v2606 = vrot.slane %v2474, 7
        %v2607 = vrot.slane %v2475, 7
        %v2608 = vrot.slane %v2476, 7
        %v2609 = vrot.slane %v2477, 7
        %v2610 = vrot.slane %v2478, 7
        %v2611 = vrot.slane %v2479, 7
        %v2612 = vrot.slane %v2480, 7
        %v2613 = vrot.slane %v2481, 7
        %v2614 = vrot.slane %v2482, 7
        %v2615 = vrot.slane %v2483, 7
        %v2616 = vrot.slane %v2484, 7
        %v2617 = vrot.slane %v2485, 7
        %v2618 = vrot.slane %v2486, 7
        %v2619 = vrot.slane %v2487, 7
        %v2620 = vrot.slane %v2488, 7
        %v2621 = vsel %vm962, %v2619, %v2620
        %v2622 = vsel %vm962, %v2618, %v2619
        %v2623 = vsel %vm962, %v2617, %v2618
        %v2624 = vsel %vm962, %v2616, %v2617
        %v2625 = vsel %vm962, %v2615, %v2616
        %v2626 = vsel %vm962, %v2614, %v2615
        %v2627 = vsel %vm962, %v2613, %v2614
        %v2628 = vsel %vm962, %v2612, %v2613
        %v2629 = vsel %vm962, %v2611, %v2612
        %v2630 = vsel %vm962, %v2610, %v2611
        %v2631 = vsel %vm962, %v2609, %v2610
        %v2632 = vsel %vm962, %v2608, %v2609
        %v2633 = vsel %vm962, %v2607, %v2608
        %v2634 = vsel %vm962, %v2606, %v2607
        %v2635 = vsel %vm962, %v2605, %v2606
        %v2636 = vsel %vm962, %v2604, %v2605
        %v2637 = vsel %vm962, %v2603, %v2604
        %v2638 = vsel %vm962, %v2602, %v2603
        %v2639 = vsel %vm962, %v2601, %v2602
        %v2640 = vsel %vm962, %v2600, %v2601
        %v2641 = vsel %vm962, %v2599, %v2600
        %v2642 = vsel %vm962, %v2598, %v2599
        %v2643 = vsel %vm962, %v2597, %v2598
        %v2644 = vsel %vm962, %v2596, %v2597
        %v2645 = vsel %vm962, %v2595, %v2596
        %v2646 = vsel %vm962, %v2594, %v2595
        %v2647 = vsel %vm962, %v2593, %v2594
        %v2648 = vsel %vm962, %v2592, %v2593
        %v2649 = vsel %vm962, %v2591, %v2592
        %v2650 = vsel %vm962, %v2590, %v2591
        %v2651 = vsel %vm962, %v2589, %v2590
        %v2652 = vsel %vm962, %v2620, %v2589
        %v2653 = vsel %vm1027, 0.0, %v2652
        %v2654 = vsel %vm1028, 0.0, %v2651
        %v2655 = vsel %vm1029, 0.0, %v2650
        %v2656 = vsel %vm1030, 0.0, %v2649
        %v2657 = vsel %vm1031, 0.0, %v2648
        %v2658 = vsel %vm1032, 0.0, %v2647
        %v2659 = vsel %vm1033, 0.0, %v2646
        %v2660 = vsel %vm1034, 0.0, %v2645
        %v2661 = vsel %vm1035, 0.0, %v2644
        %v2662 = vsel %vm1036, 0.0, %v2643
        %v2663 = vsel %vm1037, 0.0, %v2642
        %v2664 = vsel %vm1038, 0.0, %v2641
        %v2665 = vsel %vm1039, 0.0, %v2640
        %v2666 = vsel %vm1040, 0.0, %v2639
        %v2667 = vsel %vm1041, 0.0, %v2638
        %v2668 = vsel %vm1042, 0.0, %v2637
        %v2669 = vsel %vm1043, 0.0, %v2636
        %v2670 = vsel %vm1044, 0.0, %v2635
        %v2671 = vsel %vm1045, 0.0, %v2634
        %v2672 = vsel %vm1046, 0.0, %v2633
        %v2673 = vsel %vm1047, 0.0, %v2632
        %v2674 = vsel %vm1048, 0.0, %v2631
        %v2675 = vsel %vm1049, 0.0, %v2630
        %v2676 = vsel %vm1050, 0.0, %v2629
        %v2677 = vsel %vm1051, 0.0, %v2628
        %v2678 = vsel %vm1052, 0.0, %v2627
        %v2679 = vsel %vm1053, 0.0, %v2626
        %v2680 = vsel %vm1054, 0.0, %v2625
        %v2681 = vsel %vm1055, 0.0, %v2624
        %v2682 = vsel %vm1056, 0.0, %v2623
        %v2683 = vsel %vm1057, 0.0, %v2622
        %v2684 = vsel %vm1058, 0.0, %v2621
        %v2685 = vpack.c.bf16 %v2654, %v2653
        %v2686 = vpack.c.bf16 %v2656, %v2655
        %v2687 = vpack.c.bf16 %v2658, %v2657
        %v2688 = vpack.c.bf16 %v2660, %v2659
        %v2689 = vpack.c.bf16 %v2662, %v2661
        %v2690 = vpack.c.bf16 %v2664, %v2663
        %v2691 = vpack.c.bf16 %v2666, %v2665
        %v2692 = vpack.c.bf16 %v2668, %v2667
        %v2693 = vpack.c.bf16 %v2670, %v2669
        %v2694 = vpack.c.bf16 %v2672, %v2671
        %v2695 = vpack.c.bf16 %v2674, %v2673
        %v2696 = vpack.c.bf16 %v2676, %v2675
        %v2697 = vpack.c.bf16 %v2678, %v2677
        %v2698 = vpack.c.bf16 %v2680, %v2679
        %v2699 = vpack.c.bf16 %v2682, %v2681
        %v2700 = vpack.c.bf16 %v2684, %v2683
        %2701 = vst.msk [vmem:[#allocation3 + $0x8] sm:$0xff] %vm1650, %v2685
        %2702 = vst.msk [vmem:[#allocation3 + $0x10] sm:$0xff] %vm1650, %v2686
        %2703 = vst.msk [vmem:[#allocation3 + $0x18] sm:$0xff] %vm1650, %v2687
        %2704 = vst.msk [vmem:[#allocation3 + $0x20] sm:$0xff] %vm1650, %v2688
        %2705 = vst.msk [vmem:[#allocation3 + $0x28] sm:$0xff] %vm1650, %v2689
        %2706 = vst.msk [vmem:[#allocation3 + $0x30] sm:$0xff] %vm1650, %v2690
        %2707 = vst.msk [vmem:[#allocation3 + $0x38] sm:$0xff] %vm1650, %v2691
        %2708 = vst.msk [vmem:[#allocation3 + $0x40] sm:$0xff] %vm1650, %v2692
        %2709 = vst.msk [vmem:[#allocation3 + $0x48] sm:$0xff] %vm1650, %v2693
        %2710 = vst.msk [vmem:[#allocation3 + $0x50] sm:$0xff] %vm1650, %v2694
        %2711 = vst.msk [vmem:[#allocation3 + $0x58] sm:$0xff] %vm1650, %v2695
        %2712 = vst.msk [vmem:[#allocation3 + $0x60] sm:$0xff] %vm1650, %v2696
        %2713 = vst.msk [vmem:[#allocation3 + $0x68] sm:$0xff] %vm1650, %v2697
        %2714 = vst.msk [vmem:[#allocation3 + $0x70] sm:$0xff] %vm1650, %v2698
        %2715 = vst.msk [vmem:[#allocation3 + $0x78] sm:$0xff] %vm1650, %v2699
        %2716 = vst.msk [vmem:[#allocation3 + $0x80] sm:$0xff] %vm1650, %v2700
        %v2717 = vrot.slane %v2457, 1
        %v2718 = vrot.slane %v2458, 1
        %v2719 = vrot.slane %v2459, 1
        %v2720 = vrot.slane %v2460, 1
        %v2721 = vrot.slane %v2461, 1
        %v2722 = vrot.slane %v2462, 1
        %v2723 = vrot.slane %v2463, 1
        %v2724 = vrot.slane %v2464, 1
        %v2725 = vrot.slane %v2465, 1
        %v2726 = vrot.slane %v2466, 1
        %v2727 = vrot.slane %v2467, 1
        %v2728 = vrot.slane %v2468, 1
        %v2729 = vrot.slane %v2469, 1
        %v2730 = vrot.slane %v2470, 1
        %v2731 = vrot.slane %v2471, 1
        %v2732 = vrot.slane %v2472, 1
        %v2733 = vrot.slane %v2473, 1
        %v2734 = vrot.slane %v2474, 1
        %v2735 = vrot.slane %v2475, 1
        %v2736 = vrot.slane %v2476, 1
        %v2737 = vrot.slane %v2477, 1
        %v2738 = vrot.slane %v2478, 1
        %v2739 = vrot.slane %v2479, 1
        %v2740 = vrot.slane %v2480, 1
        %v2741 = vrot.slane %v2481, 1
        %v2742 = vrot.slane %v2482, 1
        %v2743 = vrot.slane %v2483, 1
        %v2744 = vrot.slane %v2484, 1
        %v2745 = vrot.slane %v2485, 1
        %v2746 = vrot.slane %v2486, 1
        %v2747 = vrot.slane %v2487, 1
        %v2748 = vrot.slane %v2488, 1
        %v2749 = vsel %vm1188, %v2747, %v2748
        %v2750 = vsel %vm1188, %v2746, %v2747
        %v2751 = vsel %vm1188, %v2745, %v2746
        %v2752 = vsel %vm1188, %v2744, %v2745
        %v2753 = vsel %vm1188, %v2743, %v2744
        %v2754 = vsel %vm1188, %v2742, %v2743
        %v2755 = vsel %vm1188, %v2741, %v2742
        %v2756 = vsel %vm1188, %v2740, %v2741
        %v2757 = vsel %vm1188, %v2739, %v2740
        %v2758 = vsel %vm1188, %v2738, %v2739
        %v2759 = vsel %vm1188, %v2737, %v2738
        %v2760 = vsel %vm1188, %v2736, %v2737
        %v2761 = vsel %vm1188, %v2735, %v2736
        %v2762 = vsel %vm1188, %v2734, %v2735
        %v2763 = vsel %vm1188, %v2733, %v2734
        %v2764 = vsel %vm1188, %v2732, %v2733
        %v2765 = vsel %vm1188, %v2731, %v2732
        %v2766 = vsel %vm1188, %v2730, %v2731
        %v2767 = vsel %vm1188, %v2729, %v2730
        %v2768 = vsel %vm1188, %v2728, %v2729
        %v2769 = vsel %vm1188, %v2727, %v2728
        %v2770 = vsel %vm1188, %v2726, %v2727
        %v2771 = vsel %vm1188, %v2725, %v2726
        %v2772 = vsel %vm1188, %v2724, %v2725
        %v2773 = vsel %vm1188, %v2723, %v2724
        %v2774 = vsel %vm1188, %v2722, %v2723
        %v2775 = vsel %vm1188, %v2721, %v2722
        %v2776 = vsel %vm1188, %v2720, %v2721
        %v2777 = vsel %vm1188, %v2719, %v2720
        %v2778 = vsel %vm1188, %v2718, %v2719
        %v2779 = vsel %vm1188, %v2717, %v2718
        %v2780 = vsel %vm1188, %v2748, %v2717
        %v2781 = vsel %vm1253, 0.0, %v2779
        %v2782 = vsel %vm1254, 0.0, %v2778
        %v2783 = vsel %vm1255, 0.0, %v2777
        %v2784 = vsel %vm1256, 0.0, %v2776
        %v2785 = vsel %vm1257, 0.0, %v2775
        %v2786 = vsel %vm1258, 0.0, %v2774
        %v2787 = vsel %vm1259, 0.0, %v2773
        %v2788 = vsel %vm1260, 0.0, %v2772
        %v2789 = vsel %vm1261, 0.0, %v2771
        %v2790 = vsel %vm1262, 0.0, %v2770
        %v2791 = vsel %vm1263, 0.0, %v2769
        %v2792 = vsel %vm1264, 0.0, %v2768
        %v2793 = vsel %vm1265, 0.0, %v2767
        %v2794 = vsel %vm1266, 0.0, %v2766
        %v2795 = vsel %vm1267, 0.0, %v2765
        %v2796 = vsel %vm1268, 0.0, %v2764
        %v2797 = vsel %vm1269, 0.0, %v2763
        %v2798 = vsel %vm1270, 0.0, %v2762
        %v2799 = vsel %vm1271, 0.0, %v2761
        %v2800 = vsel %vm1272, 0.0, %v2760
        %v2801 = vsel %vm1273, 0.0, %v2759
        %v2802 = vsel %vm1274, 0.0, %v2758
        %v2803 = vsel %vm1275, 0.0, %v2757
        %v2804 = vsel %vm1276, 0.0, %v2756
        %v2805 = vsel %vm1277, 0.0, %v2755
        %v2806 = vsel %vm1278, 0.0, %v2754
        %v2807 = vsel %vm1279, 0.0, %v2753
        %v2808 = vsel %vm1280, 0.0, %v2752
        %v2809 = vsel %vm1281, 0.0, %v2751
        %v2810 = vsel %vm1282, 0.0, %v2750
        %v2811 = vsel %vm1283, 0.0, %v2749
        %v2812 = vsel %vm1284, 0.0, %v2780
        %v2813 = vpack.c.bf16 %v2782, %v2781
        %v2814 = vpack.c.bf16 %v2784, %v2783
        %v2815 = vpack.c.bf16 %v2786, %v2785
        %v2816 = vpack.c.bf16 %v2788, %v2787
        %v2817 = vpack.c.bf16 %v2790, %v2789
        %v2818 = vpack.c.bf16 %v2792, %v2791
        %v2819 = vpack.c.bf16 %v2794, %v2793
        %v2820 = vpack.c.bf16 %v2796, %v2795
        %v2821 = vpack.c.bf16 %v2798, %v2797
        %v2822 = vpack.c.bf16 %v2800, %v2799
        %v2823 = vpack.c.bf16 %v2802, %v2801
        %v2824 = vpack.c.bf16 %v2804, %v2803
        %v2825 = vpack.c.bf16 %v2806, %v2805
        %v2826 = vpack.c.bf16 %v2808, %v2807
        %v2827 = vpack.c.bf16 %v2810, %v2809
        %v2828 = vpack.c.bf16 %v2812, %v2811
        %2845 = vrot.lane.b32.xlu0 %v2813, 16
        %v2846 = vpop.permute.xlu0 %2845
        %2847 = vrot.lane.b32.xlu0 %v2814, 16
        %v2848 = vpop.permute.xlu0 %2847
        %2849 = vrot.lane.b32.xlu0 %v2815, 16
        %v2850 = vpop.permute.xlu0 %2849
        %2851 = vrot.lane.b32.xlu0 %v2816, 16
        %v2852 = vpop.permute.xlu0 %2851
        %2853 = vrot.lane.b32.xlu0 %v2817, 16
        %v2854 = vpop.permute.xlu0 %2853
        %2855 = vrot.lane.b32.xlu0 %v2818, 16
        %v2856 = vpop.permute.xlu0 %2855
        %2857 = vrot.lane.b32.xlu0 %v2819, 16
        %v2858 = vpop.permute.xlu0 %2857
        %2859 = vrot.lane.b32.xlu0 %v2820, 16
        %v2860 = vpop.permute.xlu0 %2859
        %2861 = vrot.lane.b32.xlu0 %v2821, 16
        %v2862 = vpop.permute.xlu0 %2861
        %2863 = vrot.lane.b32.xlu0 %v2822, 16
        %v2864 = vpop.permute.xlu0 %2863
        %2865 = vrot.lane.b32.xlu0 %v2823, 16
        %v2866 = vpop.permute.xlu0 %2865
        %2867 = vrot.lane.b32.xlu0 %v2824, 16
        %v2868 = vpop.permute.xlu0 %2867
        %2869 = vrot.lane.b32.xlu0 %v2825, 16
        %v2870 = vpop.permute.xlu0 %2869
        %2871 = vrot.lane.b32.xlu0 %v2826, 16
        %v2872 = vpop.permute.xlu0 %2871
        %2873 = vrot.lane.b32.xlu0 %v2827, 16
        %v2874 = vpop.permute.xlu0 %2873
        %2875 = vrot.lane.b32.xlu0 %v2828, 16
        %v2876 = vpop.permute.xlu0 %2875
        %vm2893 = vcmask 195712
        %2894 = vst.msk [vmem:[#allocation3 + $0x8] sm:$0xff] %vm2893, %v2846
        %2895 = vst.msk [vmem:[#allocation3 + $0x10] sm:$0xff] %vm2893, %v2848
        %2896 = vst.msk [vmem:[#allocation3 + $0x18] sm:$0xff] %vm2893, %v2850
        %2897 = vst.msk [vmem:[#allocation3 + $0x20] sm:$0xff] %vm2893, %v2852
        %2898 = vst.msk [vmem:[#allocation3 + $0x28] sm:$0xff] %vm2893, %v2854
        %2899 = vst.msk [vmem:[#allocation3 + $0x30] sm:$0xff] %vm2893, %v2856
        %2900 = vst.msk [vmem:[#allocation3 + $0x38] sm:$0xff] %vm2893, %v2858
        %2901 = vst.msk [vmem:[#allocation3 + $0x40] sm:$0xff] %vm2893, %v2860
        %2902 = vst.msk [vmem:[#allocation3 + $0x48] sm:$0xff] %vm2893, %v2862
        %2903 = vst.msk [vmem:[#allocation3 + $0x50] sm:$0xff] %vm2893, %v2864
        %2904 = vst.msk [vmem:[#allocation3 + $0x58] sm:$0xff] %vm2893, %v2866
        %2905 = vst.msk [vmem:[#allocation3 + $0x60] sm:$0xff] %vm2893, %v2868
        %2906 = vst.msk [vmem:[#allocation3 + $0x68] sm:$0xff] %vm2893, %v2870
        %2907 = vst.msk [vmem:[#allocation3 + $0x70] sm:$0xff] %vm2893, %v2872
        %2908 = vst.msk [vmem:[#allocation3 + $0x78] sm:$0xff] %vm2893, %v2874
        %2909 = vst.msk [vmem:[#allocation3 + $0x80] sm:$0xff] %vm2893, %v2876
      $region52: #{tpu_custom_call.1} parent=47 // pred_fallthru
        _
      %v2910 = vld [vmem:[#allocation3] sm:$0xff]
      %v2911 = vld [vmem:[#allocation3 + $0x8] sm:$0xff]
      %v2912 = vld [vmem:[#allocation3 + $0x10] sm:$0xff]
      %v2913 = vld [vmem:[#allocation3 + $0x18] sm:$0xff]
      %v2914 = vld [vmem:[#allocation3 + $0x20] sm:$0xff]
      %v2915 = vld [vmem:[#allocation3 + $0x28] sm:$0xff]
      %v2916 = vld [vmem:[#allocation3 + $0x30] sm:$0xff]
      %v2917 = vld [vmem:[#allocation3 + $0x38] sm:$0xff]
      %v2918 = vld [vmem:[#allocation3 + $0x40] sm:$0xff]
      %v2919 = vld [vmem:[#allocation3 + $0x48] sm:$0xff]
      %v2920 = vld [vmem:[#allocation3 + $0x50] sm:$0xff]
      %v2921 = vld [vmem:[#allocation3 + $0x58] sm:$0xff]
      %v2922 = vld [vmem:[#allocation3 + $0x60] sm:$0xff]
      %v2923 = vld [vmem:[#allocation3 + $0x68] sm:$0xff]
      %v2924 = vld [vmem:[#allocation3 + $0x70] sm:$0xff]
      %v2925 = vld [vmem:[#allocation3 + $0x78] sm:$0xff]
      %v2926 = vld [vmem:[%s329] sm:$0xf]
      %v2927 = vld [vmem:[%s329 + $0x4] sm:$0xf]
      %v2928 = vld [vmem:[%s329 + $0x8] sm:$0xf]
      %v2932 = vunpack.c.l.b16 %v2926
      %v2933 = vunpack.c.l.b16 %v2927
      %v2934 = vunpack.c.l.b16 %v2928
      %v2935 = vpack.c.b16 %v2933, %v2932
      %v2936 = vpack.c.b16 %v2934, %v2934
      %vm2938 = vcmask 195584
      %v2940 = vsel %vm2938, %v2910, 0
      %v2943 = vsel %vm2938, %v2911, 0
      %v2946 = vsel %vm2938, %v2912, 0
      %v2949 = vsel %vm2938, %v2913, 0
      %v2952 = vsel %vm2938, %v2914, 0
      %v2955 = vsel %vm2938, %v2915, 0
      %v2958 = vsel %vm2938, %v2916, 0
      %v2961 = vsel %vm2938, %v2917, 0
      %v2964 = vsel %vm2938, %v2918, 0
      %v2967 = vsel %vm2938, %v2919, 0
      %v2970 = vsel %vm2938, %v2920, 0
      %v2973 = vsel %vm2938, %v2921, 0
      %v2976 = vsel %vm2938, %v2922, 0
      %v2979 = vsel %vm2938, %v2923, 0
      %v2982 = vsel %vm2938, %v2924, 0
      %v2985 = vsel %vm2938, %v2925, 0
      %vm2987 = vcmask 1043456
      %v2989 = vsel %vm2987, %v2936, 0
      %2991 = vmatprep.subr.bf16.mxu0 0
      %2992 = vmatpush1.bf16.msra.mxu0 %v2935
      %2993 = vmatprep.subr.bf16.mxu0 0
      %2994 = vmatpush1.bf16.msra.mxu0 %v2989
      %2995 = vmatprep.subr.bf16.mxu0 0
      %2996 = vmatpush1.bf16.msra.mxu0 0
      %2997 = vmatprep.subr.bf16.mxu0 0
      %2998 = vmatpush1.bf16.msra.mxu0 0
      %2999 = vmatprep.subr.bf16.mxu0 0
      %3000 = vmatpush1.bf16.msra.mxu0 0
      %3001 = vmatprep.subr.bf16.mxu0 0
      %3002 = vmatpush1.bf16.msra.mxu0 0
      %3003 = vmatprep.subr.bf16.mxu0 0
      %3004 = vmatpush1.bf16.msra.mxu0 0
      %3005 = vmatprep.subr.bf16.mxu0 0
      %3006 = vmatpush1.bf16.msra.mxu0 0
      %3007 = vmatprep.subr.bf16.mxu0 0
      %3008 = vmatpush1.bf16.msra.mxu0 0
      %3009 = vmatprep.subr.bf16.mxu0 0
      %3010 = vmatpush1.bf16.msra.mxu0 0
      %3011 = vmatprep.subr.bf16.mxu0 0
      %3012 = vmatpush1.bf16.msra.mxu0 0
      %3013 = vmatprep.subr.bf16.mxu0 0
      %3014 = vmatpush1.bf16.msra.mxu0 0
      %3015 = vmatprep.subr.bf16.mxu0 0
      %3016 = vmatpush1.bf16.msra.mxu0 0
      %3017 = vmatprep.subr.bf16.mxu0 0
      %3018 = vmatpush1.bf16.msra.mxu0 0
      %3019 = vmatprep.subr.bf16.mxu0 0
      %3020 = vmatpush1.bf16.msra.mxu0 0
      %3021 = vmatprep.subr.bf16.mxu0 0
      %3022 = vmatpush1.bf16.msra.mxu0 0
      %3023 = vmatprep.mubr.bf16.mxu0 0
      %3024 = vmatmul.mubr.bf16.gmra.mrb[0].mxu0 %v2940
      %v3025 = vpop.f32.mrb[0].mxu0
      %v3026 = vadd.f32 0.0, %v3025
      %v3027 = vpop.f32.mrb[0].mxu0
      %v3028 = vpop.f32.mrb[0].mxu0
      %v3029 = vadd.f32 0.0, %v3028
      %v3030 = vpop.f32.mrb[0].mxu0
      %3031 = vmatprep.mubr.bf16.mxu0 0
      %3032 = vmatmul.mubr.bf16.gmra.mrb[0].mxu0 %v2943
      %v3033 = vpop.f32.mrb[0].mxu0
      %v3034 = vadd.f32 0.0, %v3033
      %v3035 = vpop.f32.mrb[0].mxu0
      %v3036 = vpop.f32.mrb[0].mxu0
      %v3037 = vadd.f32 0.0, %v3036
      %v3038 = vpop.f32.mrb[0].mxu0
      %3039 = vmatprep.mubr.bf16.mxu0 0
      %3040 = vmatmul.mubr.bf16.gmra.mrb[0].mxu0 %v2946
      %v3041 = vpop.f32.mrb[0].mxu0
      %v3042 = vadd.f32 0.0, %v3041
      %v3043 = vpop.f32.mrb[0].mxu0
      %v3044 = vpop.f32.mrb[0].mxu0
      %v3045 = vadd.f32 0.0, %v3044
      %v3046 = vpop.f32.mrb[0].mxu0
      %3047 = vmatprep.mubr.bf16.mxu0 0
      %3048 = vmatmul.mubr.bf16.gmra.mrb[0].mxu0 %v2949
      %v3049 = vpop.f32.mrb[0].mxu0
      %v3050 = vadd.f32 0.0, %v3049
      %v3051 = vpop.f32.mrb[0].mxu0
      %v3052 = vpop.f32.mrb[0].mxu0
      %v3053 = vadd.f32 0.0, %v3052
      %v3054 = vpop.f32.mrb[0].mxu0
      %3055 = vmatprep.mubr.bf16.mxu0 0
      %3056 = vmatmul.mubr.bf16.gmra.mrb[0].mxu0 %v2952
      %v3057 = vpop.f32.mrb[0].mxu0
      %v3058 = vadd.f32 0.0, %v3057
      %v3059 = vpop.f32.mrb[0].mxu0
      %v3060 = vpop.f32.mrb[0].mxu0
      %v3061 = vadd.f32 0.0, %v3060
      %v3062 = vpop.f32.mrb[0].mxu0
      %3063 = vmatprep.mubr.bf16.mxu0 0
      %3064 = vmatmul.mubr.bf16.gmra.mrb[0].mxu0 %v2955
      %v3065 = vpop.f32.mrb[0].mxu0
      %v3066 = vadd.f32 0.0, %v3065
      %v3067 = vpop.f32.mrb[0].mxu0
      %v3068 = vpop.f32.mrb[0].mxu0
      %v3069 = vadd.f32 0.0, %v3068
      %v3070 = vpop.f32.mrb[0].mxu0
      %3071 = vmatprep.mubr.bf16.mxu0 0
      %3072 = vmatmul.mubr.bf16.gmra.mrb[0].mxu0 %v2958
      %v3073 = vpop.f32.mrb[0].mxu0
      %v3074 = vadd.f32 0.0, %v3073
      %v3075 = vpop.f32.mrb[0].mxu0
      %v3076 = vpop.f32.mrb[0].mxu0
      %v3077 = vadd.f32 0.0, %v3076
      %v3078 = vpop.f32.mrb[0].mxu0
      %3079 = vmatprep.mubr.bf16.mxu0 0
      %3080 = vmatmul.mubr.bf16.gmra.mrb[0].mxu0 %v2961
      %v3081 = vpop.f32.mrb[0].mxu0
      %v3082 = vadd.f32 0.0, %v3081
      %v3083 = vpop.f32.mrb[0].mxu0
      %v3084 = vpop.f32.mrb[0].mxu0
      %v3085 = vadd.f32 0.0, %v3084
      %v3086 = vpop.f32.mrb[0].mxu0
      %3087 = vmatprep.mubr.bf16.mxu0 0
      %3088 = vmatmul.mubr.bf16.gmra.mrb[0].mxu0 %v2964
      %v3089 = vpop.f32.mrb[0].mxu0
      %v3090 = vadd.f32 0.0, %v3089
      %v3091 = vpop.f32.mrb[0].mxu0
      %v3092 = vpop.f32.mrb[0].mxu0
      %v3093 = vadd.f32 0.0, %v3092
      %v3094 = vpop.f32.mrb[0].mxu0
      %3095 = vmatprep.mubr.bf16.mxu0 0
      %3096 = vmatmul.mubr.bf16.gmra.mrb[0].mxu0 %v2967
      %v3097 = vpop.f32.mrb[0].mxu0
      %v3098 = vadd.f32 0.0, %v3097
      %v3099 = vpop.f32.mrb[0].mxu0
      %v3100 = vpop.f32.mrb[0].mxu0
      %v3101 = vadd.f32 0.0, %v3100
      %v3102 = vpop.f32.mrb[0].mxu0
      %3103 = vmatprep.mubr.bf16.mxu0 0
      %3104 = vmatmul.mubr.bf16.gmra.mrb[0].mxu0 %v2970
      %v3105 = vpop.f32.mrb[0].mxu0
      %v3106 = vadd.f32 0.0, %v3105
      %v3107 = vpop.f32.mrb[0].mxu0
      %v3108 = vpop.f32.mrb[0].mxu0
      %v3109 = vadd.f32 0.0, %v3108
      %v3110 = vpop.f32.mrb[0].mxu0
      %3111 = vmatprep.mubr.bf16.mxu0 0
      %3112 = vmatmul.mubr.bf16.gmra.mrb[0].mxu0 %v2973
      %v3113 = vpop.f32.mrb[0].mxu0
      %v3114 = vadd.f32 0.0, %v3113
      %v3115 = vpop.f32.mrb[0].mxu0
      %v3116 = vpop.f32.mrb[0].mxu0
      %v3117 = vadd.f32 0.0, %v3116
      %v3118 = vpop.f32.mrb[0].mxu0
      %3119 = vmatprep.mubr.bf16.mxu0 0
      %3120 = vmatmul.mubr.bf16.gmra.mrb[0].mxu0 %v2976
      %v3121 = vpop.f32.mrb[0].mxu0
      %v3122 = vadd.f32 0.0, %v3121
      %v3123 = vpop.f32.mrb[0].mxu0
      %v3124 = vpop.f32.mrb[0].mxu0
      %v3125 = vadd.f32 0.0, %v3124
      %v3126 = vpop.f32.mrb[0].mxu0
      %3127 = vmatprep.mubr.bf16.mxu0 0
      %3128 = vmatmul.mubr.bf16.gmra.mrb[0].mxu0 %v2979
      %v3129 = vpop.f32.mrb[0].mxu0
      %v3130 = vadd.f32 0.0, %v3129
      %v3131 = vpop.f32.mrb[0].mxu0
      %v3132 = vpop.f32.mrb[0].mxu0
      %v3133 = vadd.f32 0.0, %v3132
      %v3134 = vpop.f32.mrb[0].mxu0
      %3135 = vmatprep.mubr.bf16.mxu0 0
      %3136 = vmatmul.mubr.bf16.gmra.mrb[0].mxu0 %v2982
      %v3137 = vpop.f32.mrb[0].mxu0
      %v3138 = vadd.f32 0.0, %v3137
      %v3139 = vpop.f32.mrb[0].mxu0
      %v3140 = vpop.f32.mrb[0].mxu0
      %v3141 = vadd.f32 0.0, %v3140
      %v3142 = vpop.f32.mrb[0].mxu0
      %3143 = vmatprep.mubr.bf16.mxu0 0
      %3144 = vmatmul.mubr.bf16.gmra.mrb[0].mxu0 %v2985
      %v3145 = vpop.f32.mrb[0].mxu0
      %v3146 = vadd.f32 0.0, %v3145
      %v3147 = vpop.f32.mrb[0].mxu0
      %v3148 = vpop.f32.mrb[0].mxu0
      %v3149 = vadd.f32 0.0, %v3148
      %v3150 = vpop.f32.mrb[0].mxu0
      %3151 = vdwg.mxu0
      %vm3152 = vcmask 64512
      %3153 = vst.msk [vmem:[#allocation5] sm:$0xff] %vm3152, %v3026
      %3154 = vst.msk [vmem:[#allocation5 + $0x8] sm:$0xff] %vm3152, %v3029
      %3155 = vst.msk [vmem:[#allocation5 + $0x10] sm:$0xff] %vm3152, %v3034
      %3156 = vst.msk [vmem:[#allocation5 + $0x18] sm:$0xff] %vm3152, %v3037
      %3157 = vst.msk [vmem:[#allocation5 + $0x20] sm:$0xff] %vm3152, %v3042
      %3158 = vst.msk [vmem:[#allocation5 + $0x28] sm:$0xff] %vm3152, %v3045
      %3159 = vst.msk [vmem:[#allocation5 + $0x30] sm:$0xff] %vm3152, %v3050
      %3160 = vst.msk [vmem:[#allocation5 + $0x38] sm:$0xff] %vm3152, %v3053
      %3161 = vst.msk [vmem:[#allocation5 + $0x40] sm:$0xff] %vm3152, %v3058
      %3162 = vst.msk [vmem:[#allocation5 + $0x48] sm:$0xff] %vm3152, %v3061
      %3163 = vst.msk [vmem:[#allocation5 + $0x50] sm:$0xff] %vm3152, %v3066
      %3164 = vst.msk [vmem:[#allocation5 + $0x58] sm:$0xff] %vm3152, %v3069
      %3165 = vst.msk [vmem:[#allocation5 + $0x60] sm:$0xff] %vm3152, %v3074
      %3166 = vst.msk [vmem:[#allocation5 + $0x68] sm:$0xff] %vm3152, %v3077
      %3167 = vst.msk [vmem:[#allocation5 + $0x70] sm:$0xff] %vm3152, %v3082
      %3168 = vst.msk [vmem:[#allocation5 + $0x78] sm:$0xff] %vm3152, %v3085
      %3169 = vst.msk [vmem:[#allocation5 + $0x80] sm:$0xff] %vm3152, %v3090
      %3170 = vst.msk [vmem:[#allocation5 + $0x88] sm:$0xff] %vm3152, %v3093
      %3171 = vst.msk [vmem:[#allocation5 + $0x90] sm:$0xff] %vm3152, %v3098
      %3172 = vst.msk [vmem:[#allocation5 + $0x98] sm:$0xff] %vm3152, %v3101
      %3173 = vst.msk [vmem:[#allocation5 + $0xa0] sm:$0xff] %vm3152, %v3106
      %3174 = vst.msk [vmem:[#allocation5 + $0xa8] sm:$0xff] %vm3152, %v3109
      %3175 = vst.msk [vmem:[#allocation5 + $0xb0] sm:$0xff] %vm3152, %v3114
      %3176 = vst.msk [vmem:[#allocation5 + $0xb8] sm:$0xff] %vm3152, %v3117
      %3177 = vst.msk [vmem:[#allocation5 + $0xc0] sm:$0xff] %vm3152, %v3122
      %3178 = vst.msk [vmem:[#allocation5 + $0xc8] sm:$0xff] %vm3152, %v3125
      %3179 = vst.msk [vmem:[#allocation5 + $0xd0] sm:$0xff] %vm3152, %v3130
      %3180 = vst.msk [vmem:[#allocation5 + $0xd8] sm:$0xff] %vm3152, %v3133
      %3181 = vst.msk [vmem:[#allocation5 + $0xe0] sm:$0xff] %vm3152, %v3138
      %3182 = vst.msk [vmem:[#allocation5 + $0xe8] sm:$0xff] %vm3152, %v3141
      %3183 = vst.msk [vmem:[#allocation5 + $0xf0] sm:$0xff] %vm3152, %v3146
      %3184 = vst.msk [vmem:[#allocation5 + $0xf8] sm:$0xff] %vm3152, %v3149
      %v3185 = vld [vmem:[#allocation3 + $0x8] sm:$0xff]
      %v3186 = vld [vmem:[#allocation3 + $0x10] sm:$0xff]
      %v3187 = vld [vmem:[#allocation3 + $0x18] sm:$0xff]
      %v3188 = vld [vmem:[#allocation3 + $0x20] sm:$0xff]
      %v3189 = vld [vmem:[#allocation3 + $0x28] sm:$0xff]
      %v3190 = vld [vmem:[#allocation3 + $0x30] sm:$0xff]
      %v3191 = vld [vmem:[#allocation3 + $0x38] sm:$0xff]
      %v3192 = vld [vmem:[#allocation3 + $0x40] sm:$0xff]
      %v3193 = vld [vmem:[#allocation3 + $0x48] sm:$0xff]
      %v3194 = vld [vmem:[#allocation3 + $0x50] sm:$0xff]
      %v3195 = vld [vmem:[#allocation3 + $0x58] sm:$0xff]
      %v3196 = vld [vmem:[#allocation3 + $0x60] sm:$0xff]
      %v3197 = vld [vmem:[#allocation3 + $0x68] sm:$0xff]
      %v3198 = vld [vmem:[#allocation3 + $0x70] sm:$0xff]
      %v3199 = vld [vmem:[#allocation3 + $0x78] sm:$0xff]
      %v3200 = vld [vmem:[#allocation3 + $0x80] sm:$0xff]
      %s3201 = scalar_lea.vmem %s329, 12
      %v3202 = vld [vmem:[%s3201] sm:$0xf]
      %v3203 = vld [vmem:[%s3201 + $0x4] sm:$0xf]
      %v3204 = vld [vmem:[%s3201 + $0x8] sm:$0xf]
      %v3208 = vunpack.c.l.b16 %v3202
      %v3209 = vunpack.c.l.b16 %v3203
      %v3210 = vunpack.c.l.b16 %v3204
      %v3211 = vpack.c.b16 %v3209, %v3208
      %v3212 = vpack.c.b16 %v3210, %v3210
      %v3215 = vsel %vm2938, %v3185, 0
      %v3218 = vsel %vm2938, %v3186, 0
      %v3221 = vsel %vm2938, %v3187, 0
      %v3224 = vsel %vm2938, %v3188, 0
      %v3227 = vsel %vm2938, %v3189, 0
      %v3230 = vsel %vm2938, %v3190, 0
      %v3233 = vsel %vm2938, %v3191, 0
      %v3236 = vsel %vm2938, %v3192, 0
      %v3239 = vsel %vm2938, %v3193, 0
      %v3242 = vsel %vm2938, %v3194, 0
      %v3245 = vsel %vm2938, %v3195, 0
      %v3248 = vsel %vm2938, %v3196, 0
      %v3251 = vsel %vm2938, %v3197, 0
      %v3254 = vsel %vm2938, %v3198, 0
      %v3257 = vsel %vm2938, %v3199, 0
      %v3260 = vsel %vm2938, %v3200, 0
      %v3263 = vsel %vm2987, %v3212, 0
      %3265 = vmatprep.subr.bf16.mxu0 0
      %3266 = vmatpush1.bf16.msra.mxu0 %v3211
      %3267 = vmatprep.subr.bf16.mxu0 0
      %3268 = vmatpush1.bf16.msra.mxu0 %v3263
      %3269 = vmatprep.subr.bf16.mxu0 0
      %3270 = vmatpush1.bf16.msra.mxu0 0
      %3271 = vmatprep.subr.bf16.mxu0 0
      %3272 = vmatpush1.bf16.msra.mxu0 0
      %3273 = vmatprep.subr.bf16.mxu0 0
      %3274 = vmatpush1.bf16.msra.mxu0 0
      %3275 = vmatprep.subr.bf16.mxu0 0
      %3276 = vmatpush1.bf16.msra.mxu0 0
      %3277 = vmatprep.subr.bf16.mxu0 0
      %3278 = vmatpush1.bf16.msra.mxu0 0
      %3279 = vmatprep.subr.bf16.mxu0 0
      %3280 = vmatpush1.bf16.msra.mxu0 0
      %3281 = vmatprep.subr.bf16.mxu0 0
      %3282 = vmatpush1.bf16.msra.mxu0 0
      %3283 = vmatprep.subr.bf16.mxu0 0
      %3284 = vmatpush1.bf16.msra.mxu0 0
      %3285 = vmatprep.subr.bf16.mxu0 0
      %3286 = vmatpush1.bf16.msra.mxu0 0
      %3287 = vmatprep.subr.bf16.mxu0 0
      %3288 = vmatpush1.bf16.msra.mxu0 0
      %3289 = vmatprep.subr.bf16.mxu0 0
      %3290 = vmatpush1.bf16.msra.mxu0 0
      %3291 = vmatprep.subr.bf16.mxu0 0
      %3292 = vmatpush1.bf16.msra.mxu0 0
      %3293 = vmatprep.subr.bf16.mxu0 0
      %3294 = vmatpush1.bf16.msra.mxu0 0
      %3295 = vmatprep.subr.bf16.mxu0 0
      %3296 = vmatpush1.bf16.msra.mxu0 0
      %3297 = vmatprep.mubr.bf16.mxu0 0
      %3298 = vmatmul.mubr.bf16.gmra.mrb[0].mxu0 %v3215
      %v3299 = vpop.f32.mrb[0].mxu0
      %v3300 = vadd.f32 0.0, %v3299
      %v3301 = vpop.f32.mrb[0].mxu0
      %v3302 = vpop.f32.mrb[0].mxu0
      %v3303 = vadd.f32 0.0, %v3302
      %v3304 = vpop.f32.mrb[0].mxu0
      %3305 = vmatprep.mubr.bf16.mxu0 0
      %3306 = vmatmul.mubr.bf16.gmra.mrb[0].mxu0 %v3218
      %v3307 = vpop.f32.mrb[0].mxu0
      %v3308 = vadd.f32 0.0, %v3307
      %v3309 = vpop.f32.mrb[0].mxu0
      %v3310 = vpop.f32.mrb[0].mxu0
      %v3311 = vadd.f32 0.0, %v3310
      %v3312 = vpop.f32.mrb[0].mxu0
      %3313 = vmatprep.mubr.bf16.mxu0 0
      %3314 = vmatmul.mubr.bf16.gmra.mrb[0].mxu0 %v3221
      %v3315 = vpop.f32.mrb[0].mxu0
      %v3316 = vadd.f32 0.0, %v3315
      %v3317 = vpop.f32.mrb[0].mxu0
      %v3318 = vpop.f32.mrb[0].mxu0
      %v3319 = vadd.f32 0.0, %v3318
      %v3320 = vpop.f32.mrb[0].mxu0
      %3321 = vmatprep.mubr.bf16.mxu0 0
      %3322 = vmatmul.mubr.bf16.gmra.mrb[0].mxu0 %v3224
      %v3323 = vpop.f32.mrb[0].mxu0
      %v3324 = vadd.f32 0.0, %v3323
      %v3325 = vpop.f32.mrb[0].mxu0
      %v3326 = vpop.f32.mrb[0].mxu0
      %v3327 = vadd.f32 0.0, %v3326
      %v3328 = vpop.f32.mrb[0].mxu0
      %3329 = vmatprep.mubr.bf16.mxu0 0
      %3330 = vmatmul.mubr.bf16.gmra.mrb[0].mxu0 %v3227
      %v3331 = vpop.f32.mrb[0].mxu0
      %v3332 = vadd.f32 0.0, %v3331
      %v3333 = vpop.f32.mrb[0].mxu0
      %v3334 = vpop.f32.mrb[0].mxu0
      %v3335 = vadd.f32 0.0, %v3334
      %v3336 = vpop.f32.mrb[0].mxu0
      %3337 = vmatprep.mubr.bf16.mxu0 0
      %3338 = vmatmul.mubr.bf16.gmra.mrb[0].mxu0 %v3230
      %v3339 = vpop.f32.mrb[0].mxu0
      %v3340 = vadd.f32 0.0, %v3339
      %v3341 = vpop.f32.mrb[0].mxu0
      %v3342 = vpop.f32.mrb[0].mxu0
      %v3343 = vadd.f32 0.0, %v3342
      %v3344 = vpop.f32.mrb[0].mxu0
      %3345 = vmatprep.mubr.bf16.mxu0 0
      %3346 = vmatmul.mubr.bf16.gmra.mrb[0].mxu0 %v3233
      %v3347 = vpop.f32.mrb[0].mxu0
      %v3348 = vadd.f32 0.0, %v3347
      %v3349 = vpop.f32.mrb[0].mxu0
      %v3350 = vpop.f32.mrb[0].mxu0
      %v3351 = vadd.f32 0.0, %v3350
      %v3352 = vpop.f32.mrb[0].mxu0
      %3353 = vmatprep.mubr.bf16.mxu0 0
      %3354 = vmatmul.mubr.bf16.gmra.mrb[0].mxu0 %v3236
      %v3355 = vpop.f32.mrb[0].mxu0
      %v3356 = vadd.f32 0.0, %v3355
      %v3357 = vpop.f32.mrb[0].mxu0
      %v3358 = vpop.f32.mrb[0].mxu0
      %v3359 = vadd.f32 0.0, %v3358
      %v3360 = vpop.f32.mrb[0].mxu0
      %3361 = vmatprep.mubr.bf16.mxu0 0
      %3362 = vmatmul.mubr.bf16.gmra.mrb[0].mxu0 %v3239
      %v3363 = vpop.f32.mrb[0].mxu0
      %v3364 = vadd.f32 0.0, %v3363
      %v3365 = vpop.f32.mrb[0].mxu0
      %v3366 = vpop.f32.mrb[0].mxu0
      %v3367 = vadd.f32 0.0, %v3366
      %v3368 = vpop.f32.mrb[0].mxu0
      %3369 = vmatprep.mubr.bf16.mxu0 0
      %3370 = vmatmul.mubr.bf16.gmra.mrb[0].mxu0 %v3242
      %v3371 = vpop.f32.mrb[0].mxu0
      %v3372 = vadd.f32 0.0, %v3371
      %v3373 = vpop.f32.mrb[0].mxu0
      %v3374 = vpop.f32.mrb[0].mxu0
      %v3375 = vadd.f32 0.0, %v3374
      %v3376 = vpop.f32.mrb[0].mxu0
      %3377 = vmatprep.mubr.bf16.mxu0 0
      %3378 = vmatmul.mubr.bf16.gmra.mrb[0].mxu0 %v3245
      %v3379 = vpop.f32.mrb[0].mxu0
      %v3380 = vadd.f32 0.0, %v3379
      %v3381 = vpop.f32.mrb[0].mxu0
      %v3382 = vpop.f32.mrb[0].mxu0
      %v3383 = vadd.f32 0.0, %v3382
      %v3384 = vpop.f32.mrb[0].mxu0
      %3385 = vmatprep.mubr.bf16.mxu0 0
      %3386 = vmatmul.mubr.bf16.gmra.mrb[0].mxu0 %v3248
      %v3387 = vpop.f32.mrb[0].mxu0
      %v3388 = vadd.f32 0.0, %v3387
      %v3389 = vpop.f32.mrb[0].mxu0
      %v3390 = vpop.f32.mrb[0].mxu0
      %v3391 = vadd.f32 0.0, %v3390
      %v3392 = vpop.f32.mrb[0].mxu0
      %3393 = vmatprep.mubr.bf16.mxu0 0
      %3394 = vmatmul.mubr.bf16.gmra.mrb[0].mxu0 %v3251
      %v3395 = vpop.f32.mrb[0].mxu0
      %v3396 = vadd.f32 0.0, %v3395
      %v3397 = vpop.f32.mrb[0].mxu0
      %v3398 = vpop.f32.mrb[0].mxu0
      %v3399 = vadd.f32 0.0, %v3398
      %v3400 = vpop.f32.mrb[0].mxu0
      %3401 = vmatprep.mubr.bf16.mxu0 0
      %3402 = vmatmul.mubr.bf16.gmra.mrb[0].mxu0 %v3254
      %v3403 = vpop.f32.mrb[0].mxu0
      %v3404 = vadd.f32 0.0, %v3403
      %v3405 = vpop.f32.mrb[0].mxu0
      %v3406 = vpop.f32.mrb[0].mxu0
      %v3407 = vadd.f32 0.0, %v3406
      %v3408 = vpop.f32.mrb[0].mxu0
      %3409 = vmatprep.mubr.bf16.mxu0 0
      %3410 = vmatmul.mubr.bf16.gmra.mrb[0].mxu0 %v3257
      %v3411 = vpop.f32.mrb[0].mxu0
      %v3412 = vadd.f32 0.0, %v3411
      %v3413 = vpop.f32.mrb[0].mxu0
      %v3414 = vpop.f32.mrb[0].mxu0
      %v3415 = vadd.f32 0.0, %v3414
      %v3416 = vpop.f32.mrb[0].mxu0
      %3417 = vmatprep.mubr.bf16.mxu0 0
      %3418 = vmatmul.mubr.bf16.gmra.mrb[0].mxu0 %v3260
      %v3419 = vpop.f32.mrb[0].mxu0
      %v3420 = vadd.f32 0.0, %v3419
      %v3421 = vpop.f32.mrb[0].mxu0
      %v3422 = vpop.f32.mrb[0].mxu0
      %v3423 = vadd.f32 0.0, %v3422
      %v3424 = vpop.f32.mrb[0].mxu0
      %3425 = vdwg.mxu0
      %v3426 = vld [vmem:[#allocation5] sm:$0xff]
      %v3427 = vld [vmem:[#allocation5 + $0x8] sm:$0xff]
      %v3428 = vld [vmem:[#allocation5 + $0x10] sm:$0xff]
      %v3429 = vld [vmem:[#allocation5 + $0x18] sm:$0xff]
      %v3430 = vld [vmem:[#allocation5 + $0x20] sm:$0xff]
      %v3431 = vld [vmem:[#allocation5 + $0x28] sm:$0xff]
      %v3432 = vld [vmem:[#allocation5 + $0x30] sm:$0xff]
      %v3433 = vld [vmem:[#allocation5 + $0x38] sm:$0xff]
      %v3434 = vld [vmem:[#allocation5 + $0x40] sm:$0xff]
      %v3435 = vld [vmem:[#allocation5 + $0x48] sm:$0xff]
      %v3436 = vld [vmem:[#allocation5 + $0x50] sm:$0xff]
      %v3437 = vld [vmem:[#allocation5 + $0x58] sm:$0xff]
      %v3438 = vld [vmem:[#allocation5 + $0x60] sm:$0xff]
      %v3439 = vld [vmem:[#allocation5 + $0x68] sm:$0xff]
      %v3440 = vld [vmem:[#allocation5 + $0x70] sm:$0xff]
      %v3441 = vld [vmem:[#allocation5 + $0x78] sm:$0xff]
      %v3442 = vld [vmem:[#allocation5 + $0x80] sm:$0xff]
      %v3443 = vld [vmem:[#allocation5 + $0x88] sm:$0xff]
      %v3444 = vld [vmem:[#allocation5 + $0x90] sm:$0xff]
      %v3445 = vld [vmem:[#allocation5 + $0x98] sm:$0xff]
      %v3446 = vld [vmem:[#allocation5 + $0xa0] sm:$0xff]
      %v3447 = vld [vmem:[#allocation5 + $0xa8] sm:$0xff]
      %v3448 = vld [vmem:[#allocation5 + $0xb0] sm:$0xff]
      %v3449 = vld [vmem:[#allocation5 + $0xb8] sm:$0xff]
      %v3450 = vld [vmem:[#allocation5 + $0xc0] sm:$0xff]
      %v3451 = vld [vmem:[#allocation5 + $0xc8] sm:$0xff]
      %v3452 = vld [vmem:[#allocation5 + $0xd0] sm:$0xff]
      %v3453 = vld [vmem:[#allocation5 + $0xd8] sm:$0xff]
      %v3454 = vld [vmem:[#allocation5 + $0xe0] sm:$0xff]
      %v3455 = vld [vmem:[#allocation5 + $0xe8] sm:$0xff]
      %v3456 = vld [vmem:[#allocation5 + $0xf0] sm:$0xff]
      %v3457 = vld [vmem:[#allocation5 + $0xf8] sm:$0xff]
      %v3458 = vadd.f32 %v3426, %v3300
      %v3459 = vadd.f32 %v3427, %v3303
      %v3460 = vadd.f32 %v3428, %v3308
      %v3461 = vadd.f32 %v3429, %v3311
      %v3462 = vadd.f32 %v3430, %v3316
      %v3463 = vadd.f32 %v3431, %v3319
      %v3464 = vadd.f32 %v3432, %v3324
      %v3465 = vadd.f32 %v3433, %v3327
      %v3466 = vadd.f32 %v3434, %v3332
      %v3467 = vadd.f32 %v3435, %v3335
      %v3468 = vadd.f32 %v3436, %v3340
      %v3469 = vadd.f32 %v3437, %v3343
      %v3470 = vadd.f32 %v3438, %v3348
      %v3471 = vadd.f32 %v3439, %v3351
      %v3472 = vadd.f32 %v3440, %v3356
      %v3473 = vadd.f32 %v3441, %v3359
      %v3474 = vadd.f32 %v3442, %v3364
      %v3475 = vadd.f32 %v3443, %v3367
      %v3476 = vadd.f32 %v3444, %v3372
      %v3477 = vadd.f32 %v3445, %v3375
      %v3478 = vadd.f32 %v3446, %v3380
      %v3479 = vadd.f32 %v3447, %v3383
      %v3480 = vadd.f32 %v3448, %v3388
      %v3481 = vadd.f32 %v3449, %v3391
      %v3482 = vadd.f32 %v3450, %v3396
      %v3483 = vadd.f32 %v3451, %v3399
      %v3484 = vadd.f32 %v3452, %v3404
      %v3485 = vadd.f32 %v3453, %v3407
      %v3486 = vadd.f32 %v3454, %v3412
      %v3487 = vadd.f32 %v3455, %v3415
      %v3488 = vadd.f32 %v3456, %v3420
      %v3489 = vadd.f32 %v3457, %v3423
      %3490 = vst.msk [vmem:[#allocation5] sm:$0xff] %vm3152, %v3458
      %3491 = vst.msk [vmem:[#allocation5 + $0x8] sm:$0xff] %vm3152, %v3459
      %3492 = vst.msk [vmem:[#allocation5 + $0x10] sm:$0xff] %vm3152, %v3460
      %3493 = vst.msk [vmem:[#allocation5 + $0x18] sm:$0xff] %vm3152, %v3461
      %3494 = vst.msk [vmem:[#allocation5 + $0x20] sm:$0xff] %vm3152, %v3462
      %3495 = vst.msk [vmem:[#allocation5 + $0x28] sm:$0xff] %vm3152, %v3463
      %3496 = vst.msk [vmem:[#allocation5 + $0x30] sm:$0xff] %vm3152, %v3464
      %3497 = vst.msk [vmem:[#allocation5 + $0x38] sm:$0xff] %vm3152, %v3465
      %3498 = vst.msk [vmem:[#allocation5 + $0x40] sm:$0xff] %vm3152, %v3466
      %3499 = vst.msk [vmem:[#allocation5 + $0x48] sm:$0xff] %vm3152, %v3467
      %3500 = vst.msk [vmem:[#allocation5 + $0x50] sm:$0xff] %vm3152, %v3468
      %3501 = vst.msk [vmem:[#allocation5 + $0x58] sm:$0xff] %vm3152, %v3469
      %3502 = vst.msk [vmem:[#allocation5 + $0x60] sm:$0xff] %vm3152, %v3470
      %3503 = vst.msk [vmem:[#allocation5 + $0x68] sm:$0xff] %vm3152, %v3471
      %3504 = vst.msk [vmem:[#allocation5 + $0x70] sm:$0xff] %vm3152, %v3472
      %3505 = vst.msk [vmem:[#allocation5 + $0x78] sm:$0xff] %vm3152, %v3473
      %3506 = vst.msk [vmem:[#allocation5 + $0x80] sm:$0xff] %vm3152, %v3474
      %3507 = vst.msk [vmem:[#allocation5 + $0x88] sm:$0xff] %vm3152, %v3475
      %3508 = vst.msk [vmem:[#allocation5 + $0x90] sm:$0xff] %vm3152, %v3476
      %3509 = vst.msk [vmem:[#allocation5 + $0x98] sm:$0xff] %vm3152, %v3477
      %3510 = vst.msk [vmem:[#allocation5 + $0xa0] sm:$0xff] %vm3152, %v3478
      %3511 = vst.msk [vmem:[#allocation5 + $0xa8] sm:$0xff] %vm3152, %v3479
      %3512 = vst.msk [vmem:[#allocation5 + $0xb0] sm:$0xff] %vm3152, %v3480
      %3513 = vst.msk [vmem:[#allocation5 + $0xb8] sm:$0xff] %vm3152, %v3481
      %3514 = vst.msk [vmem:[#allocation5 + $0xc0] sm:$0xff] %vm3152, %v3482
      %3515 = vst.msk [vmem:[#allocation5 + $0xc8] sm:$0xff] %vm3152, %v3483
      %3516 = vst.msk [vmem:[#allocation5 + $0xd0] sm:$0xff] %vm3152, %v3484
      %3517 = vst.msk [vmem:[#allocation5 + $0xd8] sm:$0xff] %vm3152, %v3485
      %3518 = vst.msk [vmem:[#allocation5 + $0xe0] sm:$0xff] %vm3152, %v3486
      %3519 = vst.msk [vmem:[#allocation5 + $0xe8] sm:$0xff] %vm3152, %v3487
      %3520 = vst.msk [vmem:[#allocation5 + $0xf0] sm:$0xff] %vm3152, %v3488
      %3521 = vst.msk [vmem:[#allocation5 + $0xf8] sm:$0xff] %vm3152, %v3489
      %v3522 = vld [vmem:[#allocation3 + $0x10] sm:$0xff]
      %v3523 = vld [vmem:[#allocation3 + $0x18] sm:$0xff]
      %v3524 = vld [vmem:[#allocation3 + $0x20] sm:$0xff]
      %v3525 = vld [vmem:[#allocation3 + $0x28] sm:$0xff]
      %v3526 = vld [vmem:[#allocation3 + $0x30] sm:$0xff]
      %v3527 = vld [vmem:[#allocation3 + $0x38] sm:$0xff]
      %v3528 = vld [vmem:[#allocation3 + $0x40] sm:$0xff]
      %v3529 = vld [vmem:[#allocation3 + $0x48] sm:$0xff]
      %v3530 = vld [vmem:[#allocation3 + $0x50] sm:$0xff]
      %v3531 = vld [vmem:[#allocation3 + $0x58] sm:$0xff]
      %v3532 = vld [vmem:[#allocation3 + $0x60] sm:$0xff]
      %v3533 = vld [vmem:[#allocation3 + $0x68] sm:$0xff]
      %v3534 = vld [vmem:[#allocation3 + $0x70] sm:$0xff]
      %v3535 = vld [vmem:[#allocation3 + $0x78] sm:$0xff]
      %v3536 = vld [vmem:[#allocation3 + $0x80] sm:$0xff]
      %v3537 = vld [vmem:[#allocation3 + $0x88] sm:$0xff]
      %s3538 = scalar_lea.vmem %s329, 24
      %v3539 = vld [vmem:[%s3538] sm:$0xf]
      %v3540 = vld [vmem:[%s3538 + $0x4] sm:$0xf]
      %v3541 = vld [vmem:[%s3538 + $0x8] sm:$0xf]
      %v3545 = vunpack.c.l.b16 %v3539
      %v3546 = vunpack.c.l.b16 %v3540
      %v3547 = vunpack.c.l.b16 %v3541
      %v3548 = vpack.c.b16 %v3546, %v3545
      %v3549 = vpack.c.b16 %v3547, %v3547
      %v3552 = vsel %vm2938, %v3522, 0
      %v3555 = vsel %vm2938, %v3523, 0
      %v3558 = vsel %vm2938, %v3524, 0
      %v3561 = vsel %vm2938, %v3525, 0
      %v3564 = vsel %vm2938, %v3526, 0
      %v3567 = vsel %vm2938, %v3527, 0
      %v3570 = vsel %vm2938, %v3528, 0
      %v3573 = vsel %vm2938, %v3529, 0
      %v3576 = vsel %vm2938, %v3530, 0
      %v3579 = vsel %vm2938, %v3531, 0
      %v3582 = vsel %vm2938, %v3532, 0
      %v3585 = vsel %vm2938, %v3533, 0
      %v3588 = vsel %vm2938, %v3534, 0
      %v3591 = vsel %vm2938, %v3535, 0
      %v3594 = vsel %vm2938, %v3536, 0
      %v3597 = vsel %vm2938, %v3537, 0
      %v3600 = vsel %vm2987, %v3549, 0
      %3602 = vmatprep.subr.bf16.mxu0 0
      %3603 = vmatpush1.bf16.msra.mxu0 %v3548
      %3604 = vmatprep.subr.bf16.mxu0 0
      %3605 = vmatpush1.bf16.msra.mxu0 %v3600
      %3606 = vmatprep.subr.bf16.mxu0 0
      %3607 = vmatpush1.bf16.msra.mxu0 0
      %3608 = vmatprep.subr.bf16.mxu0 0
      %3609 = vmatpush1.bf16.msra.mxu0 0
      %3610 = vmatprep.subr.bf16.mxu0 0
      %3611 = vmatpush1.bf16.msra.mxu0 0
      %3612 = vmatprep.subr.bf16.mxu0 0
      %3613 = vmatpush1.bf16.msra.mxu0 0
      %3614 = vmatprep.subr.bf16.mxu0 0
      %3615 = vmatpush1.bf16.msra.mxu0 0
      %3616 = vmatprep.subr.bf16.mxu0 0
      %3617 = vmatpush1.bf16.msra.mxu0 0
      %3618 = vmatprep.subr.bf16.mxu0 0
      %3619 = vmatpush1.bf16.msra.mxu0 0
      %3620 = vmatprep.subr.bf16.mxu0 0
      %3621 = vmatpush1.bf16.msra.mxu0 0
      %3622 = vmatprep.subr.bf16.mxu0 0
      %3623 = vmatpush1.bf16.msra.mxu0 0
      %3624 = vmatprep.subr.bf16.mxu0 0
      %3625 = vmatpush1.bf16.msra.mxu0 0
      %3626 = vmatprep.subr.bf16.mxu0 0
      %3627 = vmatpush1.bf16.msra.mxu0 0
      %3628 = vmatprep.subr.bf16.mxu0 0
      %3629 = vmatpush1.bf16.msra.mxu0 0
      %3630 = vmatprep.subr.bf16.mxu0 0
      %3631 = vmatpush1.bf16.msra.mxu0 0
      %3632 = vmatprep.subr.bf16.mxu0 0
      %3633 = vmatpush1.bf16.msra.mxu0 0
      %3634 = vmatprep.mubr.bf16.mxu0 0
      %3635 = vmatmul.mubr.bf16.gmra.mrb[0].mxu0 %v3552
      %v3636 = vpop.f32.mrb[0].mxu0
      %v3637 = vadd.f32 0.0, %v3636
      %v3638 = vpop.f32.mrb[0].mxu0
      %v3639 = vpop.f32.mrb[0].mxu0
      %v3640 = vadd.f32 0.0, %v3639
      %v3641 = vpop.f32.mrb[0].mxu0
      %3642 = vmatprep.mubr.bf16.mxu0 0
      %3643 = vmatmul.mubr.bf16.gmra.mrb[0].mxu0 %v3555
      %v3644 = vpop.f32.mrb[0].mxu0
      %v3645 = vadd.f32 0.0, %v3644
      %v3646 = vpop.f32.mrb[0].mxu0
      %v3647 = vpop.f32.mrb[0].mxu0
      %v3648 = vadd.f32 0.0, %v3647
      %v3649 = vpop.f32.mrb[0].mxu0
      %3650 = vmatprep.mubr.bf16.mxu0 0
      %3651 = vmatmul.mubr.bf16.gmra.mrb[0].mxu0 %v3558
      %v3652 = vpop.f32.mrb[0].mxu0
      %v3653 = vadd.f32 0.0, %v3652
      %v3654 = vpop.f32.mrb[0].mxu0
      %v3655 = vpop.f32.mrb[0].mxu0
      %v3656 = vadd.f32 0.0, %v3655
      %v3657 = vpop.f32.mrb[0].mxu0
      %3658 = vmatprep.mubr.bf16.mxu0 0
      %3659 = vmatmul.mubr.bf16.gmra.mrb[0].mxu0 %v3561
      %v3660 = vpop.f32.mrb[0].mxu0
      %v3661 = vadd.f32 0.0, %v3660
      %v3662 = vpop.f32.mrb[0].mxu0
      %v3663 = vpop.f32.mrb[0].mxu0
      %v3664 = vadd.f32 0.0, %v3663
      %v3665 = vpop.f32.mrb[0].mxu0
      %3666 = vmatprep.mubr.bf16.mxu0 0
      %3667 = vmatmul.mubr.bf16.gmra.mrb[0].mxu0 %v3564
      %v3668 = vpop.f32.mrb[0].mxu0
      %v3669 = vadd.f32 0.0, %v3668
      %v3670 = vpop.f32.mrb[0].mxu0
      %v3671 = vpop.f32.mrb[0].mxu0
      %v3672 = vadd.f32 0.0, %v3671
      %v3673 = vpop.f32.mrb[0].mxu0
      %3674 = vmatprep.mubr.bf16.mxu0 0
      %3675 = vmatmul.mubr.bf16.gmra.mrb[0].mxu0 %v3567
      %v3676 = vpop.f32.mrb[0].mxu0
      %v3677 = vadd.f32 0.0, %v3676
      %v3678 = vpop.f32.mrb[0].mxu0
      %v3679 = vpop.f32.mrb[0].mxu0
      %v3680 = vadd.f32 0.0, %v3679
      %v3681 = vpop.f32.mrb[0].mxu0
      %3682 = vmatprep.mubr.bf16.mxu0 0
      %3683 = vmatmul.mubr.bf16.gmra.mrb[0].mxu0 %v3570
      %v3684 = vpop.f32.mrb[0].mxu0
      %v3685 = vadd.f32 0.0, %v3684
      %v3686 = vpop.f32.mrb[0].mxu0
      %v3687 = vpop.f32.mrb[0].mxu0
      %v3688 = vadd.f32 0.0, %v3687
      %v3689 = vpop.f32.mrb[0].mxu0
      %3690 = vmatprep.mubr.bf16.mxu0 0
      %3691 = vmatmul.mubr.bf16.gmra.mrb[0].mxu0 %v3573
      %v3692 = vpop.f32.mrb[0].mxu0
      %v3693 = vadd.f32 0.0, %v3692
      %v3694 = vpop.f32.mrb[0].mxu0
      %v3695 = vpop.f32.mrb[0].mxu0
      %v3696 = vadd.f32 0.0, %v3695
      %v3697 = vpop.f32.mrb[0].mxu0
      %3698 = vmatprep.mubr.bf16.mxu0 0
      %3699 = vmatmul.mubr.bf16.gmra.mrb[0].mxu0 %v3576
      %v3700 = vpop.f32.mrb[0].mxu0
      %v3701 = vadd.f32 0.0, %v3700
      %v3702 = vpop.f32.mrb[0].mxu0
      %v3703 = vpop.f32.mrb[0].mxu0
      %v3704 = vadd.f32 0.0, %v3703
      %v3705 = vpop.f32.mrb[0].mxu0
      %3706 = vmatprep.mubr.bf16.mxu0 0
      %3707 = vmatmul.mubr.bf16.gmra.mrb[0].mxu0 %v3579
      %v3708 = vpop.f32.mrb[0].mxu0
      %v3709 = vadd.f32 0.0, %v3708
      %v3710 = vpop.f32.mrb[0].mxu0
      %v3711 = vpop.f32.mrb[0].mxu0
      %v3712 = vadd.f32 0.0, %v3711
      %v3713 = vpop.f32.mrb[0].mxu0
      %3714 = vmatprep.mubr.bf16.mxu0 0
      %3715 = vmatmul.mubr.bf16.gmra.mrb[0].mxu0 %v3582
      %v3716 = vpop.f32.mrb[0].mxu0
      %v3717 = vadd.f32 0.0, %v3716
      %v3718 = vpop.f32.mrb[0].mxu0
      %v3719 = vpop.f32.mrb[0].mxu0
      %v3720 = vadd.f32 0.0, %v3719
      %v3721 = vpop.f32.mrb[0].mxu0
      %3722 = vmatprep.mubr.bf16.mxu0 0
      %3723 = vmatmul.mubr.bf16.gmra.mrb[0].mxu0 %v3585
      %v3724 = vpop.f32.mrb[0].mxu0
      %v3725 = vadd.f32 0.0, %v3724
      %v3726 = vpop.f32.mrb[0].mxu0
      %v3727 = vpop.f32.mrb[0].mxu0
      %v3728 = vadd.f32 0.0, %v3727
      %v3729 = vpop.f32.mrb[0].mxu0
      %3730 = vmatprep.mubr.bf16.mxu0 0
      %3731 = vmatmul.mubr.bf16.gmra.mrb[0].mxu0 %v3588
      %v3732 = vpop.f32.mrb[0].mxu0
      %v3733 = vadd.f32 0.0, %v3732
      %v3734 = vpop.f32.mrb[0].mxu0
      %v3735 = vpop.f32.mrb[0].mxu0
      %v3736 = vadd.f32 0.0, %v3735
      %v3737 = vpop.f32.mrb[0].mxu0
      %3738 = vmatprep.mubr.bf16.mxu0 0
      %3739 = vmatmul.mubr.bf16.gmra.mrb[0].mxu0 %v3591
      %v3740 = vpop.f32.mrb[0].mxu0
      %v3741 = vadd.f32 0.0, %v3740
      %v3742 = vpop.f32.mrb[0].mxu0
      %v3743 = vpop.f32.mrb[0].mxu0
      %v3744 = vadd.f32 0.0, %v3743
      %v3745 = vpop.f32.mrb[0].mxu0
      %3746 = vmatprep.mubr.bf16.mxu0 0
      %3747 = vmatmul.mubr.bf16.gmra.mrb[0].mxu0 %v3594
      %v3748 = vpop.f32.mrb[0].mxu0
      %v3749 = vadd.f32 0.0, %v3748
      %v3750 = vpop.f32.mrb[0].mxu0
      %v3751 = vpop.f32.mrb[0].mxu0
      %v3752 = vadd.f32 0.0, %v3751
      %v3753 = vpop.f32.mrb[0].mxu0
      %3754 = vmatprep.mubr.bf16.mxu0 0
      %3755 = vmatmul.mubr.bf16.gmra.mrb[0].mxu0 %v3597
      %v3756 = vpop.f32.mrb[0].mxu0
      %v3757 = vadd.f32 0.0, %v3756
      %v3758 = vpop.f32.mrb[0].mxu0
      %v3759 = vpop.f32.mrb[0].mxu0
      %v3760 = vadd.f32 0.0, %v3759
      %v3761 = vpop.f32.mrb[0].mxu0
      %3762 = vdwg.mxu0
      %v3763 = vld [vmem:[#allocation5] sm:$0xff]
      %v3764 = vld [vmem:[#allocation5 + $0x8] sm:$0xff]
      %v3765 = vld [vmem:[#allocation5 + $0x10] sm:$0xff]
      %v3766 = vld [vmem:[#allocation5 + $0x18] sm:$0xff]
      %v3767 = vld [vmem:[#allocation5 + $0x20] sm:$0xff]
      %v3768 = vld [vmem:[#allocation5 + $0x28] sm:$0xff]
      %v3769 = vld [vmem:[#allocation5 + $0x30] sm:$0xff]
      %v3770 = vld [vmem:[#allocation5 + $0x38] sm:$0xff]
      %v3771 = vld [vmem:[#allocation5 + $0x40] sm:$0xff]
      %v3772 = vld [vmem:[#allocation5 + $0x48] sm:$0xff]
      %v3773 = vld [vmem:[#allocation5 + $0x50] sm:$0xff]
      %v3774 = vld [vmem:[#allocation5 + $0x58] sm:$0xff]
      %v3775 = vld [vmem:[#allocation5 + $0x60] sm:$0xff]
      %v3776 = vld [vmem:[#allocation5 + $0x68] sm:$0xff]
      %v3777 = vld [vmem:[#allocation5 + $0x70] sm:$0xff]
      %v3778 = vld [vmem:[#allocation5 + $0x78] sm:$0xff]
      %v3779 = vld [vmem:[#allocation5 + $0x80] sm:$0xff]
      %v3780 = vld [vmem:[#allocation5 + $0x88] sm:$0xff]
      %v3781 = vld [vmem:[#allocation5 + $0x90] sm:$0xff]
      %v3782 = vld [vmem:[#allocation5 + $0x98] sm:$0xff]
      %v3783 = vld [vmem:[#allocation5 + $0xa0] sm:$0xff]
      %v3784 = vld [vmem:[#allocation5 + $0xa8] sm:$0xff]
      %v3785 = vld [vmem:[#allocation5 + $0xb0] sm:$0xff]
      %v3786 = vld [vmem:[#allocation5 + $0xb8] sm:$0xff]
      %v3787 = vld [vmem:[#allocation5 + $0xc0] sm:$0xff]
      %v3788 = vld [vmem:[#allocation5 + $0xc8] sm:$0xff]
      %v3789 = vld [vmem:[#allocation5 + $0xd0] sm:$0xff]
      %v3790 = vld [vmem:[#allocation5 + $0xd8] sm:$0xff]
      %v3791 = vld [vmem:[#allocation5 + $0xe0] sm:$0xff]
      %v3792 = vld [vmem:[#allocation5 + $0xe8] sm:$0xff]
      %v3793 = vld [vmem:[#allocation5 + $0xf0] sm:$0xff]
      %v3794 = vld [vmem:[#allocation5 + $0xf8] sm:$0xff]
      %v3795 = vadd.f32 %v3763, %v3637
      %v3796 = vadd.f32 %v3764, %v3640
      %v3797 = vadd.f32 %v3765, %v3645
      %v3798 = vadd.f32 %v3766, %v3648
      %v3799 = vadd.f32 %v3767, %v3653
      %v3800 = vadd.f32 %v3768, %v3656
      %v3801 = vadd.f32 %v3769, %v3661
      %v3802 = vadd.f32 %v3770, %v3664
      %v3803 = vadd.f32 %v3771, %v3669
      %v3804 = vadd.f32 %v3772, %v3672
      %v3805 = vadd.f32 %v3773, %v3677
      %v3806 = vadd.f32 %v3774, %v3680
      %v3807 = vadd.f32 %v3775, %v3685
      %v3808 = vadd.f32 %v3776, %v3688
      %v3809 = vadd.f32 %v3777, %v3693
      %v3810 = vadd.f32 %v3778, %v3696
      %v3811 = vadd.f32 %v3779, %v3701
      %v3812 = vadd.f32 %v3780, %v3704
      %v3813 = vadd.f32 %v3781, %v3709
      %v3814 = vadd.f32 %v3782, %v3712
      %v3815 = vadd.f32 %v3783, %v3717
      %v3816 = vadd.f32 %v3784, %v3720
      %v3817 = vadd.f32 %v3785, %v3725
      %v3818 = vadd.f32 %v3786, %v3728
      %v3819 = vadd.f32 %v3787, %v3733
      %v3820 = vadd.f32 %v3788, %v3736
      %v3821 = vadd.f32 %v3789, %v3741
      %v3822 = vadd.f32 %v3790, %v3744
      %v3823 = vadd.f32 %v3791, %v3749
      %v3824 = vadd.f32 %v3792, %v3752
      %v3825 = vadd.f32 %v3793, %v3757
      %v3826 = vadd.f32 %v3794, %v3760
      %3827 = vst.msk [vmem:[#allocation5] sm:$0xff] %vm3152, %v3795
      %3828 = vst.msk [vmem:[#allocation5 + $0x8] sm:$0xff] %vm3152, %v3796
      %3829 = vst.msk [vmem:[#allocation5 + $0x10] sm:$0xff] %vm3152, %v3797
      %3830 = vst.msk [vmem:[#allocation5 + $0x18] sm:$0xff] %vm3152, %v3798
      %3831 = vst.msk [vmem:[#allocation5 + $0x20] sm:$0xff] %vm3152, %v3799
      %3832 = vst.msk [vmem:[#allocation5 + $0x28] sm:$0xff] %vm3152, %v3800
      %3833 = vst.msk [vmem:[#allocation5 + $0x30] sm:$0xff] %vm3152, %v3801
      %3834 = vst.msk [vmem:[#allocation5 + $0x38] sm:$0xff] %vm3152, %v3802
      %3835 = vst.msk [vmem:[#allocation5 + $0x40] sm:$0xff] %vm3152, %v3803
      %3836 = vst.msk [vmem:[#allocation5 + $0x48] sm:$0xff] %vm3152, %v3804
      %3837 = vst.msk [vmem:[#allocation5 + $0x50] sm:$0xff] %vm3152, %v3805
      %3838 = vst.msk [vmem:[#allocation5 + $0x58] sm:$0xff] %vm3152, %v3806
      %3839 = vst.msk [vmem:[#allocation5 + $0x60] sm:$0xff] %vm3152, %v3807
      %3840 = vst.msk [vmem:[#allocation5 + $0x68] sm:$0xff] %vm3152, %v3808
      %3841 = vst.msk [vmem:[#allocation5 + $0x70] sm:$0xff] %vm3152, %v3809
      %3842 = vst.msk [vmem:[#allocation5 + $0x78] sm:$0xff] %vm3152, %v3810
      %3843 = vst.msk [vmem:[#allocation5 + $0x80] sm:$0xff] %vm3152, %v3811
      %3844 = vst.msk [vmem:[#allocation5 + $0x88] sm:$0xff] %vm3152, %v3812
      %3845 = vst.msk [vmem:[#allocation5 + $0x90] sm:$0xff] %vm3152, %v3813
      %3846 = vst.msk [vmem:[#allocation5 + $0x98] sm:$0xff] %vm3152, %v3814
      %3847 = vst.msk [vmem:[#allocation5 + $0xa0] sm:$0xff] %vm3152, %v3815
      %3848 = vst.msk [vmem:[#allocation5 + $0xa8] sm:$0xff] %vm3152, %v3816
      %3849 = vst.msk [vmem:[#allocation5 + $0xb0] sm:$0xff] %vm3152, %v3817
      %3850 = vst.msk [vmem:[#allocation5 + $0xb8] sm:$0xff] %vm3152, %v3818
      %3851 = vst.msk [vmem:[#allocation5 + $0xc0] sm:$0xff] %vm3152, %v3819
      %3852 = vst.msk [vmem:[#allocation5 + $0xc8] sm:$0xff] %vm3152, %v3820
      %3853 = vst.msk [vmem:[#allocation5 + $0xd0] sm:$0xff] %vm3152, %v3821
      %3854 = vst.msk [vmem:[#allocation5 + $0xd8] sm:$0xff] %vm3152, %v3822
      %3855 = vst.msk [vmem:[#allocation5 + $0xe0] sm:$0xff] %vm3152, %v3823
      %3856 = vst.msk [vmem:[#allocation5 + $0xe8] sm:$0xff] %vm3152, %v3824
      %3857 = vst.msk [vmem:[#allocation5 + $0xf0] sm:$0xff] %vm3152, %v3825
      %3858 = vst.msk [vmem:[#allocation5 + $0xf8] sm:$0xff] %vm3152, %v3826
      %v3859 = vld [vmem:[#allocation5] sm:$0xff]
      %v3860 = vld [vmem:[#allocation5 + $0x8] sm:$0xff]
      %v3861 = vld [vmem:[#allocation5 + $0x10] sm:$0xff]
      %v3862 = vld [vmem:[#allocation5 + $0x18] sm:$0xff]
      %v3863 = vld [vmem:[#allocation5 + $0x20] sm:$0xff]
      %v3864 = vld [vmem:[#allocation5 + $0x28] sm:$0xff]
      %v3865 = vld [vmem:[#allocation5 + $0x30] sm:$0xff]
      %v3866 = vld [vmem:[#allocation5 + $0x38] sm:$0xff]
      %v3867 = vld [vmem:[#allocation5 + $0x40] sm:$0xff]
      %v3868 = vld [vmem:[#allocation5 + $0x48] sm:$0xff]
      %v3869 = vld [vmem:[#allocation5 + $0x50] sm:$0xff]
      %v3870 = vld [vmem:[#allocation5 + $0x58] sm:$0xff]
      %v3871 = vld [vmem:[#allocation5 + $0x60] sm:$0xff]
      %v3872 = vld [vmem:[#allocation5 + $0x68] sm:$0xff]
      %v3873 = vld [vmem:[#allocation5 + $0x70] sm:$0xff]
      %v3874 = vld [vmem:[#allocation5 + $0x78] sm:$0xff]
      %v3875 = vld [vmem:[#allocation5 + $0x80] sm:$0xff]
      %v3876 = vld [vmem:[#allocation5 + $0x88] sm:$0xff]
      %v3877 = vld [vmem:[#allocation5 + $0x90] sm:$0xff]
      %v3878 = vld [vmem:[#allocation5 + $0x98] sm:$0xff]
      %v3879 = vld [vmem:[#allocation5 + $0xa0] sm:$0xff]
      %v3880 = vld [vmem:[#allocation5 + $0xa8] sm:$0xff]
      %v3881 = vld [vmem:[#allocation5 + $0xb0] sm:$0xff]
      %v3882 = vld [vmem:[#allocation5 + $0xb8] sm:$0xff]
      %v3883 = vld [vmem:[#allocation5 + $0xc0] sm:$0xff]
      %v3884 = vld [vmem:[#allocation5 + $0xc8] sm:$0xff]
      %v3885 = vld [vmem:[#allocation5 + $0xd0] sm:$0xff]
      %v3886 = vld [vmem:[#allocation5 + $0xd8] sm:$0xff]
      %v3887 = vld [vmem:[#allocation5 + $0xe0] sm:$0xff]
      %v3888 = vld [vmem:[#allocation5 + $0xe8] sm:$0xff]
      %v3889 = vld [vmem:[#allocation5 + $0xf0] sm:$0xff]
      %v3890 = vld [vmem:[#allocation5 + $0xf8] sm:$0xff]
      %v3891 = vld [vmem:[%s332] sm:$0x1]
      %v3893 = vlaneseq
      %v3894 = vshrl.u32 %v3893, 7
      %v3895 = vsub.s32 0, %v3894
      %v3896 = vrot.slane %v3891, %v3895
      %v3898 = vmul.f32 %v3859, %v3896
      %v3899 = vmul.f32 %v3860, %v3896
      %v3900 = vmul.f32 %v3861, %v3896
      %v3901 = vmul.f32 %v3862, %v3896
      %v3902 = vmul.f32 %v3863, %v3896
      %v3903 = vmul.f32 %v3864, %v3896
      %v3904 = vmul.f32 %v3865, %v3896
      %v3905 = vmul.f32 %v3866, %v3896
      %v3906 = vmul.f32 %v3867, %v3896
      %v3907 = vmul.f32 %v3868, %v3896
      %v3908 = vmul.f32 %v3869, %v3896
      %v3909 = vmul.f32 %v3870, %v3896
      %v3910 = vmul.f32 %v3871, %v3896
      %v3911 = vmul.f32 %v3872, %v3896
      %v3912 = vmul.f32 %v3873, %v3896
      %v3913 = vmul.f32 %v3874, %v3896
      %v3914 = vmul.f32 %v3875, %v3896
      %v3915 = vmul.f32 %v3876, %v3896
      %v3916 = vmul.f32 %v3877, %v3896
      %v3917 = vmul.f32 %v3878, %v3896
      %v3918 = vmul.f32 %v3879, %v3896
      %v3919 = vmul.f32 %v3880, %v3896
      %v3920 = vmul.f32 %v3881, %v3896
      %v3921 = vmul.f32 %v3882, %v3896
      %v3922 = vmul.f32 %v3883, %v3896
      %v3923 = vmul.f32 %v3884, %v3896
      %v3924 = vmul.f32 %v3885, %v3896
      %v3925 = vmul.f32 %v3886, %v3896
      %v3926 = vmul.f32 %v3887, %v3896
      %v3927 = vmul.f32 %v3888, %v3896
      %v3928 = vmul.f32 %v3889, %v3896
      %v3929 = vmul.f32 %v3890, %v3896
      %v3930 = vld [vmem:[%s335] sm:$0x1]
      %v3932 = vlaneseq
      %v3933 = vshrl.u32 %v3932, 7
      %v3934 = vsub.s32 0, %v3933
      %v3935 = vrot.slane %v3930, %v3934
      %v3937 = vadd.f32 %v3898, %v3935
      %v3938 = vadd.f32 %v3899, %v3935
      %v3939 = vadd.f32 %v3900, %v3935
      %v3940 = vadd.f32 %v3901, %v3935
      %v3941 = vadd.f32 %v3902, %v3935
      %v3942 = vadd.f32 %v3903, %v3935
      %v3943 = vadd.f32 %v3904, %v3935
      %v3944 = vadd.f32 %v3905, %v3935
      %v3945 = vadd.f32 %v3906, %v3935
      %v3946 = vadd.f32 %v3907, %v3935
      %v3947 = vadd.f32 %v3908, %v3935
      %v3948 = vadd.f32 %v3909, %v3935
      %v3949 = vadd.f32 %v3910, %v3935
      %v3950 = vadd.f32 %v3911, %v3935
      %v3951 = vadd.f32 %v3912, %v3935
      %v3952 = vadd.f32 %v3913, %v3935
      %v3953 = vadd.f32 %v3914, %v3935
      %v3954 = vadd.f32 %v3915, %v3935
      %v3955 = vadd.f32 %v3916, %v3935
      %v3956 = vadd.f32 %v3917, %v3935
      %v3957 = vadd.f32 %v3918, %v3935
      %v3958 = vadd.f32 %v3919, %v3935
      %v3959 = vadd.f32 %v3920, %v3935
      %v3960 = vadd.f32 %v3921, %v3935
      %v3961 = vadd.f32 %v3922, %v3935
      %v3962 = vadd.f32 %v3923, %v3935
      %v3963 = vadd.f32 %v3924, %v3935
      %v3964 = vadd.f32 %v3925, %v3935
      %v3965 = vadd.f32 %v3926, %v3935
      %v3966 = vadd.f32 %v3927, %v3935
      %v3967 = vadd.f32 %v3928, %v3935
      %v3968 = vadd.f32 %v3929, %v3935
      %v3969 = vmax.f32 %v3937, 0.0
      %v3970 = vmax.f32 %v3938, 0.0
      %v3971 = vmax.f32 %v3939, 0.0
      %v3972 = vmax.f32 %v3940, 0.0
      %v3973 = vmax.f32 %v3941, 0.0
      %v3974 = vmax.f32 %v3942, 0.0
      %v3975 = vmax.f32 %v3943, 0.0
      %v3976 = vmax.f32 %v3944, 0.0
      %v3977 = vmax.f32 %v3945, 0.0
      %v3978 = vmax.f32 %v3946, 0.0
      %v3979 = vmax.f32 %v3947, 0.0
      %v3980 = vmax.f32 %v3948, 0.0
      %v3981 = vmax.f32 %v3949, 0.0
      %v3982 = vmax.f32 %v3950, 0.0
      %v3983 = vmax.f32 %v3951, 0.0
      %v3984 = vmax.f32 %v3952, 0.0
      %v3985 = vmax.f32 %v3953, 0.0
      %v3986 = vmax.f32 %v3954, 0.0
      %v3987 = vmax.f32 %v3955, 0.0
      %v3988 = vmax.f32 %v3956, 0.0
      %v3989 = vmax.f32 %v3957, 0.0
      %v3990 = vmax.f32 %v3958, 0.0
      %v3991 = vmax.f32 %v3959, 0.0
      %v3992 = vmax.f32 %v3960, 0.0
      %v3993 = vmax.f32 %v3961, 0.0
      %v3994 = vmax.f32 %v3962, 0.0
      %v3995 = vmax.f32 %v3963, 0.0
      %v3996 = vmax.f32 %v3964, 0.0
      %v3997 = vmax.f32 %v3965, 0.0
      %v3998 = vmax.f32 %v3966, 0.0
      %v3999 = vmax.f32 %v3967, 0.0
      %v4000 = vmax.f32 %v3968, 0.0
      %4001 = vst.msk [vmem:[%s343] sm:$0xff] %vm3152, %v3969
      %4002 = vst.msk [vmem:[%s343 + $0x8] sm:$0xff] %vm3152, %v3970
      %4003 = vst.msk [vmem:[%s343 + $0x10] sm:$0xff] %vm3152, %v3971
      %4004 = vst.msk [vmem:[%s343 + $0x18] sm:$0xff] %vm3152, %v3972
      %4005 = vst.msk [vmem:[%s343 + $0x20] sm:$0xff] %vm3152, %v3973
      %4006 = vst.msk [vmem:[%s343 + $0x28] sm:$0xff] %vm3152, %v3974
      %4007 = vst.msk [vmem:[%s343 + $0x30] sm:$0xff] %vm3152, %v3975
      %4008 = vst.msk [vmem:[%s343 + $0x38] sm:$0xff] %vm3152, %v3976
      %4009 = vst.msk [vmem:[%s343 + $0x40] sm:$0xff] %vm3152, %v3977
      %4010 = vst.msk [vmem:[%s343 + $0x48] sm:$0xff] %vm3152, %v3978
      %4011 = vst.msk [vmem:[%s343 + $0x50] sm:$0xff] %vm3152, %v3979
      %4012 = vst.msk [vmem:[%s343 + $0x58] sm:$0xff] %vm3152, %v3980
      %4013 = vst.msk [vmem:[%s343 + $0x60] sm:$0xff] %vm3152, %v3981
      %4014 = vst.msk [vmem:[%s343 + $0x68] sm:$0xff] %vm3152, %v3982
      %4015 = vst.msk [vmem:[%s343 + $0x70] sm:$0xff] %vm3152, %v3983
      %4016 = vst.msk [vmem:[%s343 + $0x78] sm:$0xff] %vm3152, %v3984
      %4017 = vst.msk [vmem:[%s343 + $0x80] sm:$0xff] %vm3152, %v3985
      %4018 = vst.msk [vmem:[%s343 + $0x88] sm:$0xff] %vm3152, %v3986
      %4019 = vst.msk [vmem:[%s343 + $0x90] sm:$0xff] %vm3152, %v3987
      %4020 = vst.msk [vmem:[%s343 + $0x98] sm:$0xff] %vm3152, %v3988
      %4021 = vst.msk [vmem:[%s343 + $0xa0] sm:$0xff] %vm3152, %v3989
      %4022 = vst.msk [vmem:[%s343 + $0xa8] sm:$0xff] %vm3152, %v3990
      %4023 = vst.msk [vmem:[%s343 + $0xb0] sm:$0xff] %vm3152, %v3991
      %4024 = vst.msk [vmem:[%s343 + $0xb8] sm:$0xff] %vm3152, %v3992
      %4025 = vst.msk [vmem:[%s343 + $0xc0] sm:$0xff] %vm3152, %v3993
      %4026 = vst.msk [vmem:[%s343 + $0xc8] sm:$0xff] %vm3152, %v3994
      %4027 = vst.msk [vmem:[%s343 + $0xd0] sm:$0xff] %vm3152, %v3995
      %4028 = vst.msk [vmem:[%s343 + $0xd8] sm:$0xff] %vm3152, %v3996
      %4029 = vst.msk [vmem:[%s343 + $0xe0] sm:$0xff] %vm3152, %v3997
      %4030 = vst.msk [vmem:[%s343 + $0xe8] sm:$0xff] %vm3152, %v3998
      %4031 = vst.msk [vmem:[%s343 + $0xf0] sm:$0xff] %vm3152, %v3999
      %4032 = vst.msk [vmem:[%s343 + $0xf8] sm:$0xff] %vm3152, %v4000
      %p4033 = scmp.lt.s32.totalorder %s22, 1
      %s4034 = scalar_select %p4033, %s22, 1
      %p4035 = scmp.lt.s32.totalorder %s23, 0
      %s4036 = scalar_select %p4035, %s23, 0
      %s4037 = smul.addr %s4034, 32
      %s4038 = sadd.s32 %s4036, %s4037
      %s4039 = smul.addr %s4038, 8
      %s4040 = scalar_lea.vmem %s7, %s4039
      // Predicated region
      $region53: #{tpu_custom_call.1} parent=47 // pred_check
        %p4041 = pneg %p217
      $region54: #{tpu_custom_call.1} parent=47 // pred_check_branch
        %4043 = sbr.rel (%p4041) target = $region56
      $region55: #{tpu_custom_call.1} parent=47 // pred_region
        _
      $region56: #{tpu_custom_call.1} parent=47 // pred_fallthru
        _
    $region48: #{tpu_custom_call.1} parent=5 // pred_fallthru
      _
    %p4044 = scmp.le.s32.totalorder 2, %s13
    // Predicated region
    $region57: #{tpu_custom_call.1} parent=5 // pred_check
      %p4045 = pneg %p4044
    $region58: #{tpu_custom_call.1} parent=5 // pred_check_branch
      %4047 = sbr.rel (%p4045) target = $region60
    $region59: #{tpu_custom_call.1} parent=5 // pred_region
      %s4048 = ssub.s32 %s13, 2
      // Predicated region
      $region61: #{tpu_custom_call.1} parent=59 // pred_check
        %p4049 = pneg %p223
      $region62: #{tpu_custom_call.1} parent=59 // pred_check_branch
        %4051 = sbr.rel (%p4049) target = $region64
      $region63: #{tpu_custom_call.1} parent=59 // pred_region
        %p4052 = scmp.lt.s32.totalorder %s24, 1
        %s4053 = scalar_select %p4052, %s24, 1
        %p4054 = scmp.lt.s32.totalorder %s25, 0
        %s4055 = scalar_select %p4054, %s25, 0
        %s4056 = smul.addr %s4053, 32
        %s4057 = sadd.s32 %s4055, %s4056
        %s4058 = smul.addr %s4057, 8
        %s4059 = scalar_lea.vmem %s7, %s4058
      $region64: #{tpu_custom_call.1} parent=59 // pred_fallthru
        _
    $region60: #{tpu_custom_call.1} parent=5 // pred_fallthru
      _
  $region6: #{tpu_custom_call.1} parent=0 // loop_footer
    %s17 = sadd.s32 1, %s13
  $region7: #{tpu_custom_call.1} parent=0 // loop_footer_branch
    %12 = sbr.rel target = $region3
  $region8: #{tpu_custom_call.1} parent=0 // loop_exit
    _

</llo_original>
